<compile_context>
chip_gen: v5e
topology: v5e:2x2
jax: 0.10.0
libtpu: 0.0.40
codegen_flags: <defaults>
</compile_context>

<pallas_src>
import functools

import jax
import jax.numpy as jnp
from jax.experimental import pallas as pl
from jax.experimental.pallas import tpu as pltpu


# ------------------------------ small helpers --------------------------------


def _round_up(x, m):
    return -(-x // m) * m


def _cdiv(a, b):
    return -(-a // b)


def _vmem_cap_bytes():
    """75% of per-core VMEM (v7x: 48 MiB of 64); conservative fallback."""
    try:
        info = pltpu.get_tpu_info()
        cap = getattr(info, "vmem_capacity_bytes", None)
        if cap:
            return int(cap) * 3 // 4
    except Exception:  # pragma: no cover - depends on runtime
        pass
    return 64 << 20


_VMEM_CAP = _vmem_cap_bytes()


def _probe_single_buffer():
    """Check BlockSpec(pipeline_mode=pl.Buffered(1)) lowers + computes correctly."""
    if not hasattr(pl, "Buffered"):
        return False

    def _k(x_ref, o_ref):
        o_ref[...] = x_ref[...] + 1.0

    try:
        out = pl.pallas_call(
            _k,
            out_shape=jax.ShapeDtypeStruct((8, 128), jnp.float32),
            grid=(1,),
            in_specs=[pl.BlockSpec((8, 128), lambda i: (0, 0),
                                   pipeline_mode=pl.Buffered(1))],
            out_specs=pl.BlockSpec((8, 128), lambda i: (0, 0)),
        )(jnp.zeros((8, 128), jnp.float32))
        return bool(jnp.all(jax.block_until_ready(out) == 1.0))
    except Exception:  # pragma: no cover - depends on jax / libtpu version
        return False


_SINGLE_BUFFER_OK = _probe_single_buffer()


def _const_spec(block_shape, index_map):
    """Grid-invariant operands: single-buffer when supported."""
    if _SINGLE_BUFFER_OK:
        return pl.BlockSpec(block_shape, index_map, pipeline_mode=pl.Buffered(1))
    return pl.BlockSpec(block_shape, index_map)


def _vmem_limit(tm, gw, cin, ncols, n_out=1):
    """Scoped-VMEM budget derived from the chosen block sizes."""
    win = (tm + 2 * gw) * cin * 2                 # bf16 halo window
    xcol = tm * 9 * cin * 2                       # in-VMEM im2col block (bf16)
    wblk = 9 * cin * ncols * 2 * (1 if _SINGLE_BUFFER_OK else 2)
    acc = tm * ncols * 4 * 2                      # f32 accumulator / temporaries
    outs = n_out * 2 * tm * ncols * 4             # double-buffered output tiles
    need = (win + xcol + wblk + acc + outs) * 3 // 2 + (4 << 20)
    return int(min(max(need, 8 << 20), _VMEM_CAP))


# ------------------------------ geometry / layout ------------------------------


def _make_geom(batch, height, width, *, target_rows=512):
    """Row-tiling geometry shared by every conv (all share H, W here)."""
    s = (height + 2) * (width + 2)
    mo = batch * s                                # rows of the padded spatial grid
    n = max(2, _cdiv(mo, target_rows))
    if n % 2:                                     # even step count -> v7x megacore
        n += 1
    gw = _round_up(width + 3, 8)                  # DMA halo rows each side of a tile
    tm = max(_round_up(_cdiv(mo, n), 8), gw, 8)
    mp = n * tm
    deltas = tuple((ky - 1) * (width + 2) + (kx - 1)
                   for ky in range(3) for kx in range(3))
    return dict(B=batch, H=height, W=width, S=s, Mo=mo, n=n, tm=tm, Mp=mp,
                gw=gw, rows=(n + 2) * tm, deltas=deltas)


def _to_layout(x_nchw, geom):
    """NCHW image -> layout-L bf16 array ((n+2)*tm, Cin) with zero guards."""
    b, h, w = geom["B"], geom["H"], geom["W"]
    x = jnp.transpose(x_nchw, (0, 2, 3, 1)).astype(jnp.float32)
    xp = jnp.pad(x, ((0, 0), (1, 1), (1, 1), (0, 0)))
    flat = xp.reshape(b * geom["S"], -1)
    tm, rows = geom["tm"], geom["rows"]
    flat = jnp.pad(flat, ((tm, rows - tm - flat.shape[0]), (0, 0)))
    return flat.astype(jnp.bfloat16)


def _row_mask(geom):
    """(Mp, 1) f32: 1 for real (interior) rows, 0 for border / tile-pad rows."""
    b, h, w = geom["B"], geom["H"], geom["W"]
    m = jnp.zeros((h + 2, w + 2), jnp.float32).at[1:h + 1, 1:w + 1].set(1.0)
    m = jnp.tile(m.reshape(1, geom["S"]), (b, 1)).reshape(-1, 1)
    return jnp.pad(m, ((0, geom["Mp"] - m.shape[0]), (0, 0)))


def _extract_head(out_rows, geom, ncols_valid):
    """Head output (Mp, Npad) -> valid NHWC (B, H, W, ncols_valid)."""
    b, h, w = geom["B"], geom["H"], geom["W"]
    v = out_rows[: b * geom["S"]].reshape(b, h + 2, w + 2, -1)
    return v[:, 1:h + 1, 1:w + 1, :ncols_valid]


# ------------------------------ Pallas kernels --------------------------------


def _fetch_window(x_hbm, win_ref, sem, *, tm, gw):
    """Synchronously DMA this step's halo'd row window from HBM into VMEM.

    TODO(synk): double-buffer this copy across grid steps (needs an inner
    'arbitrary' grid axis so priming stays per-core safe on v7x megacore).
    """
    i = pl.program_id(0)
    start = pl.multiple_of((i + 1) * tm - gw, 8)
    cp = pltpu.make_async_copy(x_hbm.at[pl.ds(start, win_ref.shape[0])],
                               win_ref, sem)
    cp.start()
    cp.wait()


def _tap_matmul(win_ref, w_ref, b_ref, *, tm, gw, deltas):
    """In-VMEM im2col over the 9 taps + one MXU matmul (+bias), f32 result."""
    xcol = jnp.concatenate(
        [win_ref[gw + d: gw + d + tm, :] for d in deltas], axis=-1)
    return jnp.dot(xcol, w_ref[...],
                   preferred_element_type=jnp.float32) + b_ref[...]


def _conv_base_kernel(x_hbm, w_ref, b_ref, g_ref, m_ref,
                      x_out_ref, s_out_ref, win, sem, *, gw, deltas):
    """Base conv: relu(conv(x)) + fused L2Norm source (both in layout-L)."""
    tm = x_out_ref.shape[0]
    _fetch_window(x_hbm, win, sem, tm=tm, gw=gw)
    acc = _tap_matmul(win, w_ref, b_ref, tm=tm, gw=gw, deltas=deltas)
    acc = jnp.maximum(acc, 0.0)
    acc = jnp.where(m_ref[...] > 0.5, acc, 0.0)          # zero border/pad rows
    x_out_ref[...] = acc.astype(x_out_ref.dtype)
    ss = jnp.sum(acc * acc, axis=-1, keepdims=True)
    s = acc * jax.lax.rsqrt(ss + 1e-20) * g_ref[...]     # single EUP op
    s_out_ref[...] = s.astype(s_out_ref.dtype)


def _conv_mid_kernel(x_hbm, w_ref, b_ref, m_ref, o_ref, win, sem, *, gw, deltas):
    """relu(conv(x)) in layout-L (conv5 / extras)."""
    tm = o_ref.shape[0]
    _fetch_window(x_hbm, win, sem, tm=tm, gw=gw)
    acc = _tap_matmul(win, w_ref, b_ref, tm=tm, gw=gw, deltas=deltas)
    acc = jnp.maximum(acc, 0.0)
    acc = jnp.where(m_ref[...] > 0.5, acc, 0.0)
    o_ref[...] = acc.astype(o_ref.dtype)


def _conv_head_kernel(x_hbm, w_ref, b_ref, gg_ref, loc_ref, conf_ref, win, sem,
                      *, gw, deltas, n_cls_cols):
    """Fused loc+conf head conv with per-anchor softmax on the conf half."""
    tm = loc_ref.shape[0]
    _fetch_window(x_hbm, win, sem, tm=tm, gw=gw)
    acc = _tap_matmul(win, w_ref, b_ref, tm=tm, gw=gw, deltas=deltas)

    nl = loc_ref.shape[1]                                 # lane-aligned split
    loc_ref[...] = acc[:, :nl].astype(loc_ref.dtype)

    logits = acc[:, nl:]
    cpad = conf_ref.shape[1]
    col_ok = jax.lax.broadcasted_iota(jnp.int32, (tm, cpad), 1) < n_cls_cols
    # Row-wide max is a valid (per-group-constant) shift for per-anchor softmax.
    mx = jnp.max(jnp.where(col_ok, logits, -jnp.inf), axis=-1, keepdims=True)
    p = jnp.where(col_ok, jnp.exp(logits - mx), 0.0)
    # Per-anchor denominators via a block-diagonal grouping matmul.
    denom = jnp.dot(p, gg_ref[...], preferred_element_type=jnp.float32)
    probs = p * pl.reciprocal(jnp.maximum(denom, 1e-20), approx=True)
    conf_ref[...] = probs.astype(conf_ref.dtype)


# ------------------------------ Pallas wrappers --------------------------------


def conv3x3_base_l2norm(x_l, wb, gamma, mask, geom):
    w, b = wb
    tm, n, gw, rows = geom["tm"], geom["n"], geom["gw"], geom["rows"]
    cin = x_l.shape[1]
    cout = w.shape[1]
    win_rows = tm + 2 * gw
    kernel = functools.partial(_conv_base_kernel, gw=gw, deltas=geom["deltas"])
    x_out, s_out = pl.pallas_call(
        kernel,
        out_shape=(jax.ShapeDtypeStruct((rows, cout), jnp.bfloat16),
                   jax.ShapeDtypeStruct((rows, cout), jnp.bfloat16)),
        grid_spec=pltpu.PrefetchScalarGridSpec(
            num_scalar_prefetch=0,
            grid=(n,),
            in_specs=[
                pl.BlockSpec(memory_space=pl.ANY),
                _const_spec((9 * cin, cout), lambda i: (0, 0)),
                _const_spec((1, cout), lambda i: (0, 0)),
                _const_spec((1, cout), lambda i: (0, 0)),
                pl.BlockSpec((tm, 1), lambda i: (i, 0)),
            ],
            out_specs=[pl.BlockSpec((tm, cout), lambda i: (i + 1, 0)),
                       pl.BlockSpec((tm, cout), lambda i: (i + 1, 0))],
            scratch_shapes=[pltpu.VMEM((win_rows, cin), jnp.bfloat16),
                            pltpu.SemaphoreType.DMA(())],
        ),
        compiler_params=pltpu.CompilerParams(
            dimension_semantics=("parallel",),
            vmem_limit_bytes=_vmem_limit(tm, gw, cin, cout, n_out=2),
        ),
    )(x_l, w, b, gamma, mask)
    return x_out, s_out


def conv3x3_relu(x_l, wb, mask, geom):
    w, b = wb
    tm, n, gw, rows = geom["tm"], geom["n"], geom["gw"], geom["rows"]
    cin = x_l.shape[1]
    cout = w.shape[1]
    win_rows = tm + 2 * gw
    kernel = functools.partial(_conv_mid_kernel, gw=gw, deltas=geom["deltas"])
    return pl.pallas_call(
        kernel,
        out_shape=jax.ShapeDtypeStruct((rows, cout), jnp.bfloat16),
        grid_spec=pltpu.PrefetchScalarGridSpec(
            num_scalar_prefetch=0,
            grid=(n,),
            in_specs=[
                pl.BlockSpec(memory_space=pl.ANY),
                _const_spec((9 * cin, cout), lambda i: (0, 0)),
                _const_spec((1, cout), lambda i: (0, 0)),
                pl.BlockSpec((tm, 1), lambda i: (i, 0)),
            ],
            out_specs=pl.BlockSpec((tm, cout), lambda i: (i + 1, 0)),
            scratch_shapes=[pltpu.VMEM((win_rows, cin), jnp.bfloat16),
                            pltpu.SemaphoreType.DMA(())],
        ),
        compiler_params=pltpu.CompilerParams(
            dimension_semantics=("parallel",),
            vmem_limit_bytes=_vmem_limit(tm, gw, cin, cout, n_out=1),
        ),
    )(x_l, w, b, mask)


def conv3x3_heads_softmax(src_l, head, geom):
    tm, n, gw = geom["tm"], geom["n"], geom["gw"]
    cin = src_l.shape[1]
    loc_pad, conf_pad = head["loc_pad"], head["conf_pad"]
    ncols = loc_pad + conf_pad
    win_rows = tm + 2 * gw
    mp = geom["Mp"]
    kernel = functools.partial(_conv_head_kernel, gw=gw, deltas=geom["deltas"],
                               n_cls_cols=head["nc"])
    loc_rows, conf_rows = pl.pallas_call(
        kernel,
        out_shape=(jax.ShapeDtypeStruct((mp, loc_pad), jnp.float32),
                   jax.ShapeDtypeStruct((mp, conf_pad), jnp.float32)),
        grid_spec=pltpu.PrefetchScalarGridSpec(
            num_scalar_prefetch=0,
            grid=(n,),
            in_specs=[
                pl.BlockSpec(memory_space=pl.ANY),
                _const_spec((9 * cin, ncols), lambda i: (0, 0)),
                _const_spec((1, ncols), lambda i: (0, 0)),
                _const_spec((conf_pad, conf_pad), lambda i: (0, 0)),
            ],
            out_specs=[pl.BlockSpec((tm, loc_pad), lambda i: (i, 0)),
                       pl.BlockSpec((tm, conf_pad), lambda i: (i, 0))],
            scratch_shapes=[pltpu.VMEM((win_rows, cin), jnp.bfloat16),
                            pltpu.SemaphoreType.DMA(())],
        ),
        compiler_params=pltpu.CompilerParams(
            dimension_semantics=("parallel",),
            vmem_limit_bytes=_vmem_limit(tm, gw, cin, ncols, n_out=2),
        ),
    )(src_l, head["w"], head["b"], head["gg"])
    return loc_rows, conf_rows


# ------------------------------ parameter prep ---------------------------------


def init_params(key, *, in_ch, base_ch, num_anchors, num_classes):
    """Deterministic parameter init (synthetic, stands in for VGG/extras/heads)."""
    ks = jax.random.split(key, 16)
    k = iter(ks)

    def conv_p(kk, cin, cout):
        w = jax.random.normal(kk, (3, 3, cin, cout), jnp.float32) * 0.05
        b = jnp.zeros((cout,), jnp.float32)
        return w, b

    p = {}
    p["base"] = conv_p(next(k), in_ch, base_ch)               # "VGG base" stand-in
    p["l2norm_w"] = jnp.full((base_ch,), 20.0, jnp.float32)   # L2Norm(512, 20)
    p["conv5"] = conv_p(next(k), base_ch, base_ch)            # conv5 block stand-in
    p["extra0"] = conv_p(next(k), base_ch, base_ch)           # extras[0]
    p["extra1"] = conv_p(next(k), base_ch, base_ch)           # extras[1] -> source
    p["loc"] = [conv_p(next(k), base_ch, num_anchors * 4) for _ in range(3)]
    p["conf"] = [conv_p(next(k), base_ch, num_anchors * num_classes)
                 for _ in range(3)]
    return p


def prepare_params(params, *, batch, height, width, num_anchors, num_classes):
    """Hoisted weight prep: reshape / pad / concat / bf16 cast done once."""
    geom = _make_geom(batch, height, width)

    def conv_prep(w, b):
        cin = w.shape[2]
        return (w.reshape(9 * cin, w.shape[-1]).astype(jnp.bfloat16),
                b.reshape(1, -1).astype(jnp.float32))

    prep = {"geom": geom}
    prep["base"] = conv_prep(*params["base"])
    prep["gamma"] = params["l2norm_w"].reshape(1, -1).astype(jnp.float32)
    prep["conv5"] = conv_prep(*params["conv5"])
    prep["extra0"] = conv_prep(*params["extra0"])
    prep["extra1"] = conv_prep(*params["extra1"])
    prep["row_mask"] = _row_mask(geom)

    a, nc = num_anchors, num_classes
    loc_pad = _round_up(a * 4, 128)
    conf_pad = _round_up(a * nc, 128)
    idx = jnp.arange(conf_pad)
    valid = idx < a * nc
    grp = idx // nc
    gg = ((grp[:, None] == grp[None, :])
          & valid[:, None] & valid[None, :]).astype(jnp.float32)

    heads = []
    for (lw, lb), (cw, cb) in zip(params["loc"], params["conf"]):
        cin = lw.shape[2]
        wl = jnp.pad(lw.reshape(9 * cin, -1), ((0, 0), (0, loc_pad - a * 4)))
        wc = jnp.pad(cw.reshape(9 * cin, -1), ((0, 0), (0, conf_pad - a * nc)))
        w = jnp.concatenate([wl, wc], axis=1).astype(jnp.bfloat16)
        b = jnp.concatenate([jnp.pad(lb, (0, loc_pad - a * 4)),
                             jnp.pad(cb, (0, conf_pad - a * nc))]
                            ).reshape(1, -1).astype(jnp.float32)
        heads.append({"w": w, "b": b, "gg": gg, "loc_pad": loc_pad,
                      "conf_pad": conf_pad, "nl": a * 4, "nc": a * nc})
    prep["heads"] = heads
    return prep


# ------------------------------- SSD forward -----------------------------------


def ssd_forward(x_nchw, prep, *, num_classes):
    """Mirrors SSD.forward's loc/conf path.  Returns the tuple
    (loc, conf, rel_result, SSD_loss_bbox, SSD_loss_cls, VMRN_rel_loss_cls)."""
    geom = prep["geom"]
    b = geom["B"]
    mask = prep["row_mask"]

    x_l = _to_layout(x_nchw, geom)                    # NCHW -> layout-L bf16

    # base network; s = L2Norm(x) fused into the same Pallas call
    x_l, s_l = conv3x3_base_l2norm(x_l, prep["base"], prep["gamma"], mask, geom)
    sources = [s_l]

    # x = conv5(x); sources.append(x)
    x_l = conv3x3_relu(x_l, prep["conv5"], mask, geom)
    sources.append(x_l)

    # extras: relu(conv); append every odd layer
    x_l = conv3x3_relu(x_l, prep["extra0"], mask, geom)
    x_l = conv3x3_relu(x_l, prep["extra1"], mask, geom)
    sources.append(x_l)

    # multibox heads: loc + conf + per-anchor softmax fused per source
    loc_parts, conf_parts = [], []
    for src_l, head in zip(sources, prep["heads"]):
        loc_rows, conf_rows = conv3x3_heads_softmax(src_l, head, geom)
        loc = _extract_head(loc_rows, geom, head["nl"])     # (B,H,W,A*4)
        conf = _extract_head(conf_rows, geom, head["nc"])   # (B,H,W,A*C) probs
        loc_parts.append(loc.reshape(b, -1))
        conf_parts.append(conf.reshape(b, -1))

    loc = jnp.concatenate(loc_parts, axis=1).reshape(b, -1, 4)
    conf = jnp.concatenate(conf_parts, axis=1).reshape(b, -1, num_classes)

    # TODO(synk): priors / MultiBoxLoss / _obj_det (NMS) / VMRN relation branch
    # require external cfg and dynamic-shape post-processing; not ported.
    rel_result = None
    return loc, conf, rel_result, 0.0, 0.0, 0.0


# ----------------------------- pure-JAX reference -------------------------------


def _conv3x3_ref(x, w, b, relu):
    out = jax.lax.conv_general_dilated(
        x, w, window_strides=(1, 1), padding="SAME",
        dimension_numbers=("NHWC", "HWIO", "NHWC"))
    out = out + b
    if relu:
        out = jnp.maximum(out, 0.0)
    return out


def _reference_forward(x_nchw, params, num_classes):
    x = jnp.transpose(x_nchw, (0, 2, 3, 1)).astype(jnp.float32)
    b = x.shape[0]
    x = _conv3x3_ref(x, *params["base"], True)
    norm = jnp.sqrt(jnp.sum(x * x, axis=-1, keepdims=True)) + 1e-10
    s = x / norm * params["l2norm_w"]
    sources = [s]
    x = _conv3x3_ref(x, *params["conv5"], True)
    sources.append(x)
    x = _conv3x3_ref(x, *params["extra0"], True)
    x = _conv3x3_ref(x, *params["extra1"], True)
    sources.append(x)
    loc_parts, conf_parts = [], []
    for src, (lw, lb), (cw, cb) in zip(sources, params["loc"], params["conf"]):
        loc_parts.append(_conv3x3_ref(src, lw, lb, False).reshape(b, -1))
        conf_parts.append(_conv3x3_ref(src, cw, cb, False).reshape(b, -1))
    loc = jnp.concatenate(loc_parts, axis=1).reshape(b, -1, 4)
    conf = jnp.concatenate(conf_parts, axis=1).reshape(b, -1, num_classes)
    conf = jax.nn.softmax(conf, axis=-1)
    return loc, conf


# ------------------------------------ main --------------------------------------

if __name__ == "__main__":
    key = jax.random.PRNGKey(0)
    k_img, k_par = jax.random.split(key)

    B, Cin, H, W = 2, 4, 16, 16          # small stand-in for [batch, 3, 300, 300]
    base_ch = 32                          # stands in for 512 (L2Norm channels)
    num_anchors = 4
    classes = ("__background__", "obj_a", "obj_b", "obj_c")
    num_classes = len(classes)

    x = jax.random.normal(k_img, (B, Cin, H, W), jnp.float32)   # NCHW input
    params = init_params(k_par, in_ch=Cin, base_ch=base_ch,
                         num_anchors=num_anchors, num_classes=num_classes)
    prep = prepare_params(params, batch=B, height=H, width=W,
                          num_anchors=num_anchors, num_classes=num_classes)

    loc, conf, rel_result, loss_bbox, loss_cls, loss_rel = ssd_forward(
        x, prep, num_classes=num_classes)
    jax.block_until_ready((loc, conf))

    # sanity: shapes and softmax normalization (approx reciprocal -> loose tol)
    P = 3 * H * W * num_anchors
    assert loc.shape == (B, P, 4), loc.shape
    assert conf.shape == (B, P, num_classes), conf.shape
    assert bool(jnp.all(jnp.abs(jnp.sum(conf, axis=-1) - 1.0) < 3e-2))

    # numerics vs a pure-JAX f32 reference (bf16 MXU path -> loose tolerances)
    loc_ref, conf_ref = _reference_forward(x, params, num_classes)
    assert bool(jnp.all(jnp.abs(loc - loc_ref) <= 0.25 + 0.05 * jnp.abs(loc_ref))), \
        float(jnp.max(jnp.abs(loc - loc_ref)))
    assert bool(jnp.max(jnp.abs(conf - conf_ref)) < 0.1), \
        float(jnp.max(jnp.abs(conf - conf_ref)))

    print("KERNEL_OK")
</pallas_src>

<mosaic_0001>
module attributes {stable_mosaic.version = 11 : i64} {
  func.func @_k(%arg0: i32, %arg1: memref<8x128xf32, #tpu.memory_space<vmem>>, %arg2: memref<8x128xf32, #tpu.memory_space<vmem>>) attributes {dimension_semantics = [#tpu.dimension_semantics<arbitrary>], iteration_bounds = array<i64: 1>, scalar_prefetch = 0 : i64, scratch_operands = 0 : i64, tpu.core_type = #tpu.core_type<tc>, window_params = [{pipeline_mode = #tpu.pipeline_mode<synchronous>, transform_indices = @transform_0, window_bounds = array<i64: 8, 128>}, {pipeline_mode = #tpu.pipeline_mode<synchronous>, transform_indices = @transform_1, window_bounds = array<i64: 8, 128>}]} {
    %c0 = arith.constant 0 : index
    %c0_0 = arith.constant 0 : index
    %0 = vector.load %arg1[%c0, %c0_0] : memref<8x128xf32, #tpu.memory_space<vmem>>, vector<8x128xf32>
    %cst = arith.constant 1.000000e+00 : f32
    %1 = vector.broadcast %cst : f32 to vector<8x128xf32>
    %2 = arith.addf %0, %1 : vector<8x128xf32>
    %c0_1 = arith.constant 0 : index
    %c0_2 = arith.constant 0 : index
    %3 = vector.load %arg2[%c0_1, %c0_2] : memref<8x128xf32, #tpu.memory_space<vmem>>, vector<8x128xf32>
    tpu.vector_store %arg2[%c0_1, %c0_2], %2 {strides = array<i32>} : memref<8x128xf32, #tpu.memory_space<vmem>>, vector<8x128xf32>,
    return
  }
  func.func @transform_0(%arg0: i32) -> (i32, i32) {
    %c0_i32 = arith.constant 0 : i32
    %c0_i32_0 = arith.constant 0 : i32
    %c0_i32_1 = arith.constant 0 : i32
    return %c0_i32, %c0_i32_0 : i32, i32
  }
  func.func @transform_1(%arg0: i32) -> (i32, i32) {
    %c0_i32 = arith.constant 0 : i32
    %c0_i32_0 = arith.constant 0 : i32
    %c0_i32_1 = arith.constant 0 : i32
    return %c0_i32, %c0_i32_0 : i32, i32
  }
}

module attributes {stable_mosaic.version = 11 : i64} {
  func.func @_conv_base_kernel(%arg0: i32, %arg1: memref<1312x4xbf16, #tpu.memory_space<any>>, %arg2: memref<36x32xbf16, #tpu.memory_space<vmem>>, %arg3: memref<1x32xf32, #tpu.memory_space<vmem>>, %arg4: memref<1x32xf32, #tpu.memory_space<vmem>>, %arg5: memref<328x1xf32, #tpu.memory_space<vmem>>, %arg6: memref<328x32xbf16, #tpu.memory_space<vmem>>, %arg7: memref<328x32xbf16, #tpu.memory_space<vmem>>, %arg8: memref<376x4xbf16, #tpu.memory_space<vmem>>, %arg9: memref<!tpu.dma_semaphore, #tpu.memory_space<semaphore_mem>>) attributes {dimension_semantics = [#tpu.dimension_semantics<parallel>], iteration_bounds = array<i64: 2>, scalar_prefetch = 0 : i64, scratch_operands = 2 : i64, tpu.core_type = #tpu.core_type<tc>, window_params = [{}, {pipeline_mode = #tpu.pipeline_mode<synchronous>, transform_indices = @transform_1, window_bounds = array<i64: 36, 32>}, {pipeline_mode = #tpu.pipeline_mode<synchronous>, transform_indices = @transform_2, window_bounds = array<i64: 1, 32>}, {pipeline_mode = #tpu.pipeline_mode<synchronous>, transform_indices = @transform_3, window_bounds = array<i64: 1, 32>}, {transform_indices = @transform_4, window_bounds = array<i64: 328, 1>}, {transform_indices = @transform_5, window_bounds = array<i64: 328, 32>}, {transform_indices = @transform_6, window_bounds = array<i64: 328, 32>}]} {
    %c1_i32 = arith.constant 1 : i32
    %0 = arith.addi %arg0, %c1_i32 : i32
    %c328_i32 = arith.constant 328 : i32
    %1 = arith.muli %0, %c328_i32 : i32
    %c24_i32 = arith.constant 24 : i32
    %2 = arith.subi %1, %c24_i32 : i32
    %3 = tpu.assume_multiple %2, 8 : i32
    %c0_i32 = arith.constant 0 : i32
    %4 = tpu.memref_slice %arg1[%3, %c0_i32] : memref<1312x4xbf16, #tpu.memory_space<any>> -> memref<376x4xbf16, #tpu.memory_space<any>>
    tpu.enqueue_dma source(%4 : memref<376x4xbf16, #tpu.memory_space<any>>) target(%arg8 : memref<376x4xbf16, #tpu.memory_space<vmem>>) target_semaphore(%arg9 : memref<!tpu.dma_semaphore, #tpu.memory_space<semaphore_mem>>)
    %c0_i32_0 = arith.constant 0 : i32
    %5 = tpu.memref_slice %arg1[%3, %c0_i32_0] : memref<1312x4xbf16, #tpu.memory_space<any>> -> memref<376x4xbf16, #tpu.memory_space<any>>
    tpu.wait_dma2 semaphore(%arg9 : memref<!tpu.dma_semaphore, #tpu.memory_space<semaphore_mem>>) src(%5 : memref<376x4xbf16, #tpu.memory_space<any>>) dst(%arg8 : memref<376x4xbf16, #tpu.memory_space<vmem>>)
    %c5 = arith.constant 5 : index
    %c0 = arith.constant 0 : index
    %6 = vector.load %arg8[%c5, %c0] : memref<376x4xbf16, #tpu.memory_space<vmem>>, vector<328x4xbf16>
    %c6 = arith.constant 6 : index
    %c0_1 = arith.constant 0 : index
    %7 = vector.load %arg8[%c6, %c0_1] : memref<376x4xbf16, #tpu.memory_space<vmem>>, vector<328x4xbf16>
    %c7 = arith.constant 7 : index
    %c0_2 = arith.constant 0 : index
    %8 = vector.load %arg8[%c7, %c0_2] : memref<376x4xbf16, #tpu.memory_space<vmem>>, vector<328x4xbf16>
    %c23 = arith.constant 23 : index
    %c0_3 = arith.constant 0 : index
    %9 = vector.load %arg8[%c23, %c0_3] : memref<376x4xbf16, #tpu.memory_space<vmem>>, vector<328x4xbf16>
    %c24 = arith.constant 24 : index
    %c0_4 = arith.constant 0 : index
    %10 = vector.load %arg8[%c24, %c0_4] : memref<376x4xbf16, #tpu.memory_space<vmem>>, vector<328x4xbf16>
    %c25 = arith.constant 25 : index
    %c0_5 = arith.constant 0 : index
    %11 = vector.load %arg8[%c25, %c0_5] : memref<376x4xbf16, #tpu.memory_space<vmem>>, vector<328x4xbf16>
    %c41 = arith.constant 41 : index
    %c0_6 = arith.constant 0 : index
    %12 = vector.load %arg8[%c41, %c0_6] : memref<376x4xbf16, #tpu.memory_space<vmem>>, vector<328x4xbf16>
    %c42 = arith.constant 42 : index
    %c0_7 = arith.constant 0 : index
    %13 = vector.load %arg8[%c42, %c0_7] : memref<376x4xbf16, #tpu.memory_space<vmem>>, vector<328x4xbf16>
    %c43 = arith.constant 43 : index
    %c0_8 = arith.constant 0 : index
    %14 = vector.load %arg8[%c43, %c0_8] : memref<376x4xbf16, #tpu.memory_space<vmem>>, vector<328x4xbf16>
    %15 = tpu.concatenate %6, %7, %8, %9, %10, %11, %12, %13, %14 in 1 : vector<328x4xbf16>, vector<328x4xbf16>, vector<328x4xbf16>, vector<328x4xbf16>, vector<328x4xbf16>, vector<328x4xbf16>, vector<328x4xbf16>, vector<328x4xbf16>, vector<328x4xbf16> -> vector<328x36xbf16>
    %c0_9 = arith.constant 0 : index
    %c0_10 = arith.constant 0 : index
    %16 = vector.load %arg2[%c0_9, %c0_10] : memref<36x32xbf16, #tpu.memory_space<vmem>>, vector<36x32xbf16>
    %cst = arith.constant dense<0.000000e+00> : vector<328x32xf32>
    %17 = tpu.matmul %15, %16, %cst {dimension_numbers = #tpu.dot_dimension_numbers<[1], [0], [0], [1], [0, 0, 1, 1], [], []>} : vector<328x36xbf16>, vector<36x32xbf16>, vector<328x32xf32> -> vector<328x32xf32>
    %c0_11 = arith.constant 0 : index
    %c0_12 = arith.constant 0 : index
    %18 = vector.load %arg3[%c0_11, %c0_12] : memref<1x32xf32, #tpu.memory_space<vmem>>, vector<1x32xf32>
    %19 = vector.broadcast %18 : vector<1x32xf32> to vector<328x32xf32>
    %20 = arith.addf %17, %19 : vector<328x32xf32>
    %cst_13 = arith.constant 0.000000e+00 : f32
    %21 = vector.broadcast %cst_13 : f32 to vector<328x32xf32>
    %22 = arith.maximumf %20, %21 : vector<328x32xf32>
    %c0_14 = arith.constant 0 : index
    %c0_15 = arith.constant 0 : index
    %23 = vector.load %arg5[%c0_14, %c0_15] : memref<328x1xf32, #tpu.memory_space<vmem>>, vector<328x1xf32>
    %cst_16 = arith.constant 5.000000e-01 : f32
    %24 = vector.broadcast %cst_16 : f32 to vector<328x1xf32>
    %25 = arith.cmpf ogt, %23, %24 : vector<328x1xf32>
    %cst_17 = arith.constant 0.000000e+00 : f32
    %26 = vector.shape_cast %25 : vector<328x1xi1> to vector<328x1xi1>
    %27 = vector.broadcast %26 : vector<328x1xi1> to vector<328x32xi1>
    %28 = vector.broadcast %cst_17 : f32 to vector<328x32xf32>
    %29 = arith.select %27, %22, %28 : vector<328x32xi1>, vector<328x32xf32>
    %30 = arith.truncf %29 : vector<328x32xf32> to vector<328x32xbf16>
    %c0_18 = arith.constant 0 : index
    %c0_19 = arith.constant 0 : index
    %31 = vector.load %arg6[%c0_18, %c0_19] : memref<328x32xbf16, #tpu.memory_space<vmem>>, vector<328x32xbf16>
    tpu.vector_store %arg6[%c0_18, %c0_19], %30 {strides = array<i32>} : memref<328x32xbf16, #tpu.memory_space<vmem>>, vector<328x32xbf16>,
    %32 = arith.mulf %29, %29 : vector<328x32xf32>
    %cst_20 = arith.constant dense<0.000000e+00> : vector<328xf32>
    %33 = vector.multi_reduction <add>, %32, %cst_20 [1] : vector<328x32xf32> to vector<328xf32>
    %34 = vector.shape_cast %33 : vector<328xf32> to vector<328x1xf32>
    %cst_21 = arith.constant 9.99999968E-21 : f32
    %35 = vector.broadcast %cst_21 : f32 to vector<328x1xf32>
    %36 = arith.addf %34, %35 : vector<328x1xf32>
    %37 = math.rsqrt %36 : vector<328x1xf32>
    %38 = vector.broadcast %37 : vector<328x1xf32> to vector<328x32xf32>
    %39 = arith.mulf %29, %38 : vector<328x32xf32>
    %c0_22 = arith.constant 0 : index
    %c0_23 = arith.constant 0 : index
    %40 = vector.load %arg4[%c0_22, %c0_23] : memref<1x32xf32, #tpu.memory_space<vmem>>, vector<1x32xf32>
    %41 = vector.broadcast %40 : vector<1x32xf32> to vector<328x32xf32>
    %42 = arith.mulf %39, %41 : vector<328x32xf32>
    %43 = arith.truncf %42 : vector<328x32xf32> to vector<328x32xbf16>
    %c0_24 = arith.constant 0 : index
    %c0_25 = arith.constant 0 : index
    %44 = vector.load %arg7[%c0_24, %c0_25] : memref<328x32xbf16, #tpu.memory_space<vmem>>, vector<328x32xbf16>
    tpu.vector_store %arg7[%c0_24, %c0_25], %43 {strides = array<i32>} : memref<328x32xbf16, #tpu.memory_space<vmem>>, vector<328x32xbf16>,
    return
  }
  func.func @transform_1(%arg0: i32) -> (i32, i32) {
    %c0_i32 = arith.constant 0 : i32
    %c0_i32_0 = arith.constant 0 : i32
    %c0_i32_1 = arith.constant 0 : i32
    return %c0_i32, %c0_i32_0 : i32, i32
  }
  func.func @transform_2(%arg0: i32) -> (i32, i32) {
    %c0_i32 = arith.constant 0 : i32
    %c0_i32_0 = arith.constant 0 : i32
    %c0_i32_1 = arith.constant 0 : i32
    return %c0_i32, %c0_i32_0 : i32, i32
  }
  func.func @transform_3(%arg0: i32) -> (i32, i32) {
    %c0_i32 = arith.constant 0 : i32
    %c0_i32_0 = arith.constant 0 : i32
    %c0_i32_1 = arith.constant 0 : i32
    return %c0_i32, %c0_i32_0 : i32, i32
  }
  func.func @transform_4(%arg0: i32) -> (i32, i32) {
    %c0_i32 = arith.constant 0 : i32
    %c0_i32_0 = arith.constant 0 : i32
    return %arg0, %c0_i32 : i32, i32
  }
  func.func @transform_5(%arg0: i32) -> (i32, i32) {
    %c1_i32 = arith.constant 1 : i32
    %0 = arith.addi %arg0, %c1_i32 : i32
    %c0_i32 = arith.constant 0 : i32
    %c0_i32_0 = arith.constant 0 : i32
    return %0, %c0_i32 : i32, i32
  }
  func.func @transform_6(%arg0: i32) -> (i32, i32) {
    %c1_i32 = arith.constant 1 : i32
    %0 = arith.addi %arg0, %c1_i32 : i32
    %c0_i32 = arith.constant 0 : i32
    %c0_i32_0 = arith.constant 0 : i32
    return %0, %c0_i32 : i32, i32
  }
}

</mosaic_0001>

<llo_original>
// kernel: tpu_custom_call.1
$region0: #{tpu_custom_call.1}
  #allocation0 [shape = 'u32[]', space=smem, size = 0x4, offset = 0x4, fixed_abs, tag = 'smem constant byte address 0x4 - core index']
  #allocation1 [shape = 'u32[72,128]{1,0:T(1,128)}', space=vmem, size = 0x9000, scoped, tag = 'internal scratch']
  %s0 = inlined_call_operand.hbm [shape: f32[8,128], index: 0, kind: input, shape index: {}]
  %s1 = inlined_call_operand.hbm [shape: f32[8,128], index: 1, kind: output, shape index: {}]
  %s2 = sld [smem:[#allocation0]]
  $region18: #{tpu_custom_call.1} parent=0
    _
  %s4 = ssub.s32 1, %s2
  %s5 = scalar_select 0, %s4, %s2
  $region1: #{tpu_custom_call.1} parent=0
    #allocation2 [shape = 'u8[4096]{0}', space=vmem, size = 0x1000, scoped, tag = 'input window, operand 0, single buffered']
    #allocation3 [shape = 's32[1]{0}', space=sflag, size = 0x4, scoped, tag = 'scoped memory for tpu_custom_call.1']
    #allocation4 [shape = 's32[1]{0}', space=sflag, size = 0x4, scoped, tag = 'scoped memory for tpu_custom_call.1']
    #allocation5 [shape = 'u8[4096]{0}', space=vmem, size = 0x1000, scoped, tag = 'output window, operand 0, single buffered']
    %6 = vsyncpa [#allocation3], 0
    %7 = vsyncpa [#allocation4], 0
    // Predicated region
    $region2: #{tpu_custom_call.1} parent=1 // pred_check
      _
    $region3: #{tpu_custom_call.1} parent=1 // pred_check_branch
      %9 = sbr.rel (0) target = $region5
    $region4: #{tpu_custom_call.1} parent=1 // pred_region
      %11 = vsyncadd [#allocation3], 0
      %s13 = sshll.u32 %s0, 4
      %s14 = int_to_ptr.hbm [resolvable:$true] %s13
      %s15 = sshll.u32 [#allocation2], 4
      %s16 = int_to_ptr.vmem [resolvable:$true] %s15
      %18 = dma.hbm_to_vmem [thread:$0]  %s14, 128, %s16, [#allocation3]
    $region5: #{tpu_custom_call.1} parent=1 // pred_fallthru
      _
    // Predicated region
    $region6: #{tpu_custom_call.1} parent=1 // pred_check
      _
    $region7: #{tpu_custom_call.1} parent=1 // pred_check_branch
      %20 = sbr.rel (0) target = $region9
    $region8: #{tpu_custom_call.1} parent=1 // pred_region
      %22 = dma.done [#allocation3], 128
    $region9: #{tpu_custom_call.1} parent=1 // pred_fallthru
      _
    %v23 = vld [vmem:[#allocation2] sm:$0xff]
    %v24 = vadd.f32 %v23, 1.0
    %25 = vst [vmem:[#allocation5] sm:$0xff] %v24
    // Predicated region
    $region10: #{tpu_custom_call.1} parent=1 // pred_check
      _
    $region11: #{tpu_custom_call.1} parent=1 // pred_check_branch
      %27 = sbr.rel (0) target = $region13
    $region12: #{tpu_custom_call.1} parent=1 // pred_region
      %29 = vsyncadd [#allocation4], 0
      %s31 = sshll.u32 [#allocation5], 4
      %s32 = int_to_ptr.vmem [resolvable:$true] %s31
      %s33 = sshll.u32 %s1, 4
      %s34 = int_to_ptr.hbm [resolvable:$true] %s33
      %36 = dma.vmem_to_hbm [thread:$0]  %s32, 128, %s34, [#allocation4]
    $region13: #{tpu_custom_call.1} parent=1 // pred_fallthru
      _
    // Predicated region
    $region14: #{tpu_custom_call.1} parent=1 // pred_check
      _
    $region15: #{tpu_custom_call.1} parent=1 // pred_check_branch
      %38 = sbr.rel (0) target = $region17
    $region16: #{tpu_custom_call.1} parent=1 // pred_region
      %40 = dma.done [#allocation4], 128
    $region17: #{tpu_custom_call.1} parent=1 // pred_fallthru
      _
    %41 = vsyncpa [#allocation3], 1
    %42 = vsyncpa [#allocation4], 1

// kernel: tpu_custom_call.1
$region0: #{tpu_custom_call.1}
  #allocation0 [shape = 'u32[]', space=smem, size = 0x4, offset = 0x4, fixed_abs, tag = 'smem constant byte address 0x4 - core index']
  #allocation1 [shape = 'u32[72,128]{1,0:T(1,128)}', space=vmem, size = 0x9000, scoped, tag = 'internal scratch']
  #allocation2 [shape = 'bf16[376,4]{1,0:T(8,128)(2,1)}', space=vmem, size = 0x17800, scoped, tag = 'scratch operand']
  #allocation3 [shape = 's32[1]{0}', space=sflag, size = 0x4, scoped, tag = 'scratch operand']
  #allocation4 [shape = 's32[]', space=sflag, size = 0x4, offset = 0, fixed_abs, tag = 'sflag constant byte address 0x0 - dummy sync flag']
  %s0 = inlined_call_operand.vmem [shape: bf16[1312,4], index: 0, kind: input, shape index: {}]
  %s1 = inlined_call_operand.vmem [shape: bf16[36,32], index: 1, kind: input, shape index: {}]
  %s2 = inlined_call_operand.vmem [shape: f32[1,32], index: 2, kind: input, shape index: {}]
  %s3 = inlined_call_operand.vmem [shape: f32[1,32], index: 3, kind: input, shape index: {}]
  %s4 = inlined_call_operand.vmem [shape: f32[656,1], index: 4, kind: input, shape index: {}]
  %s5 = inlined_call_operand.vmem [shape: bf16[1312,32], index: 5, kind: output, shape index: {0}]
  %s6 = inlined_call_operand.vmem [shape: bf16[1312,32], index: 6, kind: output, shape index: {1}]
  %7 = xla_tuple %s5, %s6
  %s8 = sld [smem:[#allocation0]]
  $region79: #{tpu_custom_call.1} parent=0
    _
  %s10 = ssub.s32 1, %s8
  %s11 = scalar_select 0, %s10, %s8
  loop: start=0, step=1, limit=4
  $region2: #{tpu_custom_call.1} parent=0 // loop_pre_header
    _
  $region3: #{tpu_custom_call.1} parent=0 // loop_header
    %s13 = sphi 0, %s17
    %p14 = scmp.ge.s32.totalorder %s13, 4
    %s21 = sphi 0, %s21
    %s23 = sphi 0, %s21
    %s24 = sphi 0, %s23
    %s38 = sphi 0, %s24
    %s42 = sphi 0, %s42
    %s44 = sphi 0, %s42
    %s45 = sphi 0, %s44
    %s59 = sphi 0, %s45
    %s63 = sphi 0, %s63
    %s65 = sphi 0, %s63
    %s66 = sphi 0, %s65
    %s80 = sphi 0, %s66
    %s86 = sphi 0, %s88
    %s89 = sphi 0, %s86
    %s90 = sphi 0, %s89
    %s106 = sphi 0, %s90
    %s114 = sphi 0, %s116
    %s117 = sphi 0, %s114
    %s118 = sphi 0, %s117
    %s134 = sphi 0, %s118
    %s142 = sphi 0, %s144
    %s145 = sphi 0, %s142
    %s146 = sphi 0, %s145
    %s162 = sphi 0, %s146
  $region4: #{tpu_custom_call.1} parent=0 // loop_header_branch
    %16 = sbr.rel (%p14) target = $region8
  $region5: #{tpu_custom_call.1} parent=0 // loop_body
    %s18 = ssub.s32 %s13, 1
    %s19 = ssub.s32 %s13, 2
    %s20 = sadd.s32 %s13, 1
    %s22 = sadd.s32 %s21, 1
    %p25 = scmp.eq.s32.totalorder %s13, 1
    %p26 = scmp.ne.s32.totalorder %s21, %s23
    %p27 = scmp.eq.s32.totalorder %s13, 0
    %p28 = por %p26, %p27
    %p29 = scmp.ne.s32.totalorder %s21, %s23
    %p30 = scmp.eq.s32.totalorder %s18, 1
    %p31 = por %p29, %p30
    %p32 = scmp.ne.s32.totalorder %s23, %s24
    %p33 = scmp.eq.s32.totalorder %s18, 0
    %p34 = por %p32, %p33
    %p35 = scmp.ne.s32.totalorder %s23, %s24
    %p36 = scmp.eq.s32.totalorder %s19, 1
    %p37 = por %p35, %p36
    %p39 = scmp.ne.s32.totalorder %s24, %s38
    %p40 = scmp.eq.s32.totalorder %s19, 0
    %p41 = por %p39, %p40
    %s43 = sadd.s32 %s42, 1
    %p46 = scmp.eq.s32.totalorder %s13, 1
    %p47 = scmp.ne.s32.totalorder %s42, %s44
    %p48 = scmp.eq.s32.totalorder %s13, 0
    %p49 = por %p47, %p48
    %p50 = scmp.ne.s32.totalorder %s42, %s44
    %p51 = scmp.eq.s32.totalorder %s18, 1
    %p52 = por %p50, %p51
    %p53 = scmp.ne.s32.totalorder %s44, %s45
    %p54 = scmp.eq.s32.totalorder %s18, 0
    %p55 = por %p53, %p54
    %p56 = scmp.ne.s32.totalorder %s44, %s45
    %p57 = scmp.eq.s32.totalorder %s19, 1
    %p58 = por %p56, %p57
    %p60 = scmp.ne.s32.totalorder %s45, %s59
    %p61 = scmp.eq.s32.totalorder %s19, 0
    %p62 = por %p60, %p61
    %s64 = sadd.s32 %s63, 1
    %p67 = scmp.eq.s32.totalorder %s13, 1
    %p68 = scmp.ne.s32.totalorder %s63, %s65
    %p69 = scmp.eq.s32.totalorder %s13, 0
    %p70 = por %p68, %p69
    %p71 = scmp.ne.s32.totalorder %s63, %s65
    %p72 = scmp.eq.s32.totalorder %s18, 1
    %p73 = por %p71, %p72
    %p74 = scmp.ne.s32.totalorder %s65, %s66
    %p75 = scmp.eq.s32.totalorder %s18, 0
    %p76 = por %p74, %p75
    %p77 = scmp.ne.s32.totalorder %s65, %s66
    %p78 = scmp.eq.s32.totalorder %s19, 1
    %p79 = por %p77, %p78
    %p81 = scmp.ne.s32.totalorder %s66, %s80
    %p82 = scmp.eq.s32.totalorder %s19, 0
    %p83 = por %p81, %p82
    %s84 = ssub.s32 %s13, %s20
    %p85 = scmp.eq.s32.totalorder %s84, 0
    %s87 = sadd.s32 %s86, 1
    %s88 = scalar_select %p85, %s86, %s87
    %p91 = pneg %p85
    %p92 = scmp.eq.s32.totalorder %s13, 1
    %p93 = por %p91, %p92
    %p94 = scmp.ne.s32.totalorder %s86, %s89
    %p95 = scmp.eq.s32.totalorder %s13, 0
    %p96 = por %p94, %p95
    %p97 = scmp.ne.s32.totalorder %s86, %s89
    %p98 = scmp.eq.s32.totalorder %s18, 1
    %p99 = por %p97, %p98
    %p100 = scmp.ne.s32.totalorder %s89, %s90
    %p101 = scmp.eq.s32.totalorder %s18, 0
    %p102 = por %p100, %p101
    %p103 = scmp.ne.s32.totalorder %s89, %s90
    %p104 = scmp.eq.s32.totalorder %s19, 1
    %p105 = por %p103, %p104
    %p107 = scmp.ne.s32.totalorder %s90, %s106
    %p108 = scmp.eq.s32.totalorder %s19, 0
    %p109 = por %p107, %p108
    %s110 = sadd.s32 %s13, 1
    %s111 = sadd.s32 %s20, 1
    %s112 = ssub.s32 %s110, %s111
    %p113 = scmp.eq.s32.totalorder %s112, 0
    %s115 = sadd.s32 %s114, 1
    %s116 = scalar_select %p113, %s114, %s115
    %p119 = pneg %p113
    %p120 = scmp.eq.s32.totalorder %s13, 1
    %p121 = por %p119, %p120
    %p122 = scmp.ne.s32.totalorder %s114, %s117
    %p123 = scmp.eq.s32.totalorder %s13, 0
    %p124 = por %p122, %p123
    %p125 = scmp.ne.s32.totalorder %s114, %s117
    %p126 = scmp.eq.s32.totalorder %s18, 1
    %p127 = por %p125, %p126
    %p128 = scmp.ne.s32.totalorder %s117, %s118
    %p129 = scmp.eq.s32.totalorder %s18, 0
    %p130 = por %p128, %p129
    %p131 = scmp.ne.s32.totalorder %s117, %s118
    %p132 = scmp.eq.s32.totalorder %s19, 1
    %p133 = por %p131, %p132
    %p135 = scmp.ne.s32.totalorder %s118, %s134
    %p136 = scmp.eq.s32.totalorder %s19, 0
    %p137 = por %p135, %p136
    %s138 = sadd.s32 %s13, 1
    %s139 = sadd.s32 %s20, 1
    %s140 = ssub.s32 %s138, %s139
    %p141 = scmp.eq.s32.totalorder %s140, 0
    %s143 = sadd.s32 %s142, 1
    %s144 = scalar_select %p141, %s142, %s143
    %p147 = pneg %p141
    %p148 = scmp.eq.s32.totalorder %s13, 1
    %p149 = por %p147, %p148
    %p150 = scmp.ne.s32.totalorder %s142, %s145
    %p151 = scmp.eq.s32.totalorder %s13, 0
    %p152 = por %p150, %p151
    %p153 = scmp.ne.s32.totalorder %s142, %s145
    %p154 = scmp.eq.s32.totalorder %s18, 1
    %p155 = por %p153, %p154
    %p156 = scmp.ne.s32.totalorder %s145, %s146
    %p157 = scmp.eq.s32.totalorder %s18, 0
    %p158 = por %p156, %p157
    %p159 = scmp.ne.s32.totalorder %s145, %s146
    %p160 = scmp.eq.s32.totalorder %s19, 1
    %p161 = por %p159, %p160
    %p163 = scmp.ne.s32.totalorder %s146, %s162
    %p164 = scmp.eq.s32.totalorder %s19, 0
    %p165 = por %p163, %p164
    %p166 = scmp.le.s32.totalorder 1, %s13
    %p167 = scmp.lt.s32.totalorder %s13, 3
    %p168 = pnand %p166, %p167
    %p169 = pneg %p168
    // Predicated region
    $region9: #{tpu_custom_call.1} parent=5 // pred_check
      _
    $region10: #{tpu_custom_call.1} parent=5 // pred_check_branch
      %171 = sbr.rel (%p168) target = $region12
    $region11: #{tpu_custom_call.1} parent=5 // pred_region
      %s172 = ssub.s32 %s13, 1
      // Predicated region
      $region13: #{tpu_custom_call.1} parent=11 // pred_check
        %p173 = pneg %p34
      $region14: #{tpu_custom_call.1} parent=11 // pred_check_branch
        %175 = sbr.rel (%p173) target = $region16
      $region15: #{tpu_custom_call.1} parent=11 // pred_region
        _
      $region16: #{tpu_custom_call.1} parent=11 // pred_fallthru
        _
      // Predicated region
      $region17: #{tpu_custom_call.1} parent=11 // pred_check
        %p176 = pneg %p55
      $region18: #{tpu_custom_call.1} parent=11 // pred_check_branch
        %178 = sbr.rel (%p176) target = $region20
      $region19: #{tpu_custom_call.1} parent=11 // pred_region
        _
      $region20: #{tpu_custom_call.1} parent=11 // pred_fallthru
        _
      // Predicated region
      $region21: #{tpu_custom_call.1} parent=11 // pred_check
        %p179 = pneg %p76
      $region22: #{tpu_custom_call.1} parent=11 // pred_check_branch
        %181 = sbr.rel (%p179) target = $region24
      $region23: #{tpu_custom_call.1} parent=11 // pred_region
        _
      $region24: #{tpu_custom_call.1} parent=11 // pred_fallthru
        _
    $region12: #{tpu_custom_call.1} parent=5 // pred_fallthru
      _
    %p182 = scmp.lt.s32.totalorder %s13, 2
    // Predicated region
    $region25: #{tpu_custom_call.1} parent=5 // pred_check
      %p183 = pneg %p182
    $region26: #{tpu_custom_call.1} parent=5 // pred_check_branch
      %185 = sbr.rel (%p183) target = $region28
    $region27: #{tpu_custom_call.1} parent=5 // pred_region
      // Predicated region
      $region29: #{tpu_custom_call.1} parent=27 // pred_check
        %p186 = pneg %p96
      $region30: #{tpu_custom_call.1} parent=27 // pred_check_branch
        %188 = sbr.rel (%p186) target = $region32
      $region31: #{tpu_custom_call.1} parent=27 // pred_region
        %s189 = smul.u32 41, %s13
        %p190 = scmp.lt.s32.totalorder %s189, 81
        %s191 = scalar_select %p190, %s189, 81
        %s192 = smul.addr %s191, 8
        %s193 = scalar_lea.vmem %s4, %s192
        %s194 = smul.u32 41, %s13
      $region32: #{tpu_custom_call.1} parent=27 // pred_fallthru
        _
    $region28: #{tpu_custom_call.1} parent=5 // pred_fallthru
      _
    %p195 = scmp.le.s32.totalorder 1, %s13
    %p196 = scmp.lt.s32.totalorder %s13, 3
    %p197 = pnand %p195, %p196
    %p198 = pneg %p197
    // Predicated region
    $region33: #{tpu_custom_call.1} parent=5 // pred_check
      _
    $region34: #{tpu_custom_call.1} parent=5 // pred_check_branch
      %200 = sbr.rel (%p197) target = $region36
    $region35: #{tpu_custom_call.1} parent=5 // pred_region
      %s201 = ssub.s32 %s13, 1
      %p202 = pneg %p34
      %p203 = pneg %p31
      %p204 = pneg %p55
      %p205 = pneg %p52
      %p206 = pneg %p76
      %p207 = pneg %p73
      %s208 = smul.u32 41, %s18
      %p209 = scmp.lt.s32.totalorder %s208, 81
      %s210 = scalar_select %p209, %s208, 81
      %s211 = smul.addr %s210, 8
      %s212 = scalar_lea.vmem %s4, %s211
      %p213 = pneg %p102
      %p214 = pneg %p99
      %p215 = pneg %p130
      %p216 = pneg %p127
      %s217 = sadd.s32 %s18, 1
      %s218 = smul.u32 41, %s217
      %p219 = scmp.lt.s32.totalorder %s218, 163
      %s220 = scalar_select %p219, %s218, 163
      %s221 = smul.addr %s220, 4
      %s222 = scalar_lea.vmem %s5, %s221
      %p223 = pneg %p158
      %p224 = pneg %p155
      %s225 = sadd.s32 %s18, 1
      %s226 = smul.u32 41, %s225
      %p227 = scmp.lt.s32.totalorder %s226, 163
      %s228 = scalar_select %p227, %s226, 163
      %s229 = smul.addr %s228, 4
      %s230 = scalar_lea.vmem %s6, %s229
      %s231 = smul.u32 41, %s18
      %p232 = scmp.lt.s32.totalorder %s231, 81
      %s233 = scalar_select %p232, %s231, 81
      %s234 = smul.addr %s233, 8
      %s235 = scalar_lea.vmem %s4, %s234
      %s236 = smul.u32 41, %s18
      %s237 = sadd.s32 %s18, 1
      %s238 = smul.u32 41, %s237
      %p239 = scmp.lt.s32.totalorder %s238, 163
      %s240 = scalar_select %p239, %s238, 163
      %s241 = smul.addr %s240, 4
      %s242 = scalar_lea.vmem %s5, %s241
      %s243 = sadd.s32 %s18, 1
      %s244 = smul.u32 41, %s243
      %s245 = sadd.s32 %s18, 1
      %s246 = smul.u32 41, %s245
      %p247 = scmp.lt.s32.totalorder %s246, 163
      %s248 = scalar_select %p247, %s246, 163
      %s249 = smul.addr %s248, 4
      %s250 = scalar_lea.vmem %s6, %s249
      %s251 = sadd.s32 %s18, 1
      %s252 = smul.u32 41, %s251
      %s254 = sadd.s32 %s18, 1
      %s255 = smul.u32 %s254, 328
      %s256 = ssub.s32 %s255, 24
      %s257 = sshra.s32 %s256, 3
      %s258 = sand.u32 %s256, 7
      %s259 = smul.addr %s257, 4
      %s260 = scalar_lea.vmem %s0, %s259
      // Predicated region
      $region37: #{tpu_custom_call.1} parent=35 // pred_check
        _
      $region38: #{tpu_custom_call.1} parent=35 // pred_check_branch
        %262 = sbr.rel (0) target = $region40
      $region39: #{tpu_custom_call.1} parent=35 // pred_region
        %s263 = scalar_lea.vmem %s260, 184
        %s264 = scalar_lea.vmem [#allocation2], 184
        loop: start=0, step=1, limit=1
        $region41: #{tpu_custom_call.1} parent=39 // loop_pre_header
          _
        $region42: #{tpu_custom_call.1} parent=39 // loop_header
          %s266 = sphi 0, %s270
          %p267 = scmp.ge.s32.totalorder %s266, 1
          %s271 = sphi %s260, %s260
          %s272 = sphi [#allocation2], [#allocation2]
        $region43: #{tpu_custom_call.1} parent=39 // loop_header_branch
          %269 = sbr.rel (%p267) target = $region47
        $region44: #{tpu_custom_call.1} parent=39 // loop_body
          %v273 = vld [vmem:[%s271] sm:$0xff]
          %274 = vst [vmem:[%s272] sm:$0xff] %v273
          %v275 = vld [vmem:[%s271 + $0x8] sm:$0xff]
          %276 = vst [vmem:[%s272 + $0x8] sm:$0xff] %v275
          %v277 = vld [vmem:[%s271 + $0x10] sm:$0xff]
          %278 = vst [vmem:[%s272 + $0x10] sm:$0xff] %v277
          %v279 = vld [vmem:[%s271 + $0x18] sm:$0xff]
          %280 = vst [vmem:[%s272 + $0x18] sm:$0xff] %v279
          %v281 = vld [vmem:[%s271 + $0x20] sm:$0xff]
          %282 = vst [vmem:[%s272 + $0x20] sm:$0xff] %v281
          %v283 = vld [vmem:[%s271 + $0x28] sm:$0xff]
          %284 = vst [vmem:[%s272 + $0x28] sm:$0xff] %v283
          %v285 = vld [vmem:[%s271 + $0x30] sm:$0xff]
          %286 = vst [vmem:[%s272 + $0x30] sm:$0xff] %v285
          %v287 = vld [vmem:[%s271 + $0x38] sm:$0xff]
          %288 = vst [vmem:[%s272 + $0x38] sm:$0xff] %v287
          %v289 = vld [vmem:[%s271 + $0x40] sm:$0xff]
          %290 = vst [vmem:[%s272 + $0x40] sm:$0xff] %v289
          %v291 = vld [vmem:[%s271 + $0x48] sm:$0xff]
          %292 = vst [vmem:[%s272 + $0x48] sm:$0xff] %v291
          %v293 = vld [vmem:[%s271 + $0x50] sm:$0xff]
          %294 = vst [vmem:[%s272 + $0x50] sm:$0xff] %v293
          %v295 = vld [vmem:[%s271 + $0x58] sm:$0xff]
          %296 = vst [vmem:[%s272 + $0x58] sm:$0xff] %v295
          %v297 = vld [vmem:[%s271 + $0x60] sm:$0xff]
          %298 = vst [vmem:[%s272 + $0x60] sm:$0xff] %v297
          %v299 = vld [vmem:[%s271 + $0x68] sm:$0xff]
          %300 = vst [vmem:[%s272 + $0x68] sm:$0xff] %v299
          %v301 = vld [vmem:[%s271 + $0x70] sm:$0xff]
          %302 = vst [vmem:[%s272 + $0x70] sm:$0xff] %v301
          %v303 = vld [vmem:[%s271 + $0x78] sm:$0xff]
          %304 = vst [vmem:[%s272 + $0x78] sm:$0xff] %v303
          %v305 = vld [vmem:[%s271 + $0x80] sm:$0xff]
          %306 = vst [vmem:[%s272 + $0x80] sm:$0xff] %v305
          %v307 = vld [vmem:[%s271 + $0x88] sm:$0xff]
          %308 = vst [vmem:[%s272 + $0x88] sm:$0xff] %v307
          %v309 = vld [vmem:[%s271 + $0x90] sm:$0xff]
          %310 = vst [vmem:[%s272 + $0x90] sm:$0xff] %v309
          %v311 = vld [vmem:[%s271 + $0x98] sm:$0xff]
          %312 = vst [vmem:[%s272 + $0x98] sm:$0xff] %v311
          %v313 = vld [vmem:[%s271 + $0xa0] sm:$0xff]
          %314 = vst [vmem:[%s272 + $0xa0] sm:$0xff] %v313
          %v315 = vld [vmem:[%s271 + $0xa8] sm:$0xff]
          %316 = vst [vmem:[%s272 + $0xa8] sm:$0xff] %v315
          %v317 = vld [vmem:[%s271 + $0xb0] sm:$0xff]
          %318 = vst [vmem:[%s272 + $0xb0] sm:$0xff] %v317
        $region45: #{tpu_custom_call.1} parent=39 // loop_footer
          %s270 = sadd.s32 1, %s266
        $region46: #{tpu_custom_call.1} parent=39 // loop_footer_branch
          %265 = sbr.rel target = $region42
        $region47: #{tpu_custom_call.1} parent=39 // loop_exit
          _
        %s320 = ssub.s32 16, 1
        loop: start=0, step=1, limit=1
        $region48: #{tpu_custom_call.1} parent=39 // loop_pre_header
          _
        $region49: #{tpu_custom_call.1} parent=39 // loop_header
          %s322 = sphi 0, %s326
          %p323 = scmp.ge.s32.totalorder %s322, 1
          %s327 = sphi %s263, %s263
          %s328 = sphi %s264, %s264
        $region50: #{tpu_custom_call.1} parent=39 // loop_header_branch
          %325 = sbr.rel (%p323) target = $region54
        $region51: #{tpu_custom_call.1} parent=39 // loop_body
          %v329 = vld [vmem:[%s327] sm:%s320]
          %330 = vst [vmem:[%s328] sm:%s320] %v329
        $region52: #{tpu_custom_call.1} parent=39 // loop_footer
          %s326 = sadd.s32 1, %s322
        $region53: #{tpu_custom_call.1} parent=39 // loop_footer_branch
          %321 = sbr.rel target = $region49
        $region54: #{tpu_custom_call.1} parent=39 // loop_exit
          _
      $region40: #{tpu_custom_call.1} parent=35 // pred_fallthru
        _
      // Predicated region
      $region55: #{tpu_custom_call.1} parent=35 // pred_check
        _
      $region56: #{tpu_custom_call.1} parent=35 // pred_check_branch
        %333 = sbr.rel (0) target = $region58
      $region57: #{tpu_custom_call.1} parent=35 // pred_region
        %334 = vsyncadd [#allocation3], 3008
      $region58: #{tpu_custom_call.1} parent=35 // pred_fallthru
        _
      %s335 = smul.u32 4, 47
      %s336 = smul.u32 %s335, 1
      %s337 = sshll.u32 %s336, 4
      %338 = dma.done [#allocation3], %s337
      %v339 = vld [vmem:[#allocation2] sm:$0xc]
      %v340 = vld [vmem:[#allocation2 + $0x4] sm:$0xf]
      %v341 = vld [vmem:[#allocation2 + $0x8] sm:$0xf]
      %v342 = vld [vmem:[#allocation2 + $0xc] sm:$0xf]
      %v343 = vld [vmem:[#allocation2 + $0x10] sm:$0xf]
      %v344 = vld [vmem:[#allocation2 + $0x14] sm:$0xf]
      %v345 = vld [vmem:[#allocation2 + $0x18] sm:$0xf]
      %v346 = vld [vmem:[#allocation2 + $0x1c] sm:$0xf]
      %v347 = vld [vmem:[#allocation2 + $0x20] sm:$0xf]
      %v348 = vld [vmem:[#allocation2 + $0x24] sm:$0xf]
      %v349 = vld [vmem:[#allocation2 + $0x28] sm:$0xf]
      %v350 = vld [vmem:[#allocation2 + $0x2c] sm:$0xf]
      %v351 = vld [vmem:[#allocation2 + $0x30] sm:$0xf]
      %v352 = vld [vmem:[#allocation2 + $0x34] sm:$0xf]
      %v353 = vld [vmem:[#allocation2 + $0x38] sm:$0xf]
      %v354 = vld [vmem:[#allocation2 + $0x3c] sm:$0xf]
      %v355 = vld [vmem:[#allocation2 + $0x40] sm:$0xf]
      %v356 = vld [vmem:[#allocation2 + $0x44] sm:$0xf]
      %v357 = vld [vmem:[#allocation2 + $0x48] sm:$0xf]
      %v358 = vld [vmem:[#allocation2 + $0x4c] sm:$0xf]
      %v359 = vld [vmem:[#allocation2 + $0x50] sm:$0xf]
      %v360 = vld [vmem:[#allocation2 + $0x54] sm:$0xf]
      %v361 = vld [vmem:[#allocation2 + $0x58] sm:$0xf]
      %v362 = vld [vmem:[#allocation2 + $0x5c] sm:$0xf]
      %v363 = vld [vmem:[#allocation2 + $0x60] sm:$0xf]
      %v364 = vld [vmem:[#allocation2 + $0x64] sm:$0xf]
      %v365 = vld [vmem:[#allocation2 + $0x68] sm:$0xf]
      %v366 = vld [vmem:[#allocation2 + $0x6c] sm:$0xf]
      %v367 = vld [vmem:[#allocation2 + $0x70] sm:$0xf]
      %v368 = vld [vmem:[#allocation2 + $0x74] sm:$0xf]
      %v369 = vld [vmem:[#allocation2 + $0x78] sm:$0xf]
      %v370 = vld [vmem:[#allocation2 + $0x7c] sm:$0xf]
      %v371 = vld [vmem:[#allocation2 + $0x80] sm:$0xf]
      %v372 = vld [vmem:[#allocation2 + $0x84] sm:$0xf]
      %v373 = vld [vmem:[#allocation2 + $0x88] sm:$0xf]
      %v374 = vld [vmem:[#allocation2 + $0x8c] sm:$0xf]
      %v375 = vld [vmem:[#allocation2 + $0x90] sm:$0xf]
      %v376 = vld [vmem:[#allocation2 + $0x94] sm:$0xf]
      %v377 = vld [vmem:[#allocation2 + $0x98] sm:$0xf]
      %v378 = vld [vmem:[#allocation2 + $0x9c] sm:$0xf]
      %v379 = vld [vmem:[#allocation2 + $0xa0] sm:$0xf]
      %v380 = vld [vmem:[#allocation2 + $0xa4] sm:$0x7]
      %v381 = vld [vmem:[#allocation2] sm:$0x8]
      %v382 = vld [vmem:[#allocation2 + $0xa4] sm:$0xf]
      %v383 = vld [vmem:[#allocation2 + $0x8] sm:$0x8]
      %v384 = vld [vmem:[#allocation2 + $0xa8] sm:$0xf]
      %v385 = vld [vmem:[#allocation2 + $0xac] sm:$0xf]
      %v386 = vld [vmem:[#allocation2 + $0xb0] sm:$0x1]
      %v387 = vld [vmem:[#allocation2 + $0xb0] sm:$0xf]
      %v388 = vld [vmem:[#allocation2 + $0xb4] sm:$0xf]
      %v389 = vld [vmem:[#allocation2 + $0xb8] sm:$0x1]
      %v390 = vld [vmem:[#allocation2 + $0x14] sm:$0xe]
      %v391 = vld [vmem:[#allocation2 + $0xb8] sm:$0x3]
      %v434 = vunpack.c.l.b16 %v339
      %v435 = vunpack.c.l.b16 %v340
      %v436 = vunpack.c.l.b16 %v341
      %v437 = vunpack.c.l.b16 %v342
      %v438 = vunpack.c.l.b16 %v343
      %v439 = vunpack.c.l.b16 %v344
      %v440 = vunpack.c.l.b16 %v345
      %v441 = vunpack.c.l.b16 %v346
      %v442 = vunpack.c.l.b16 %v347
      %v443 = vunpack.c.l.b16 %v348
      %v444 = vunpack.c.l.b16 %v349
      %v445 = vunpack.c.l.b16 %v350
      %v446 = vunpack.c.l.b16 %v351
      %v447 = vunpack.c.l.b16 %v352
      %v448 = vunpack.c.l.b16 %v353
      %v449 = vunpack.c.l.b16 %v354
      %v450 = vunpack.c.l.b16 %v355
      %v451 = vunpack.c.l.b16 %v356
      %v452 = vunpack.c.l.b16 %v357
      %v453 = vunpack.c.l.b16 %v358
      %v454 = vunpack.c.l.b16 %v359
      %v455 = vunpack.c.l.b16 %v360
      %v456 = vunpack.c.l.b16 %v361
      %v457 = vunpack.c.l.b16 %v362
      %v458 = vunpack.c.l.b16 %v363
      %v459 = vunpack.c.l.b16 %v364
      %v460 = vunpack.c.l.b16 %v365
      %v461 = vunpack.c.l.b16 %v366
      %v462 = vunpack.c.l.b16 %v367
      %v463 = vunpack.c.l.b16 %v368
      %v464 = vunpack.c.l.b16 %v369
      %v465 = vunpack.c.l.b16 %v370
      %v466 = vunpack.c.l.b16 %v371
      %v467 = vunpack.c.l.b16 %v372
      %v468 = vunpack.c.l.b16 %v373
      %v469 = vunpack.c.l.b16 %v374
      %v470 = vunpack.c.l.b16 %v375
      %v471 = vunpack.c.l.b16 %v376
      %v472 = vunpack.c.l.b16 %v377
      %v473 = vunpack.c.l.b16 %v378
      %v474 = vunpack.c.l.b16 %v379
      %v475 = vunpack.c.l.b16 %v380
      %v476 = vpack.c.b16 %v435, %v434
      %v477 = vpack.c.b16 %v437, %v436
      %v478 = vpack.c.b16 %v439, %v438
      %v479 = vpack.c.b16 %v441, %v440
      %v480 = vpack.c.b16 %v443, %v442
      %v481 = vpack.c.b16 %v445, %v444
      %v482 = vpack.c.b16 %v447, %v446
      %v483 = vpack.c.b16 %v449, %v448
      %v484 = vpack.c.b16 %v451, %v450
      %v485 = vpack.c.b16 %v453, %v452
      %v486 = vpack.c.b16 %v455, %v454
      %v487 = vpack.c.b16 %v457, %v456
      %v488 = vpack.c.b16 %v459, %v458
      %v489 = vpack.c.b16 %v461, %v460
      %v490 = vpack.c.b16 %v463, %v462
      %v491 = vpack.c.b16 %v465, %v464
      %v492 = vpack.c.b16 %v467, %v466
      %v493 = vpack.c.b16 %v469, %v468
      %v494 = vpack.c.b16 %v471, %v470
      %v495 = vpack.c.b16 %v473, %v472
      %v496 = vpack.c.b16 %v475, %v474
      %v498 = vunpack.c.l.b16 %v381
      %v499 = vpack.c.b16 %v435, %v498
      %vm500 = vsmask.f32 7424
      %v502 = vshrl.u32 %v499, 16
      %v504 = vshll.u32 %v499, 16
      %v506 = vrot.slane %v504, 1
      %v507 = vor.u32 %v502, %v506
      %v509 = vshll.u32 %v477, 16
      %v511 = vrot.slane %v509, 1
      %v512 = vsel %vm500, %v507, %v511
      %v513 = vshrl.u32 %v477, 16
      %v515 = vor.u32 %v513, %v511
      %v517 = vshll.u32 %v478, 16
      %v519 = vrot.slane %v517, 1
      %v520 = vsel %vm500, %v515, %v519
      %v521 = vshrl.u32 %v478, 16
      %v523 = vor.u32 %v521, %v519
      %v525 = vshll.u32 %v479, 16
      %v527 = vrot.slane %v525, 1
      %v528 = vsel %vm500, %v523, %v527
      %v529 = vshrl.u32 %v479, 16
      %v531 = vor.u32 %v529, %v527
      %v533 = vshll.u32 %v480, 16
      %v535 = vrot.slane %v533, 1
      %v536 = vsel %vm500, %v531, %v535
      %v537 = vshrl.u32 %v480, 16
      %v539 = vor.u32 %v537, %v535
      %v541 = vshll.u32 %v481, 16
      %v543 = vrot.slane %v541, 1
      %v544 = vsel %vm500, %v539, %v543
      %v545 = vshrl.u32 %v481, 16
      %v547 = vor.u32 %v545, %v543
      %v549 = vshll.u32 %v482, 16
      %v551 = vrot.slane %v549, 1
      %v552 = vsel %vm500, %v547, %v551
      %v553 = vshrl.u32 %v482, 16
      %v555 = vor.u32 %v553, %v551
      %v557 = vshll.u32 %v483, 16
      %v559 = vrot.slane %v557, 1
      %v560 = vsel %vm500, %v555, %v559
      %v561 = vshrl.u32 %v483, 16
      %v563 = vor.u32 %v561, %v559
      %v565 = vshll.u32 %v484, 16
      %v567 = vrot.slane %v565, 1
      %v568 = vsel %vm500, %v563, %v567
      %v569 = vshrl.u32 %v484, 16
      %v571 = vor.u32 %v569, %v567
      %v573 = vshll.u32 %v485, 16
      %v575 = vrot.slane %v573, 1
      %v576 = vsel %vm500, %v571, %v575
      %v577 = vshrl.u32 %v485, 16
      %v579 = vor.u32 %v577, %v575
      %v581 = vshll.u32 %v486, 16
      %v583 = vrot.slane %v581, 1
      %v584 = vsel %vm500, %v579, %v583
      %v585 = vshrl.u32 %v486, 16
      %v587 = vor.u32 %v585, %v583
      %v589 = vshll.u32 %v487, 16
      %v591 = vrot.slane %v589, 1
      %v592 = vsel %vm500, %v587, %v591
      %v593 = vshrl.u32 %v487, 16
      %v595 = vor.u32 %v593, %v591
      %v597 = vshll.u32 %v488, 16
      %v599 = vrot.slane %v597, 1
      %v600 = vsel %vm500, %v595, %v599
      %v601 = vshrl.u32 %v488, 16
      %v603 = vor.u32 %v601, %v599
      %v605 = vshll.u32 %v489, 16
      %v607 = vrot.slane %v605, 1
      %v608 = vsel %vm500, %v603, %v607
      %v609 = vshrl.u32 %v489, 16
      %v611 = vor.u32 %v609, %v607
      %v613 = vshll.u32 %v490, 16
      %v615 = vrot.slane %v613, 1
      %v616 = vsel %vm500, %v611, %v615
      %v617 = vshrl.u32 %v490, 16
      %v619 = vor.u32 %v617, %v615
      %v621 = vshll.u32 %v491, 16
      %v623 = vrot.slane %v621, 1
      %v624 = vsel %vm500, %v619, %v623
      %v625 = vshrl.u32 %v491, 16
      %v627 = vor.u32 %v625, %v623
      %v629 = vshll.u32 %v492, 16
      %v631 = vrot.slane %v629, 1
      %v632 = vsel %vm500, %v627, %v631
      %v633 = vshrl.u32 %v492, 16
      %v635 = vor.u32 %v633, %v631
      %v637 = vshll.u32 %v493, 16
      %v639 = vrot.slane %v637, 1
      %v640 = vsel %vm500, %v635, %v639
      %v641 = vshrl.u32 %v493, 16
      %v643 = vor.u32 %v641, %v639
      %v645 = vshll.u32 %v494, 16
      %v647 = vrot.slane %v645, 1
      %v648 = vsel %vm500, %v643, %v647
      %v649 = vshrl.u32 %v494, 16
      %v651 = vor.u32 %v649, %v647
      %v653 = vshll.u32 %v495, 16
      %v655 = vrot.slane %v653, 1
      %v656 = vsel %vm500, %v651, %v655
      %v657 = vshrl.u32 %v495, 16
      %v659 = vor.u32 %v657, %v655
      %v661 = vshll.u32 %v496, 16
      %v663 = vrot.slane %v661, 1
      %v664 = vsel %vm500, %v659, %v663
      %v665 = vshrl.u32 %v496, 16
      %v667 = vor.u32 %v665, %v663
      %668 = vrot.lane.b32.xlu0 %v512, 4
      %v669 = vpop.permute.xlu0 %668
      %670 = vrot.lane.b32.xlu0 %v520, 4
      %v671 = vpop.permute.xlu0 %670
      %672 = vrot.lane.b32.xlu0 %v528, 4
      %v673 = vpop.permute.xlu0 %672
      %674 = vrot.lane.b32.xlu0 %v536, 4
      %v675 = vpop.permute.xlu0 %674
      %676 = vrot.lane.b32.xlu0 %v544, 4
      %v677 = vpop.permute.xlu0 %676
      %678 = vrot.lane.b32.xlu0 %v552, 4
      %v679 = vpop.permute.xlu0 %678
      %680 = vrot.lane.b32.xlu0 %v560, 4
      %v681 = vpop.permute.xlu0 %680
      %682 = vrot.lane.b32.xlu0 %v568, 4
      %v683 = vpop.permute.xlu0 %682
      %684 = vrot.lane.b32.xlu0 %v576, 4
      %v685 = vpop.permute.xlu0 %684
      %686 = vrot.lane.b32.xlu0 %v584, 4
      %v687 = vpop.permute.xlu0 %686
      %688 = vrot.lane.b32.xlu0 %v592, 4
      %v689 = vpop.permute.xlu0 %688
      %690 = vrot.lane.b32.xlu0 %v600, 4
      %v691 = vpop.permute.xlu0 %690
      %692 = vrot.lane.b32.xlu0 %v608, 4
      %v693 = vpop.permute.xlu0 %692
      %694 = vrot.lane.b32.xlu0 %v616, 4
      %v695 = vpop.permute.xlu0 %694
      %696 = vrot.lane.b32.xlu0 %v624, 4
      %v697 = vpop.permute.xlu0 %696
      %698 = vrot.lane.b32.xlu0 %v632, 4
      %v699 = vpop.permute.xlu0 %698
      %700 = vrot.lane.b32.xlu0 %v640, 4
      %v701 = vpop.permute.xlu0 %700
      %702 = vrot.lane.b32.xlu0 %v648, 4
      %v703 = vpop.permute.xlu0 %702
      %704 = vrot.lane.b32.xlu0 %v656, 4
      %v705 = vpop.permute.xlu0 %704
      %706 = vrot.lane.b32.xlu0 %v664, 4
      %v707 = vpop.permute.xlu0 %706
      %708 = vrot.lane.b32.xlu0 %v667, 4
      %v709 = vpop.permute.xlu0 %708
      %v711 = vunpack.c.l.b16 %v382
      %v712 = vpack.c.b16 %v711, %v474
      %vm713 = vcmask 1046528
      %v714 = vrot.slane %v499, 1
      %v715 = vrot.slane %v477, 1
      %v716 = vsel %vm713, %v714, %v715
      %v717 = vrot.slane %v478, 1
      %v718 = vsel %vm713, %v715, %v717
      %v719 = vrot.slane %v479, 1
      %v720 = vsel %vm713, %v717, %v719
      %v721 = vrot.slane %v480, 1
      %v722 = vsel %vm713, %v719, %v721
      %v723 = vrot.slane %v481, 1
      %v724 = vsel %vm713, %v721, %v723
      %v725 = vrot.slane %v482, 1
      %v726 = vsel %vm713, %v723, %v725
      %v727 = vrot.slane %v483, 1
      %v728 = vsel %vm713, %v725, %v727
      %v729 = vrot.slane %v484, 1
      %v730 = vsel %vm713, %v727, %v729
      %v731 = vrot.slane %v485, 1
      %v732 = vsel %vm713, %v729, %v731
      %v733 = vrot.slane %v486, 1
      %v734 = vsel %vm713, %v731, %v733
      %v735 = vrot.slane %v487, 1
      %v736 = vsel %vm713, %v733, %v735
      %v737 = vrot.slane %v488, 1
      %v738 = vsel %vm713, %v735, %v737
      %v739 = vrot.slane %v489, 1
      %v740 = vsel %vm713, %v737, %v739
      %v741 = vrot.slane %v490, 1
      %v742 = vsel %vm713, %v739, %v741
      %v743 = vrot.slane %v491, 1
      %v744 = vsel %vm713, %v741, %v743
      %v745 = vrot.slane %v492, 1
      %v746 = vsel %vm713, %v743, %v745
      %v747 = vrot.slane %v493, 1
      %v748 = vsel %vm713, %v745, %v747
      %v749 = vrot.slane %v494, 1
      %v750 = vsel %vm713, %v747, %v749
      %v751 = vrot.slane %v495, 1
      %v752 = vsel %vm713, %v749, %v751
      %v753 = vrot.slane %v712, 1
      %v754 = vsel %vm713, %v751, %v753
      %755 = vrot.lane.b32.xlu0 %v716, 8
      %v756 = vpop.permute.xlu0 %755
      %757 = vrot.lane.b32.xlu0 %v718, 8
      %v758 = vpop.permute.xlu0 %757
      %759 = vrot.lane.b32.xlu0 %v720, 8
      %v760 = vpop.permute.xlu0 %759
      %761 = vrot.lane.b32.xlu0 %v722, 8
      %v762 = vpop.permute.xlu0 %761
      %763 = vrot.lane.b32.xlu0 %v724, 8
      %v764 = vpop.permute.xlu0 %763
      %765 = vrot.lane.b32.xlu0 %v726, 8
      %v766 = vpop.permute.xlu0 %765
      %767 = vrot.lane.b32.xlu0 %v728, 8
      %v768 = vpop.permute.xlu0 %767
      %769 = vrot.lane.b32.xlu0 %v730, 8
      %v770 = vpop.permute.xlu0 %769
      %771 = vrot.lane.b32.xlu0 %v732, 8
      %v772 = vpop.permute.xlu0 %771
      %773 = vrot.lane.b32.xlu0 %v734, 8
      %v774 = vpop.permute.xlu0 %773
      %775 = vrot.lane.b32.xlu0 %v736, 8
      %v776 = vpop.permute.xlu0 %775
      %777 = vrot.lane.b32.xlu0 %v738, 8
      %v778 = vpop.permute.xlu0 %777
      %779 = vrot.lane.b32.xlu0 %v740, 8
      %v780 = vpop.permute.xlu0 %779
      %781 = vrot.lane.b32.xlu0 %v742, 8
      %v782 = vpop.permute.xlu0 %781
      %783 = vrot.lane.b32.xlu0 %v744, 8
      %v784 = vpop.permute.xlu0 %783
      %785 = vrot.lane.b32.xlu0 %v746, 8
      %v786 = vpop.permute.xlu0 %785
      %787 = vrot.lane.b32.xlu0 %v748, 8
      %v788 = vpop.permute.xlu0 %787
      %789 = vrot.lane.b32.xlu0 %v750, 8
      %v790 = vpop.permute.xlu0 %789
      %791 = vrot.lane.b32.xlu0 %v752, 8
      %v792 = vpop.permute.xlu0 %791
      %793 = vrot.lane.b32.xlu0 %v754, 8
      %v794 = vpop.permute.xlu0 %793
      %795 = vrot.lane.b32.xlu0 %v753, 8
      %v796 = vpop.permute.xlu0 %795
      %v800 = vunpack.c.l.b16 %v383
      %v801 = vunpack.c.l.b16 %v384
      %v802 = vunpack.c.l.b16 %v385
      %v803 = vpack.c.b16 %v437, %v800
      %v804 = vpack.c.b16 %v802, %v801
      %v805 = vrot.slane %v803, 1
      %v806 = vsel %vm713, %v805, %v717
      %v807 = vrot.slane %v804, 1
      %v808 = vsel %vm713, %v753, %v807
      %809 = vrot.lane.b32.xlu0 %v806, 12
      %v810 = vpop.permute.xlu0 %809
      %811 = vrot.lane.b32.xlu0 %v720, 12
      %v812 = vpop.permute.xlu0 %811
      %813 = vrot.lane.b32.xlu0 %v722, 12
      %v814 = vpop.permute.xlu0 %813
      %815 = vrot.lane.b32.xlu0 %v724, 12
      %v816 = vpop.permute.xlu0 %815
      %817 = vrot.lane.b32.xlu0 %v726, 12
      %v818 = vpop.permute.xlu0 %817
      %819 = vrot.lane.b32.xlu0 %v728, 12
      %v820 = vpop.permute.xlu0 %819
      %821 = vrot.lane.b32.xlu0 %v730, 12
      %v822 = vpop.permute.xlu0 %821
      %823 = vrot.lane.b32.xlu0 %v732, 12
      %v824 = vpop.permute.xlu0 %823
      %825 = vrot.lane.b32.xlu0 %v734, 12
      %v826 = vpop.permute.xlu0 %825
      %827 = vrot.lane.b32.xlu0 %v736, 12
      %v828 = vpop.permute.xlu0 %827
      %829 = vrot.lane.b32.xlu0 %v738, 12
      %v830 = vpop.permute.xlu0 %829
      %831 = vrot.lane.b32.xlu0 %v740, 12
      %v832 = vpop.permute.xlu0 %831
      %833 = vrot.lane.b32.xlu0 %v742, 12
      %v834 = vpop.permute.xlu0 %833
      %835 = vrot.lane.b32.xlu0 %v744, 12
      %v836 = vpop.permute.xlu0 %835
      %837 = vrot.lane.b32.xlu0 %v746, 12
      %v838 = vpop.permute.xlu0 %837
      %839 = vrot.lane.b32.xlu0 %v748, 12
      %v840 = vpop.permute.xlu0 %839
      %841 = vrot.lane.b32.xlu0 %v750, 12
      %v842 = vpop.permute.xlu0 %841
      %843 = vrot.lane.b32.xlu0 %v752, 12
      %v844 = vpop.permute.xlu0 %843
      %845 = vrot.lane.b32.xlu0 %v754, 12
      %v846 = vpop.permute.xlu0 %845
      %847 = vrot.lane.b32.xlu0 %v808, 12
      %v848 = vpop.permute.xlu0 %847
      %849 = vrot.lane.b32.xlu0 %v807, 12
      %v850 = vpop.permute.xlu0 %849
      %v851 = vpack.c.b16 %v438, %v437
      %v852 = vpack.c.b16 %v440, %v439
      %v853 = vpack.c.b16 %v442, %v441
      %v854 = vpack.c.b16 %v444, %v443
      %v855 = vpack.c.b16 %v446, %v445
      %v856 = vpack.c.b16 %v448, %v447
      %v857 = vpack.c.b16 %v450, %v449
      %v858 = vpack.c.b16 %v452, %v451
      %v859 = vpack.c.b16 %v454, %v453
      %v860 = vpack.c.b16 %v456, %v455
      %v861 = vpack.c.b16 %v458, %v457
      %v862 = vpack.c.b16 %v460, %v459
      %v863 = vpack.c.b16 %v462, %v461
      %v864 = vpack.c.b16 %v464, %v463
      %v865 = vpack.c.b16 %v466, %v465
      %v866 = vpack.c.b16 %v468, %v467
      %v867 = vpack.c.b16 %v470, %v469
      %v868 = vpack.c.b16 %v472, %v471
      %v869 = vpack.c.b16 %v474, %v473
      %v870 = vpack.c.b16 %v801, %v711
      %v871 = vpack.c.b16 %v802, %v802
      %vm872 = vsmask.f32 2304
      %v874 = vshrl.u32 %v851, 16
      %v876 = vrot.slane %v874, 5
      %v877 = vshll.u32 %v851, 16
      %v879 = vrot.slane %v877, 6
      %v880 = vor.u32 %v876, %v879
      %v882 = vshrl.u32 %v852, 16
      %v884 = vrot.slane %v882, 5
      %v885 = vshll.u32 %v852, 16
      %v887 = vrot.slane %v885, 6
      %v888 = vor.u32 %v884, %v887
      %v889 = vsel %vm872, %v880, %v888
      %v891 = vshrl.u32 %v853, 16
      %v893 = vrot.slane %v891, 5
      %v894 = vshll.u32 %v853, 16
      %v896 = vrot.slane %v894, 6
      %v897 = vor.u32 %v893, %v896
      %v898 = vsel %vm872, %v888, %v897
      %v900 = vshrl.u32 %v854, 16
      %v902 = vrot.slane %v900, 5
      %v903 = vshll.u32 %v854, 16
      %v905 = vrot.slane %v903, 6
      %v906 = vor.u32 %v902, %v905
      %v907 = vsel %vm872, %v897, %v906
      %v909 = vshrl.u32 %v855, 16
      %v911 = vrot.slane %v909, 5
      %v912 = vshll.u32 %v855, 16
      %v914 = vrot.slane %v912, 6
      %v915 = vor.u32 %v911, %v914
      %v916 = vsel %vm872, %v906, %v915
      %v918 = vshrl.u32 %v856, 16
      %v920 = vrot.slane %v918, 5
      %v921 = vshll.u32 %v856, 16
      %v923 = vrot.slane %v921, 6
      %v924 = vor.u32 %v920, %v923
      %v925 = vsel %vm872, %v915, %v924
      %v927 = vshrl.u32 %v857, 16
      %v929 = vrot.slane %v927, 5
      %v930 = vshll.u32 %v857, 16
      %v932 = vrot.slane %v930, 6
      %v933 = vor.u32 %v929, %v932
      %v934 = vsel %vm872, %v924, %v933
      %v936 = vshrl.u32 %v858, 16
      %v938 = vrot.slane %v936, 5
      %v939 = vshll.u32 %v858, 16
      %v941 = vrot.slane %v939, 6
      %v942 = vor.u32 %v938, %v941
      %v943 = vsel %vm872, %v933, %v942
      %v945 = vshrl.u32 %v859, 16
      %v947 = vrot.slane %v945, 5
      %v948 = vshll.u32 %v859, 16
      %v950 = vrot.slane %v948, 6
      %v951 = vor.u32 %v947, %v950
      %v952 = vsel %vm872, %v942, %v951
      %v954 = vshrl.u32 %v860, 16
      %v956 = vrot.slane %v954, 5
      %v957 = vshll.u32 %v860, 16
      %v959 = vrot.slane %v957, 6
      %v960 = vor.u32 %v956, %v959
      %v961 = vsel %vm872, %v951, %v960
      %v963 = vshrl.u32 %v861, 16
      %v965 = vrot.slane %v963, 5
      %v966 = vshll.u32 %v861, 16
      %v968 = vrot.slane %v966, 6
      %v969 = vor.u32 %v965, %v968
      %v970 = vsel %vm872, %v960, %v969
      %v972 = vshrl.u32 %v862, 16
      %v974 = vrot.slane %v972, 5
      %v975 = vshll.u32 %v862, 16
      %v977 = vrot.slane %v975, 6
      %v978 = vor.u32 %v974, %v977
      %v979 = vsel %vm872, %v969, %v978
      %v981 = vshrl.u32 %v863, 16
      %v983 = vrot.slane %v981, 5
      %v984 = vshll.u32 %v863, 16
      %v986 = vrot.slane %v984, 6
      %v987 = vor.u32 %v983, %v986
      %v988 = vsel %vm872, %v978, %v987
      %v990 = vshrl.u32 %v864, 16
      %v992 = vrot.slane %v990, 5
      %v993 = vshll.u32 %v864, 16
      %v995 = vrot.slane %v993, 6
      %v996 = vor.u32 %v992, %v995
      %v997 = vsel %vm872, %v987, %v996
      %v999 = vshrl.u32 %v865, 16
      %v1001 = vrot.slane %v999, 5
      %v1002 = vshll.u32 %v865, 16
      %v1004 = vrot.slane %v1002, 6
      %v1005 = vor.u32 %v1001, %v1004
      %v1006 = vsel %vm872, %v996, %v1005
      %v1008 = vshrl.u32 %v866, 16
      %v1010 = vrot.slane %v1008, 5
      %v1011 = vshll.u32 %v866, 16
      %v1013 = vrot.slane %v1011, 6
      %v1014 = vor.u32 %v1010, %v1013
      %v1015 = vsel %vm872, %v1005, %v1014
      %v1017 = vshrl.u32 %v867, 16
      %v1019 = vrot.slane %v1017, 5
      %v1020 = vshll.u32 %v867, 16
      %v1022 = vrot.slane %v1020, 6
      %v1023 = vor.u32 %v1019, %v1022
      %v1024 = vsel %vm872, %v1014, %v1023
      %v1026 = vshrl.u32 %v868, 16
      %v1028 = vrot.slane %v1026, 5
      %v1029 = vshll.u32 %v868, 16
      %v1031 = vrot.slane %v1029, 6
      %v1032 = vor.u32 %v1028, %v1031
      %v1033 = vsel %vm872, %v1023, %v1032
      %v1035 = vshrl.u32 %v869, 16
      %v1037 = vrot.slane %v1035, 5
      %v1038 = vshll.u32 %v869, 16
      %v1040 = vrot.slane %v1038, 6
      %v1041 = vor.u32 %v1037, %v1040
      %v1042 = vsel %vm872, %v1032, %v1041
      %v1044 = vshrl.u32 %v870, 16
      %v1046 = vrot.slane %v1044, 5
      %v1047 = vshll.u32 %v870, 16
      %v1049 = vrot.slane %v1047, 6
      %v1050 = vor.u32 %v1046, %v1049
      %v1051 = vsel %vm872, %v1041, %v1050
      %v1053 = vshrl.u32 %v871, 16
      %v1055 = vrot.slane %v1053, 5
      %v1056 = vshll.u32 %v871, 16
      %v1058 = vrot.slane %v1056, 6
      %v1059 = vor.u32 %v1055, %v1058
      %v1060 = vsel %vm872, %v1050, %v1059
      %1061 = vrot.lane.b32.xlu0 %v880, 16
      %v1062 = vpop.permute.xlu0 %1061
      %1063 = vrot.lane.b32.xlu0 %v889, 16
      %v1064 = vpop.permute.xlu0 %1063
      %1065 = vrot.lane.b32.xlu0 %v898, 16
      %v1066 = vpop.permute.xlu0 %1065
      %1067 = vrot.lane.b32.xlu0 %v907, 16
      %v1068 = vpop.permute.xlu0 %1067
      %1069 = vrot.lane.b32.xlu0 %v916, 16
      %v1070 = vpop.permute.xlu0 %1069
      %1071 = vrot.lane.b32.xlu0 %v925, 16
      %v1072 = vpop.permute.xlu0 %1071
      %1073 = vrot.lane.b32.xlu0 %v934, 16
      %v1074 = vpop.permute.xlu0 %1073
      %1075 = vrot.lane.b32.xlu0 %v943, 16
      %v1076 = vpop.permute.xlu0 %1075
      %1077 = vrot.lane.b32.xlu0 %v952, 16
      %v1078 = vpop.permute.xlu0 %1077
      %1079 = vrot.lane.b32.xlu0 %v961, 16
      %v1080 = vpop.permute.xlu0 %1079
      %1081 = vrot.lane.b32.xlu0 %v970, 16
      %v1082 = vpop.permute.xlu0 %1081
      %1083 = vrot.lane.b32.xlu0 %v979, 16
      %v1084 = vpop.permute.xlu0 %1083
      %1085 = vrot.lane.b32.xlu0 %v988, 16
      %v1086 = vpop.permute.xlu0 %1085
      %1087 = vrot.lane.b32.xlu0 %v997, 16
      %v1088 = vpop.permute.xlu0 %1087
      %1089 = vrot.lane.b32.xlu0 %v1006, 16
      %v1090 = vpop.permute.xlu0 %1089
      %1091 = vrot.lane.b32.xlu0 %v1015, 16
      %v1092 = vpop.permute.xlu0 %1091
      %1093 = vrot.lane.b32.xlu0 %v1024, 16
      %v1094 = vpop.permute.xlu0 %1093
      %1095 = vrot.lane.b32.xlu0 %v1033, 16
      %v1096 = vpop.permute.xlu0 %1095
      %1097 = vrot.lane.b32.xlu0 %v1042, 16
      %v1098 = vpop.permute.xlu0 %1097
      %1099 = vrot.lane.b32.xlu0 %v1051, 16
      %v1100 = vpop.permute.xlu0 %1099
      %1101 = vrot.lane.b32.xlu0 %v1060, 16
      %v1102 = vpop.permute.xlu0 %1101
      %v1104 = vunpack.c.l.b16 %v386
      %v1105 = vpack.c.b16 %v1104, %v802
      %vm1106 = vcmask 1041408
      %v1107 = vrot.slane %v851, 6
      %v1108 = vrot.slane %v852, 6
      %v1109 = vsel %vm1106, %v1107, %v1108
      %v1110 = vrot.slane %v853, 6
      %v1111 = vsel %vm1106, %v1108, %v1110
      %v1112 = vrot.slane %v854, 6
      %v1113 = vsel %vm1106, %v1110, %v1112
      %v1114 = vrot.slane %v855, 6
      %v1115 = vsel %vm1106, %v1112, %v1114
      %v1116 = vrot.slane %v856, 6
      %v1117 = vsel %vm1106, %v1114, %v1116
      %v1118 = vrot.slane %v857, 6
      %v1119 = vsel %vm1106, %v1116, %v1118
      %v1120 = vrot.slane %v858, 6
      %v1121 = vsel %vm1106, %v1118, %v1120
      %v1122 = vrot.slane %v859, 6
      %v1123 = vsel %vm1106, %v1120, %v1122
      %v1124 = vrot.slane %v860, 6
      %v1125 = vsel %vm1106, %v1122, %v1124
      %v1126 = vrot.slane %v861, 6
      %v1127 = vsel %vm1106, %v1124, %v1126
      %v1128 = vrot.slane %v862, 6
      %v1129 = vsel %vm1106, %v1126, %v1128
      %v1130 = vrot.slane %v863, 6
      %v1131 = vsel %vm1106, %v1128, %v1130
      %v1132 = vrot.slane %v864, 6
      %v1133 = vsel %vm1106, %v1130, %v1132
      %v1134 = vrot.slane %v865, 6
      %v1135 = vsel %vm1106, %v1132, %v1134
      %v1136 = vrot.slane %v866, 6
      %v1137 = vsel %vm1106, %v1134, %v1136
      %v1138 = vrot.slane %v867, 6
      %v1139 = vsel %vm1106, %v1136, %v1138
      %v1140 = vrot.slane %v868, 6
      %v1141 = vsel %vm1106, %v1138, %v1140
      %v1142 = vrot.slane %v869, 6
      %v1143 = vsel %vm1106, %v1140, %v1142
      %v1144 = vrot.slane %v870, 6
      %v1145 = vsel %vm1106, %v1142, %v1144
      %v1146 = vrot.slane %v1105, 6
      %v1147 = vsel %vm1106, %v1144, %v1146
      %1148 = vrot.lane.b32.xlu0 %v1107, 20
      %v1149 = vpop.permute.xlu0 %1148
      %1150 = vrot.lane.b32.xlu0 %v1109, 20
      %v1151 = vpop.permute.xlu0 %1150
      %1152 = vrot.lane.b32.xlu0 %v1111, 20
      %v1153 = vpop.permute.xlu0 %1152
      %1154 = vrot.lane.b32.xlu0 %v1113, 20
      %v1155 = vpop.permute.xlu0 %1154
      %1156 = vrot.lane.b32.xlu0 %v1115, 20
      %v1157 = vpop.permute.xlu0 %1156
      %1158 = vrot.lane.b32.xlu0 %v1117, 20
      %v1159 = vpop.permute.xlu0 %1158
      %1160 = vrot.lane.b32.xlu0 %v1119, 20
      %v1161 = vpop.permute.xlu0 %1160
      %1162 = vrot.lane.b32.xlu0 %v1121, 20
      %v1163 = vpop.permute.xlu0 %1162
      %1164 = vrot.lane.b32.xlu0 %v1123, 20
      %v1165 = vpop.permute.xlu0 %1164
      %1166 = vrot.lane.b32.xlu0 %v1125, 20
      %v1167 = vpop.permute.xlu0 %1166
      %1168 = vrot.lane.b32.xlu0 %v1127, 20
      %v1169 = vpop.permute.xlu0 %1168
      %1170 = vrot.lane.b32.xlu0 %v1129, 20
      %v1171 = vpop.permute.xlu0 %1170
      %1172 = vrot.lane.b32.xlu0 %v1131, 20
      %v1173 = vpop.permute.xlu0 %1172
      %1174 = vrot.lane.b32.xlu0 %v1133, 20
      %v1175 = vpop.permute.xlu0 %1174
      %1176 = vrot.lane.b32.xlu0 %v1135, 20
      %v1177 = vpop.permute.xlu0 %1176
      %1178 = vrot.lane.b32.xlu0 %v1137, 20
      %v1179 = vpop.permute.xlu0 %1178
      %1180 = vrot.lane.b32.xlu0 %v1139, 20
      %v1181 = vpop.permute.xlu0 %1180
      %1182 = vrot.lane.b32.xlu0 %v1141, 20
      %v1183 = vpop.permute.xlu0 %1182
      %1184 = vrot.lane.b32.xlu0 %v1143, 20
      %v1185 = vpop.permute.xlu0 %1184
      %1186 = vrot.lane.b32.xlu0 %v1145, 20
      %v1187 = vpop.permute.xlu0 %1186
      %1188 = vrot.lane.b32.xlu0 %v1147, 20
      %v1189 = vpop.permute.xlu0 %1188
      %v1193 = vunpack.c.l.b16 %v387
      %v1194 = vunpack.c.l.b16 %v388
      %v1195 = vunpack.c.l.b16 %v389
      %v1196 = vpack.c.b16 %v1193, %v802
      %v1197 = vpack.c.b16 %v1195, %v1194
      %v1198 = vrot.slane %v1196, 6
      %v1199 = vsel %vm1106, %v1144, %v1198
      %v1200 = vrot.slane %v1197, 6
      %v1201 = vsel %vm1106, %v1198, %v1200
      %1202 = vrot.lane.b32.xlu0 %v1108, 24
      %v1203 = vpop.permute.xlu0 %1202
      %1204 = vrot.lane.b32.xlu0 %v1111, 24
      %v1205 = vpop.permute.xlu0 %1204
      %1206 = vrot.lane.b32.xlu0 %v1113, 24
      %v1207 = vpop.permute.xlu0 %1206
      %1208 = vrot.lane.b32.xlu0 %v1115, 24
      %v1209 = vpop.permute.xlu0 %1208
      %1210 = vrot.lane.b32.xlu0 %v1117, 24
      %v1211 = vpop.permute.xlu0 %1210
      %1212 = vrot.lane.b32.xlu0 %v1119, 24
      %v1213 = vpop.permute.xlu0 %1212
      %1214 = vrot.lane.b32.xlu0 %v1121, 24
      %v1215 = vpop.permute.xlu0 %1214
      %1216 = vrot.lane.b32.xlu0 %v1123, 24
      %v1217 = vpop.permute.xlu0 %1216
      %1218 = vrot.lane.b32.xlu0 %v1125, 24
      %v1219 = vpop.permute.xlu0 %1218
      %1220 = vrot.lane.b32.xlu0 %v1127, 24
      %v1221 = vpop.permute.xlu0 %1220
      %1222 = vrot.lane.b32.xlu0 %v1129, 24
      %v1223 = vpop.permute.xlu0 %1222
      %1224 = vrot.lane.b32.xlu0 %v1131, 24
      %v1225 = vpop.permute.xlu0 %1224
      %1226 = vrot.lane.b32.xlu0 %v1133, 24
      %v1227 = vpop.permute.xlu0 %1226
      %1228 = vrot.lane.b32.xlu0 %v1135, 24
      %v1229 = vpop.permute.xlu0 %1228
      %1230 = vrot.lane.b32.xlu0 %v1137, 24
      %v1231 = vpop.permute.xlu0 %1230
      %1232 = vrot.lane.b32.xlu0 %v1139, 24
      %v1233 = vpop.permute.xlu0 %1232
      %1234 = vrot.lane.b32.xlu0 %v1141, 24
      %v1235 = vpop.permute.xlu0 %1234
      %1236 = vrot.lane.b32.xlu0 %v1143, 24
      %v1237 = vpop.permute.xlu0 %1236
      %1238 = vrot.lane.b32.xlu0 %v1145, 24
      %v1239 = vpop.permute.xlu0 %1238
      %1240 = vrot.lane.b32.xlu0 %v1199, 24
      %v1241 = vpop.permute.xlu0 %1240
      %1242 = vrot.lane.b32.xlu0 %v1201, 24
      %v1243 = vpop.permute.xlu0 %1242
      %v1245 = vunpack.c.l.b16 %v390
      %v1246 = vpack.c.b16 %v440, %v1245
      %vm1247 = vsmask.f32 1280
      %v1249 = vshrl.u32 %v1246, 16
      %v1251 = vrot.slane %v1249, 6
      %v1252 = vshll.u32 %v1246, 16
      %v1254 = vrot.slane %v1252, 7
      %v1255 = vor.u32 %v1251, %v1254
      %v1256 = vrot.slane %v891, 6
      %v1257 = vrot.slane %v894, 7
      %v1258 = vor.u32 %v1256, %v1257
      %v1259 = vsel %vm1247, %v1255, %v1258
      %v1260 = vrot.slane %v900, 6
      %v1261 = vrot.slane %v903, 7
      %v1262 = vor.u32 %v1260, %v1261
      %v1263 = vsel %vm1247, %v1258, %v1262
      %v1264 = vrot.slane %v909, 6
      %v1265 = vrot.slane %v912, 7
      %v1266 = vor.u32 %v1264, %v1265
      %v1267 = vsel %vm1247, %v1262, %v1266
      %v1268 = vrot.slane %v918, 6
      %v1269 = vrot.slane %v921, 7
      %v1270 = vor.u32 %v1268, %v1269
      %v1271 = vsel %vm1247, %v1266, %v1270
      %v1272 = vrot.slane %v927, 6
      %v1273 = vrot.slane %v930, 7
      %v1274 = vor.u32 %v1272, %v1273
      %v1275 = vsel %vm1247, %v1270, %v1274
      %v1276 = vrot.slane %v936, 6
      %v1277 = vrot.slane %v939, 7
      %v1278 = vor.u32 %v1276, %v1277
      %v1279 = vsel %vm1247, %v1274, %v1278
      %v1280 = vrot.slane %v945, 6
      %v1281 = vrot.slane %v948, 7
      %v1282 = vor.u32 %v1280, %v1281
      %v1283 = vsel %vm1247, %v1278, %v1282
      %v1284 = vrot.slane %v954, 6
      %v1285 = vrot.slane %v957, 7
      %v1286 = vor.u32 %v1284, %v1285
      %v1287 = vsel %vm1247, %v1282, %v1286
      %v1288 = vrot.slane %v963, 6
      %v1289 = vrot.slane %v966, 7
      %v1290 = vor.u32 %v1288, %v1289
      %v1291 = vsel %vm1247, %v1286, %v1290
      %v1292 = vrot.slane %v972, 6
      %v1293 = vrot.slane %v975, 7
      %v1294 = vor.u32 %v1292, %v1293
      %v1295 = vsel %vm1247, %v1290, %v1294
      %v1296 = vrot.slane %v981, 6
      %v1297 = vrot.slane %v984, 7
      %v1298 = vor.u32 %v1296, %v1297
      %v1299 = vsel %vm1247, %v1294, %v1298
      %v1300 = vrot.slane %v990, 6
      %v1301 = vrot.slane %v993, 7
      %v1302 = vor.u32 %v1300, %v1301
      %v1303 = vsel %vm1247, %v1298, %v1302
      %v1304 = vrot.slane %v999, 6
      %v1305 = vrot.slane %v1002, 7
      %v1306 = vor.u32 %v1304, %v1305
      %v1307 = vsel %vm1247, %v1302, %v1306
      %v1308 = vrot.slane %v1008, 6
      %v1309 = vrot.slane %v1011, 7
      %v1310 = vor.u32 %v1308, %v1309
      %v1311 = vsel %vm1247, %v1306, %v1310
      %v1312 = vrot.slane %v1017, 6
      %v1313 = vrot.slane %v1020, 7
      %v1314 = vor.u32 %v1312, %v1313
      %v1315 = vsel %vm1247, %v1310, %v1314
      %v1316 = vrot.slane %v1026, 6
      %v1317 = vrot.slane %v1029, 7
      %v1318 = vor.u32 %v1316, %v1317
      %v1319 = vsel %vm1247, %v1314, %v1318
      %v1320 = vrot.slane %v1035, 6
      %v1321 = vrot.slane %v1038, 7
      %v1322 = vor.u32 %v1320, %v1321
      %v1323 = vsel %vm1247, %v1318, %v1322
      %v1324 = vrot.slane %v1044, 6
      %v1325 = vrot.slane %v1047, 7
      %v1326 = vor.u32 %v1324, %v1325
      %v1327 = vsel %vm1247, %v1322, %v1326
      %v1329 = vshrl.u32 %v1196, 16
      %v1331 = vrot.slane %v1329, 6
      %v1332 = vshll.u32 %v1196, 16
      %v1334 = vrot.slane %v1332, 7
      %v1335 = vor.u32 %v1331, %v1334
      %v1336 = vsel %vm1247, %v1326, %v1335
      %v1338 = vshrl.u32 %v1197, 16
      %v1340 = vrot.slane %v1338, 6
      %v1341 = vshll.u32 %v1197, 16
      %v1343 = vrot.slane %v1341, 7
      %v1344 = vor.u32 %v1340, %v1343
      %v1345 = vsel %vm1247, %v1335, %v1344
      %1346 = vrot.lane.b32.xlu0 %v1255, 28
      %v1347 = vpop.permute.xlu0 %1346
      %1348 = vrot.lane.b32.xlu0 %v1259, 28
      %v1349 = vpop.permute.xlu0 %1348
      %1350 = vrot.lane.b32.xlu0 %v1263, 28
      %v1351 = vpop.permute.xlu0 %1350
      %1352 = vrot.lane.b32.xlu0 %v1267, 28
      %v1353 = vpop.permute.xlu0 %1352
      %1354 = vrot.lane.b32.xlu0 %v1271, 28
      %v1355 = vpop.permute.xlu0 %1354
      %1356 = vrot.lane.b32.xlu0 %v1275, 28
      %v1357 = vpop.permute.xlu0 %1356
      %1358 = vrot.lane.b32.xlu0 %v1279, 28
      %v1359 = vpop.permute.xlu0 %1358
      %1360 = vrot.lane.b32.xlu0 %v1283, 28
      %v1361 = vpop.permute.xlu0 %1360
      %1362 = vrot.lane.b32.xlu0 %v1287, 28
      %v1363 = vpop.permute.xlu0 %1362
      %1364 = vrot.lane.b32.xlu0 %v1291, 28
      %v1365 = vpop.permute.xlu0 %1364
      %1366 = vrot.lane.b32.xlu0 %v1295, 28
      %v1367 = vpop.permute.xlu0 %1366
      %1368 = vrot.lane.b32.xlu0 %v1299, 28
      %v1369 = vpop.permute.xlu0 %1368
      %1370 = vrot.lane.b32.xlu0 %v1303, 28
      %v1371 = vpop.permute.xlu0 %1370
      %1372 = vrot.lane.b32.xlu0 %v1307, 28
      %v1373 = vpop.permute.xlu0 %1372
      %1374 = vrot.lane.b32.xlu0 %v1311, 28
      %v1375 = vpop.permute.xlu0 %1374
      %1376 = vrot.lane.b32.xlu0 %v1315, 28
      %v1377 = vpop.permute.xlu0 %1376
      %1378 = vrot.lane.b32.xlu0 %v1319, 28
      %v1379 = vpop.permute.xlu0 %1378
      %1380 = vrot.lane.b32.xlu0 %v1323, 28
      %v1381 = vpop.permute.xlu0 %1380
      %1382 = vrot.lane.b32.xlu0 %v1327, 28
      %v1383 = vpop.permute.xlu0 %1382
      %1384 = vrot.lane.b32.xlu0 %v1336, 28
      %v1385 = vpop.permute.xlu0 %1384
      %1386 = vrot.lane.b32.xlu0 %v1345, 28
      %v1387 = vpop.permute.xlu0 %1386
      %v1389 = vunpack.c.l.b16 %v391
      %v1390 = vpack.c.b16 %v1389, %v1194
      %vm1391 = vcmask 1040384
      %v1392 = vrot.slane %v1246, 7
      %v1393 = vrot.slane %v853, 7
      %v1394 = vsel %vm1391, %v1392, %v1393
      %v1395 = vrot.slane %v854, 7
      %v1396 = vsel %vm1391, %v1393, %v1395
      %v1397 = vrot.slane %v855, 7
      %v1398 = vsel %vm1391, %v1395, %v1397
      %v1399 = vrot.slane %v856, 7
      %v1400 = vsel %vm1391, %v1397, %v1399
      %v1401 = vrot.slane %v857, 7
      %v1402 = vsel %vm1391, %v1399, %v1401
      %v1403 = vrot.slane %v858, 7
      %v1404 = vsel %vm1391, %v1401, %v1403
      %v1405 = vrot.slane %v859, 7
      %v1406 = vsel %vm1391, %v1403, %v1405
      %v1407 = vrot.slane %v860, 7
      %v1408 = vsel %vm1391, %v1405, %v1407
      %v1409 = vrot.slane %v861, 7
      %v1410 = vsel %vm1391, %v1407, %v1409
      %v1411 = vrot.slane %v862, 7
      %v1412 = vsel %vm1391, %v1409, %v1411
      %v1413 = vrot.slane %v863, 7
      %v1414 = vsel %vm1391, %v1411, %v1413
      %v1415 = vrot.slane %v864, 7
      %v1416 = vsel %vm1391, %v1413, %v1415
      %v1417 = vrot.slane %v865, 7
      %v1418 = vsel %vm1391, %v1415, %v1417
      %v1419 = vrot.slane %v866, 7
      %v1420 = vsel %vm1391, %v1417, %v1419
      %v1421 = vrot.slane %v867, 7
      %v1422 = vsel %vm1391, %v1419, %v1421
      %v1423 = vrot.slane %v868, 7
      %v1424 = vsel %vm1391, %v1421, %v1423
      %v1425 = vrot.slane %v869, 7
      %v1426 = vsel %vm1391, %v1423, %v1425
      %v1427 = vrot.slane %v870, 7
      %v1428 = vsel %vm1391, %v1425, %v1427
      %v1429 = vrot.slane %v1196, 7
      %v1430 = vsel %vm1391, %v1427, %v1429
      %v1431 = vrot.slane %v1390, 7
      %v1432 = vsel %vm1391, %v1429, %v1431
      %1433 = vrot.lane.b32.xlu0 %v1392, 32
      %v1434 = vpop.permute.xlu0 %1433
      %1435 = vrot.lane.b32.xlu0 %v1394, 32
      %v1436 = vpop.permute.xlu0 %1435
      %1437 = vrot.lane.b32.xlu0 %v1396, 32
      %v1438 = vpop.permute.xlu0 %1437
      %1439 = vrot.lane.b32.xlu0 %v1398, 32
      %v1440 = vpop.permute.xlu0 %1439
      %1441 = vrot.lane.b32.xlu0 %v1400, 32
      %v1442 = vpop.permute.xlu0 %1441
      %1443 = vrot.lane.b32.xlu0 %v1402, 32
      %v1444 = vpop.permute.xlu0 %1443
      %1445 = vrot.lane.b32.xlu0 %v1404, 32
      %v1446 = vpop.permute.xlu0 %1445
      %1447 = vrot.lane.b32.xlu0 %v1406, 32
      %v1448 = vpop.permute.xlu0 %1447
      %1449 = vrot.lane.b32.xlu0 %v1408, 32
      %v1450 = vpop.permute.xlu0 %1449
      %1451 = vrot.lane.b32.xlu0 %v1410, 32
      %v1452 = vpop.permute.xlu0 %1451
      %1453 = vrot.lane.b32.xlu0 %v1412, 32
      %v1454 = vpop.permute.xlu0 %1453
      %1455 = vrot.lane.b32.xlu0 %v1414, 32
      %v1456 = vpop.permute.xlu0 %1455
      %1457 = vrot.lane.b32.xlu0 %v1416, 32
      %v1458 = vpop.permute.xlu0 %1457
      %1459 = vrot.lane.b32.xlu0 %v1418, 32
      %v1460 = vpop.permute.xlu0 %1459
      %1461 = vrot.lane.b32.xlu0 %v1420, 32
      %v1462 = vpop.permute.xlu0 %1461
      %1463 = vrot.lane.b32.xlu0 %v1422, 32
      %v1464 = vpop.permute.xlu0 %1463
      %1465 = vrot.lane.b32.xlu0 %v1424, 32
      %v1466 = vpop.permute.xlu0 %1465
      %1467 = vrot.lane.b32.xlu0 %v1426, 32
      %v1468 = vpop.permute.xlu0 %1467
      %1469 = vrot.lane.b32.xlu0 %v1428, 32
      %v1470 = vpop.permute.xlu0 %1469
      %1471 = vrot.lane.b32.xlu0 %v1430, 32
      %v1472 = vpop.permute.xlu0 %1471
      %1473 = vrot.lane.b32.xlu0 %v1432, 32
      %v1474 = vpop.permute.xlu0 %1473
      %vm1475 = vcmask 31744
      %v1478 = vsel %vm1475, %v476, %v669
      %v1480 = vsel %vm1475, %v477, %v671
      %v1482 = vsel %vm1475, %v478, %v673
      %v1484 = vsel %vm1475, %v479, %v675
      %v1486 = vsel %vm1475, %v480, %v677
      %v1488 = vsel %vm1475, %v481, %v679
      %v1490 = vsel %vm1475, %v482, %v681
      %v1492 = vsel %vm1475, %v483, %v683
      %v1494 = vsel %vm1475, %v484, %v685
      %v1496 = vsel %vm1475, %v485, %v687
      %v1498 = vsel %vm1475, %v486, %v689
      %v1500 = vsel %vm1475, %v487, %v691
      %v1502 = vsel %vm1475, %v488, %v693
      %v1504 = vsel %vm1475, %v489, %v695
      %v1506 = vsel %vm1475, %v490, %v697
      %v1508 = vsel %vm1475, %v491, %v699
      %v1510 = vsel %vm1475, %v492, %v701
      %v1512 = vsel %vm1475, %v493, %v703
      %v1514 = vsel %vm1475, %v494, %v705
      %v1516 = vsel %vm1475, %v495, %v707
      %v1518 = vsel %vm1475, %v496, %v709
      %vm1519 = vcmask 64512
      %v1521 = vsel %vm1519, %v1478, %v756
      %v1523 = vsel %vm1519, %v1480, %v758
      %v1525 = vsel %vm1519, %v1482, %v760
      %v1527 = vsel %vm1519, %v1484, %v762
      %v1529 = vsel %vm1519, %v1486, %v764
      %v1531 = vsel %vm1519, %v1488, %v766
      %v1533 = vsel %vm1519, %v1490, %v768
      %v1535 = vsel %vm1519, %v1492, %v770
      %v1537 = vsel %vm1519, %v1494, %v772
      %v1539 = vsel %vm1519, %v1496, %v774
      %v1541 = vsel %vm1519, %v1498, %v776
      %v1543 = vsel %vm1519, %v1500, %v778
      %v1545 = vsel %vm1519, %v1502, %v780
      %v1547 = vsel %vm1519, %v1504, %v782
      %v1549 = vsel %vm1519, %v1506, %v784
      %v1551 = vsel %vm1519, %v1508, %v786
      %v1553 = vsel %vm1519, %v1510, %v788
      %v1555 = vsel %vm1519, %v1512, %v790
      %v1557 = vsel %vm1519, %v1514, %v792
      %v1559 = vsel %vm1519, %v1516, %v794
      %v1561 = vsel %vm1519, %v1518, %v796
      %vm1562 = vcmask 97280
      %v1564 = vsel %vm1562, %v1521, %v810
      %v1566 = vsel %vm1562, %v1523, %v812
      %v1568 = vsel %vm1562, %v1525, %v814
      %v1570 = vsel %vm1562, %v1527, %v816
      %v1572 = vsel %vm1562, %v1529, %v818
      %v1574 = vsel %vm1562, %v1531, %v820
      %v1576 = vsel %vm1562, %v1533, %v822
      %v1578 = vsel %vm1562, %v1535, %v824
      %v1580 = vsel %vm1562, %v1537, %v826
      %v1582 = vsel %vm1562, %v1539, %v828
      %v1584 = vsel %vm1562, %v1541, %v830
      %v1586 = vsel %vm1562, %v1543, %v832
      %v1588 = vsel %vm1562, %v1545, %v834
      %v1590 = vsel %vm1562, %v1547, %v836
      %v1592 = vsel %vm1562, %v1549, %v838
      %v1594 = vsel %vm1562, %v1551, %v840
      %v1596 = vsel %vm1562, %v1553, %v842
      %v1598 = vsel %vm1562, %v1555, %v844
      %v1600 = vsel %vm1562, %v1557, %v846
      %v1602 = vsel %vm1562, %v1559, %v848
      %v1604 = vsel %vm1562, %v1561, %v850
      %vm1605 = vcmask 130048
      %v1607 = vsel %vm1605, %v1564, %v1062
      %v1609 = vsel %vm1605, %v1566, %v1064
      %v1611 = vsel %vm1605, %v1568, %v1066
      %v1613 = vsel %vm1605, %v1570, %v1068
      %v1615 = vsel %vm1605, %v1572, %v1070
      %v1617 = vsel %vm1605, %v1574, %v1072
      %v1619 = vsel %vm1605, %v1576, %v1074
      %v1621 = vsel %vm1605, %v1578, %v1076
      %v1623 = vsel %vm1605, %v1580, %v1078
      %v1625 = vsel %vm1605, %v1582, %v1080
      %v1627 = vsel %vm1605, %v1584, %v1082
      %v1629 = vsel %vm1605, %v1586, %v1084
      %v1631 = vsel %vm1605, %v1588, %v1086
      %v1633 = vsel %vm1605, %v1590, %v1088
      %v1635 = vsel %vm1605, %v1592, %v1090
      %v1637 = vsel %vm1605, %v1594, %v1092
      %v1639 = vsel %vm1605, %v1596, %v1094
      %v1641 = vsel %vm1605, %v1598, %v1096
      %v1643 = vsel %vm1605, %v1600, %v1098
      %v1645 = vsel %vm1605, %v1602, %v1100
      %v1647 = vsel %vm1605, %v1604, %v1102
      %vm1648 = vcmask 162816
      %v1650 = vsel %vm1648, %v1607, %v1149
      %v1652 = vsel %vm1648, %v1609, %v1151
      %v1654 = vsel %vm1648, %v1611, %v1153
      %v1656 = vsel %vm1648, %v1613, %v1155
      %v1658 = vsel %vm1648, %v1615, %v1157
      %v1660 = vsel %vm1648, %v1617, %v1159
      %v1662 = vsel %vm1648, %v1619, %v1161
      %v1664 = vsel %vm1648, %v1621, %v1163
      %v1666 = vsel %vm1648, %v1623, %v1165
      %v1668 = vsel %vm1648, %v1625, %v1167
      %v1670 = vsel %vm1648, %v1627, %v1169
      %v1672 = vsel %vm1648, %v1629, %v1171
      %v1674 = vsel %vm1648, %v1631, %v1173
      %v1676 = vsel %vm1648, %v1633, %v1175
      %v1678 = vsel %vm1648, %v1635, %v1177
      %v1680 = vsel %vm1648, %v1637, %v1179
      %v1682 = vsel %vm1648, %v1639, %v1181
      %v1684 = vsel %vm1648, %v1641, %v1183
      %v1686 = vsel %vm1648, %v1643, %v1185
      %v1688 = vsel %vm1648, %v1645, %v1187
      %v1690 = vsel %vm1648, %v1647, %v1189
      %vm1691 = vcmask 195584
      %v1693 = vsel %vm1691, %v1650, %v1203
      %v1695 = vsel %vm1691, %v1652, %v1205
      %v1697 = vsel %vm1691, %v1654, %v1207
      %v1699 = vsel %vm1691, %v1656, %v1209
      %v1701 = vsel %vm1691, %v1658, %v1211
      %v1703 = vsel %vm1691, %v1660, %v1213
      %v1705 = vsel %vm1691, %v1662, %v1215
      %v1707 = vsel %vm1691, %v1664, %v1217
      %v1709 = vsel %vm1691, %v1666, %v1219
      %v1711 = vsel %vm1691, %v1668, %v1221
      %v1713 = vsel %vm1691, %v1670, %v1223
      %v1715 = vsel %vm1691, %v1672, %v1225
      %v1717 = vsel %vm1691, %v1674, %v1227
      %v1719 = vsel %vm1691, %v1676, %v1229
      %v1721 = vsel %vm1691, %v1678, %v1231
      %v1723 = vsel %vm1691, %v1680, %v1233
      %v1725 = vsel %vm1691, %v1682, %v1235
      %v1727 = vsel %vm1691, %v1684, %v1237
      %v1729 = vsel %vm1691, %v1686, %v1239
      %v1731 = vsel %vm1691, %v1688, %v1241
      %v1733 = vsel %vm1691, %v1690, %v1243
      %vm1734 = vcmask 228352
      %v1736 = vsel %vm1734, %v1693, %v1347
      %v1738 = vsel %vm1734, %v1695, %v1349
      %v1740 = vsel %vm1734, %v1697, %v1351
      %v1742 = vsel %vm1734, %v1699, %v1353
      %v1744 = vsel %vm1734, %v1701, %v1355
      %v1746 = vsel %vm1734, %v1703, %v1357
      %v1748 = vsel %vm1734, %v1705, %v1359
      %v1750 = vsel %vm1734, %v1707, %v1361
      %v1752 = vsel %vm1734, %v1709, %v1363
      %v1754 = vsel %vm1734, %v1711, %v1365
      %v1756 = vsel %vm1734, %v1713, %v1367
      %v1758 = vsel %vm1734, %v1715, %v1369
      %v1760 = vsel %vm1734, %v1717, %v1371
      %v1762 = vsel %vm1734, %v1719, %v1373
      %v1764 = vsel %vm1734, %v1721, %v1375
      %v1766 = vsel %vm1734, %v1723, %v1377
      %v1768 = vsel %vm1734, %v1725, %v1379
      %v1770 = vsel %vm1734, %v1727, %v1381
      %v1772 = vsel %vm1734, %v1729, %v1383
      %v1774 = vsel %vm1734, %v1731, %v1385
      %v1776 = vsel %vm1734, %v1733, %v1387
      %vm1777 = vcmask 261120
      %v1779 = vsel %vm1777, %v1736, %v1434
      %v1781 = vsel %vm1777, %v1738, %v1436
      %v1783 = vsel %vm1777, %v1740, %v1438
      %v1785 = vsel %vm1777, %v1742, %v1440
      %v1787 = vsel %vm1777, %v1744, %v1442
      %v1789 = vsel %vm1777, %v1746, %v1444
      %v1791 = vsel %vm1777, %v1748, %v1446
      %v1793 = vsel %vm1777, %v1750, %v1448
      %v1795 = vsel %vm1777, %v1752, %v1450
      %v1797 = vsel %vm1777, %v1754, %v1452
      %v1799 = vsel %vm1777, %v1756, %v1454
      %v1801 = vsel %vm1777, %v1758, %v1456
      %v1803 = vsel %vm1777, %v1760, %v1458
      %v1805 = vsel %vm1777, %v1762, %v1460
      %v1807 = vsel %vm1777, %v1764, %v1462
      %v1809 = vsel %vm1777, %v1766, %v1464
      %v1811 = vsel %vm1777, %v1768, %v1466
      %v1813 = vsel %vm1777, %v1770, %v1468
      %v1815 = vsel %vm1777, %v1772, %v1470
      %v1817 = vsel %vm1777, %v1774, %v1472
      %v1819 = vsel %vm1777, %v1776, %v1474
      %v1820 = vld [vmem:[%s1] sm:$0xf]
      %v1821 = vld [vmem:[%s1 + $0x4] sm:$0xf]
      %v1822 = vld [vmem:[%s1 + $0x8] sm:$0xf]
      %v1823 = vld [vmem:[%s1 + $0xc] sm:$0xf]
      %v1824 = vld [vmem:[%s1 + $0x10] sm:$0x3]
      %v1825 = vld [vmem:[%s2] sm:$0x1]
      %v1827 = vperm.slane %v1825, 0
      %vm1829 = vsmask.f32 5376
      %v1830 = vshrl.u32 %v1779, 16
      %v1832 = vrot.slane %v1830, 2
      %v1833 = vshll.u32 %v1779, 16
      %v1835 = vrot.slane %v1833, 3
      %v1836 = vor.u32 %v1832, %v1835
      %v1837 = vshrl.u32 %v1781, 16
      %v1839 = vrot.slane %v1837, 2
      %v1840 = vshll.u32 %v1781, 16
      %v1842 = vrot.slane %v1840, 3
      %v1843 = vor.u32 %v1839, %v1842
      %v1844 = vsel %vm1829, %v1836, %v1843
      %v1845 = vshrl.u32 %v1783, 16
      %v1847 = vrot.slane %v1845, 2
      %v1848 = vshll.u32 %v1783, 16
      %v1850 = vrot.slane %v1848, 3
      %v1851 = vor.u32 %v1847, %v1850
      %v1852 = vsel %vm1829, %v1843, %v1851
      %v1853 = vshrl.u32 %v1785, 16
      %v1855 = vrot.slane %v1853, 2
      %v1856 = vshll.u32 %v1785, 16
      %v1858 = vrot.slane %v1856, 3
      %v1859 = vor.u32 %v1855, %v1858
      %v1860 = vsel %vm1829, %v1851, %v1859
      %v1861 = vshrl.u32 %v1787, 16
      %v1863 = vrot.slane %v1861, 2
      %v1864 = vshll.u32 %v1787, 16
      %v1866 = vrot.slane %v1864, 3
      %v1867 = vor.u32 %v1863, %v1866
      %v1868 = vsel %vm1829, %v1859, %v1867
      %v1869 = vshrl.u32 %v1789, 16
      %v1871 = vrot.slane %v1869, 2
      %v1872 = vshll.u32 %v1789, 16
      %v1874 = vrot.slane %v1872, 3
      %v1875 = vor.u32 %v1871, %v1874
      %v1876 = vsel %vm1829, %v1867, %v1875
      %v1877 = vshrl.u32 %v1791, 16
      %v1879 = vrot.slane %v1877, 2
      %v1880 = vshll.u32 %v1791, 16
      %v1882 = vrot.slane %v1880, 3
      %v1883 = vor.u32 %v1879, %v1882
      %v1884 = vsel %vm1829, %v1875, %v1883
      %v1885 = vshrl.u32 %v1793, 16
      %v1887 = vrot.slane %v1885, 2
      %v1888 = vshll.u32 %v1793, 16
      %v1890 = vrot.slane %v1888, 3
      %v1891 = vor.u32 %v1887, %v1890
      %v1892 = vsel %vm1829, %v1883, %v1891
      %v1893 = vshrl.u32 %v1795, 16
      %v1895 = vrot.slane %v1893, 2
      %v1896 = vshll.u32 %v1795, 16
      %v1898 = vrot.slane %v1896, 3
      %v1899 = vor.u32 %v1895, %v1898
      %v1900 = vsel %vm1829, %v1891, %v1899
      %v1901 = vshrl.u32 %v1797, 16
      %v1903 = vrot.slane %v1901, 2
      %v1904 = vshll.u32 %v1797, 16
      %v1906 = vrot.slane %v1904, 3
      %v1907 = vor.u32 %v1903, %v1906
      %v1908 = vsel %vm1829, %v1899, %v1907
      %v1909 = vshrl.u32 %v1799, 16
      %v1911 = vrot.slane %v1909, 2
      %v1912 = vshll.u32 %v1799, 16
      %v1914 = vrot.slane %v1912, 3
      %v1915 = vor.u32 %v1911, %v1914
      %v1916 = vsel %vm1829, %v1907, %v1915
      %v1917 = vshrl.u32 %v1801, 16
      %v1919 = vrot.slane %v1917, 2
      %v1920 = vshll.u32 %v1801, 16
      %v1922 = vrot.slane %v1920, 3
      %v1923 = vor.u32 %v1919, %v1922
      %v1924 = vsel %vm1829, %v1915, %v1923
      %v1925 = vshrl.u32 %v1803, 16
      %v1927 = vrot.slane %v1925, 2
      %v1928 = vshll.u32 %v1803, 16
      %v1930 = vrot.slane %v1928, 3
      %v1931 = vor.u32 %v1927, %v1930
      %v1932 = vsel %vm1829, %v1923, %v1931
      %v1933 = vshrl.u32 %v1805, 16
      %v1935 = vrot.slane %v1933, 2
      %v1936 = vshll.u32 %v1805, 16
      %v1938 = vrot.slane %v1936, 3
      %v1939 = vor.u32 %v1935, %v1938
      %v1940 = vsel %vm1829, %v1931, %v1939
      %v1941 = vshrl.u32 %v1807, 16
      %v1943 = vrot.slane %v1941, 2
      %v1944 = vshll.u32 %v1807, 16
      %v1946 = vrot.slane %v1944, 3
      %v1947 = vor.u32 %v1943, %v1946
      %v1948 = vsel %vm1829, %v1939, %v1947
      %v1949 = vshrl.u32 %v1809, 16
      %v1951 = vrot.slane %v1949, 2
      %v1952 = vshll.u32 %v1809, 16
      %v1954 = vrot.slane %v1952, 3
      %v1955 = vor.u32 %v1951, %v1954
      %v1956 = vsel %vm1829, %v1947, %v1955
      %v1957 = vshrl.u32 %v1811, 16
      %v1959 = vrot.slane %v1957, 2
      %v1960 = vshll.u32 %v1811, 16
      %v1962 = vrot.slane %v1960, 3
      %v1963 = vor.u32 %v1959, %v1962
      %v1964 = vsel %vm1829, %v1955, %v1963
      %v1965 = vshrl.u32 %v1813, 16
      %v1967 = vrot.slane %v1965, 2
      %v1968 = vshll.u32 %v1813, 16
      %v1970 = vrot.slane %v1968, 3
      %v1971 = vor.u32 %v1967, %v1970
      %v1972 = vsel %vm1829, %v1963, %v1971
      %v1973 = vshrl.u32 %v1815, 16
      %v1975 = vrot.slane %v1973, 2
      %v1976 = vshll.u32 %v1815, 16
      %v1978 = vrot.slane %v1976, 3
      %v1979 = vor.u32 %v1975, %v1978
      %v1980 = vsel %vm1829, %v1971, %v1979
      %v1981 = vshrl.u32 %v1817, 16
      %v1983 = vrot.slane %v1981, 2
      %v1984 = vshll.u32 %v1817, 16
      %v1986 = vrot.slane %v1984, 3
      %v1987 = vor.u32 %v1983, %v1986
      %v1988 = vsel %vm1829, %v1979, %v1987
      %v1989 = vshrl.u32 %v1819, 16
      %v1991 = vrot.slane %v1989, 2
      %v1992 = vshll.u32 %v1819, 16
      %v1994 = vrot.slane %v1992, 3
      %v1995 = vor.u32 %v1991, %v1994
      %v1996 = vsel %vm1829, %v1987, %v1995
      %v2002 = vunpack.c.l.b16 %v1820
      %v2003 = vunpack.c.l.b16 %v1821
      %v2004 = vunpack.c.l.b16 %v1822
      %v2005 = vunpack.c.l.b16 %v1823
      %v2006 = vunpack.c.l.b16 %v1824
      %v2007 = vpack.c.b16 %v2003, %v2002
      %v2008 = vpack.c.b16 %v2005, %v2004
      %v2009 = vpack.c.b16 %v2006, %v2006
      %vm2012 = vcmask 293888
      %v2014 = vsel %vm2012, %v1844, 0
      %v2017 = vsel %vm2012, %v1852, 0
      %v2020 = vsel %vm2012, %v1860, 0
      %v2023 = vsel %vm2012, %v1868, 0
      %v2026 = vsel %vm2012, %v1876, 0
      %v2029 = vsel %vm2012, %v1884, 0
      %v2032 = vsel %vm2012, %v1892, 0
      %v2035 = vsel %vm2012, %v1900, 0
      %v2038 = vsel %vm2012, %v1908, 0
      %v2041 = vsel %vm2012, %v1916, 0
      %v2044 = vsel %vm2012, %v1924, 0
      %v2047 = vsel %vm2012, %v1932, 0
      %v2050 = vsel %vm2012, %v1940, 0
      %v2053 = vsel %vm2012, %v1948, 0
      %v2056 = vsel %vm2012, %v1956, 0
      %v2059 = vsel %vm2012, %v1964, 0
      %v2062 = vsel %vm2012, %v1972, 0
      %v2065 = vsel %vm2012, %v1980, 0
      %v2068 = vsel %vm2012, %v1988, 0
      %v2071 = vsel %vm2012, %v1996, 0
      %v2074 = vsel %vm2012, %v1995, 0
      %vm2076 = vcmask 1041408
      %v2078 = vsel %vm2076, %v2009, 0
      %2080 = vmatpush.bf16.msra.mxu0 0
      %2081 = vmatpush.bf16.msra.mxu0 0
      %2082 = vmatpush.bf16.msra.mxu0 0
      %2083 = vmatpush.bf16.msra.mxu0 0
      %2084 = vmatpush.bf16.msra.mxu0 0
      %2085 = vmatpush.bf16.msra.mxu0 %v2078
      %2086 = vmatpush.bf16.msra.mxu0 %v2008
      %2087 = vmatpush.bf16.msra.mxu0 %v2007
      %2088 = vmatmul.bf16.gmra.mxu0 %v2014
      %v2089 = vpop.f32.mrf.mxu0
      %v2090 = vadd.f32 %v1827, %v2089
      %v2091 = vpop.f32.mrf.mxu0
      %v2092 = vadd.f32 %v1827, %v2091
      %2093 = vmatmul.bf16.gmra.mxu0 %v2017
      %v2094 = vpop.f32.mrf.mxu0
      %v2095 = vadd.f32 %v1827, %v2094
      %v2096 = vpop.f32.mrf.mxu0
      %v2097 = vadd.f32 %v1827, %v2096
      %2098 = vmatmul.bf16.gmra.mxu0 %v2020
      %v2099 = vpop.f32.mrf.mxu0
      %v2100 = vadd.f32 %v1827, %v2099
      %v2101 = vpop.f32.mrf.mxu0
      %v2102 = vadd.f32 %v1827, %v2101
      %2103 = vmatmul.bf16.gmra.mxu0 %v2023
      %v2104 = vpop.f32.mrf.mxu0
      %v2105 = vadd.f32 %v1827, %v2104
      %v2106 = vpop.f32.mrf.mxu0
      %v2107 = vadd.f32 %v1827, %v2106
      %2108 = vmatmul.bf16.gmra.mxu0 %v2026
      %v2109 = vpop.f32.mrf.mxu0
      %v2110 = vadd.f32 %v1827, %v2109
      %v2111 = vpop.f32.mrf.mxu0
      %v2112 = vadd.f32 %v1827, %v2111
      %2113 = vmatmul.bf16.gmra.mxu0 %v2029
      %v2114 = vpop.f32.mrf.mxu0
      %v2115 = vadd.f32 %v1827, %v2114
      %v2116 = vpop.f32.mrf.mxu0
      %v2117 = vadd.f32 %v1827, %v2116
      %2118 = vmatmul.bf16.gmra.mxu0 %v2032
      %v2119 = vpop.f32.mrf.mxu0
      %v2120 = vadd.f32 %v1827, %v2119
      %v2121 = vpop.f32.mrf.mxu0
      %v2122 = vadd.f32 %v1827, %v2121
      %2123 = vmatmul.bf16.gmra.mxu0 %v2035
      %v2124 = vpop.f32.mrf.mxu0
      %v2125 = vadd.f32 %v1827, %v2124
      %v2126 = vpop.f32.mrf.mxu0
      %v2127 = vadd.f32 %v1827, %v2126
      %2128 = vmatmul.bf16.gmra.mxu0 %v2038
      %v2129 = vpop.f32.mrf.mxu0
      %v2130 = vadd.f32 %v1827, %v2129
      %v2131 = vpop.f32.mrf.mxu0
      %v2132 = vadd.f32 %v1827, %v2131
      %2133 = vmatmul.bf16.gmra.mxu0 %v2041
      %v2134 = vpop.f32.mrf.mxu0
      %v2135 = vadd.f32 %v1827, %v2134
      %v2136 = vpop.f32.mrf.mxu0
      %v2137 = vadd.f32 %v1827, %v2136
      %2138 = vmatmul.bf16.gmra.mxu0 %v2044
      %v2139 = vpop.f32.mrf.mxu0
      %v2140 = vadd.f32 %v1827, %v2139
      %v2141 = vpop.f32.mrf.mxu0
      %v2142 = vadd.f32 %v1827, %v2141
      %2143 = vmatmul.bf16.gmra.mxu0 %v2047
      %v2144 = vpop.f32.mrf.mxu0
      %v2145 = vadd.f32 %v1827, %v2144
      %v2146 = vpop.f32.mrf.mxu0
      %v2147 = vadd.f32 %v1827, %v2146
      %2148 = vmatmul.bf16.gmra.mxu0 %v2050
      %v2149 = vpop.f32.mrf.mxu0
      %v2150 = vadd.f32 %v1827, %v2149
      %v2151 = vpop.f32.mrf.mxu0
      %v2152 = vadd.f32 %v1827, %v2151
      %2153 = vmatmul.bf16.gmra.mxu0 %v2053
      %v2154 = vpop.f32.mrf.mxu0
      %v2155 = vadd.f32 %v1827, %v2154
      %v2156 = vpop.f32.mrf.mxu0
      %v2157 = vadd.f32 %v1827, %v2156
      %2158 = vmatmul.bf16.gmra.mxu0 %v2056
      %v2159 = vpop.f32.mrf.mxu0
      %v2160 = vadd.f32 %v1827, %v2159
      %v2161 = vpop.f32.mrf.mxu0
      %v2162 = vadd.f32 %v1827, %v2161
      %2163 = vmatmul.bf16.gmra.mxu0 %v2059
      %v2164 = vpop.f32.mrf.mxu0
      %v2165 = vadd.f32 %v1827, %v2164
      %v2166 = vpop.f32.mrf.mxu0
      %v2167 = vadd.f32 %v1827, %v2166
      %2168 = vmatmul.bf16.gmra.mxu0 %v2062
      %v2169 = vpop.f32.mrf.mxu0
      %v2170 = vadd.f32 %v1827, %v2169
      %v2171 = vpop.f32.mrf.mxu0
      %v2172 = vadd.f32 %v1827, %v2171
      %2173 = vmatmul.bf16.gmra.mxu0 %v2065
      %v2174 = vpop.f32.mrf.mxu0
      %v2175 = vadd.f32 %v1827, %v2174
      %v2176 = vpop.f32.mrf.mxu0
      %v2177 = vadd.f32 %v1827, %v2176
      %2178 = vmatmul.bf16.gmra.mxu0 %v2068
      %v2179 = vpop.f32.mrf.mxu0
      %v2180 = vadd.f32 %v1827, %v2179
      %v2181 = vpop.f32.mrf.mxu0
      %v2182 = vadd.f32 %v1827, %v2181
      %2183 = vmatmul.bf16.gmra.mxu0 %v2071
      %v2184 = vpop.f32.mrf.mxu0
      %v2185 = vadd.f32 %v1827, %v2184
      %v2186 = vpop.f32.mrf.mxu0
      %v2187 = vadd.f32 %v1827, %v2186
      %2188 = vmatmul.bf16.gmra.mxu0 %v2074
      %v2189 = vpop.f32.mrf.mxu0
      %v2190 = vadd.f32 %v1827, %v2189
      %v2191 = vpop.f32.mrf.mxu0
      %2192 = vdwg.mxu0
      %v2193 = vmax.f32 %v2090, 0.0
      %v2194 = vmax.f32 %v2092, 0.0
      %v2195 = vmax.f32 %v2095, 0.0
      %v2196 = vmax.f32 %v2097, 0.0
      %v2197 = vmax.f32 %v2100, 0.0
      %v2198 = vmax.f32 %v2102, 0.0
      %v2199 = vmax.f32 %v2105, 0.0
      %v2200 = vmax.f32 %v2107, 0.0
      %v2201 = vmax.f32 %v2110, 0.0
      %v2202 = vmax.f32 %v2112, 0.0
      %v2203 = vmax.f32 %v2115, 0.0
      %v2204 = vmax.f32 %v2117, 0.0
      %v2205 = vmax.f32 %v2120, 0.0
      %v2206 = vmax.f32 %v2122, 0.0
      %v2207 = vmax.f32 %v2125, 0.0
      %v2208 = vmax.f32 %v2127, 0.0
      %v2209 = vmax.f32 %v2130, 0.0
      %v2210 = vmax.f32 %v2132, 0.0
      %v2211 = vmax.f32 %v2135, 0.0
      %v2212 = vmax.f32 %v2137, 0.0
      %v2213 = vmax.f32 %v2140, 0.0
      %v2214 = vmax.f32 %v2142, 0.0
      %v2215 = vmax.f32 %v2145, 0.0
      %v2216 = vmax.f32 %v2147, 0.0
      %v2217 = vmax.f32 %v2150, 0.0
      %v2218 = vmax.f32 %v2152, 0.0
      %v2219 = vmax.f32 %v2155, 0.0
      %v2220 = vmax.f32 %v2157, 0.0
      %v2221 = vmax.f32 %v2160, 0.0
      %v2222 = vmax.f32 %v2162, 0.0
      %v2223 = vmax.f32 %v2165, 0.0
      %v2224 = vmax.f32 %v2167, 0.0
      %v2225 = vmax.f32 %v2170, 0.0
      %v2226 = vmax.f32 %v2172, 0.0
      %v2227 = vmax.f32 %v2175, 0.0
      %v2228 = vmax.f32 %v2177, 0.0
      %v2229 = vmax.f32 %v2180, 0.0
      %v2230 = vmax.f32 %v2182, 0.0
      %v2231 = vmax.f32 %v2185, 0.0
      %v2232 = vmax.f32 %v2187, 0.0
      %v2233 = vmax.f32 %v2190, 0.0
      %v2234 = vld [vmem:[%s235] sm:$0xff]
      %v2235 = vld [vmem:[%s235 + $0x8] sm:$0xff]
      %v2236 = vld [vmem:[%s235 + $0x10] sm:$0xff]
      %v2237 = vld [vmem:[%s235 + $0x18] sm:$0xff]
      %v2238 = vld [vmem:[%s235 + $0x20] sm:$0xff]
      %v2239 = vld [vmem:[%s235 + $0x28] sm:$0xff]
      %v2240 = vld [vmem:[%s235 + $0x30] sm:$0xff]
      %v2241 = vld [vmem:[%s235 + $0x38] sm:$0xff]
      %v2242 = vld [vmem:[%s235 + $0x40] sm:$0xff]
      %v2243 = vld [vmem:[%s235 + $0x48] sm:$0xff]
      %v2244 = vld [vmem:[%s235 + $0x50] sm:$0xff]
      %v2245 = vld [vmem:[%s235 + $0x58] sm:$0xff]
      %v2246 = vld [vmem:[%s235 + $0x60] sm:$0xff]
      %v2247 = vld [vmem:[%s235 + $0x68] sm:$0xff]
      %v2248 = vld [vmem:[%s235 + $0x70] sm:$0xff]
      %v2249 = vld [vmem:[%s235 + $0x78] sm:$0xff]
      %v2250 = vld [vmem:[%s235 + $0x80] sm:$0xff]
      %v2251 = vld [vmem:[%s235 + $0x88] sm:$0xff]
      %v2252 = vld [vmem:[%s235 + $0x90] sm:$0xff]
      %v2253 = vld [vmem:[%s235 + $0x98] sm:$0xff]
      %v2254 = vld [vmem:[%s235 + $0xa0] sm:$0xff]
      %v2255 = vld [vmem:[%s235 + $0xa8] sm:$0xff]
      %v2256 = vld [vmem:[%s235 + $0xb0] sm:$0xff]
      %v2257 = vld [vmem:[%s235 + $0xb8] sm:$0xff]
      %v2258 = vld [vmem:[%s235 + $0xc0] sm:$0xff]
      %v2259 = vld [vmem:[%s235 + $0xc8] sm:$0xff]
      %v2260 = vld [vmem:[%s235 + $0xd0] sm:$0xff]
      %v2261 = vld [vmem:[%s235 + $0xd8] sm:$0xff]
      %v2262 = vld [vmem:[%s235 + $0xe0] sm:$0xff]
      %v2263 = vld [vmem:[%s235 + $0xe8] sm:$0xff]
      %v2264 = vld [vmem:[%s235 + $0xf0] sm:$0xff]
      %v2265 = vld [vmem:[%s235 + $0xf8] sm:$0xff]
      %v2266 = vld [vmem:[%s235 + $0x100] sm:$0xff]
      %v2267 = vld [vmem:[%s235 + $0x108] sm:$0xff]
      %v2268 = vld [vmem:[%s235 + $0x110] sm:$0xff]
      %v2269 = vld [vmem:[%s235 + $0x118] sm:$0xff]
      %v2270 = vld [vmem:[%s235 + $0x120] sm:$0xff]
      %v2271 = vld [vmem:[%s235 + $0x128] sm:$0xff]
      %v2272 = vld [vmem:[%s235 + $0x130] sm:$0xff]
      %v2273 = vld [vmem:[%s235 + $0x138] sm:$0xff]
      %v2274 = vld [vmem:[%s235 + $0x140] sm:$0xff]
      %vm2275 = vcmp.gt.f32.partialorder %v2234, 0.5
      %vm2276 = vcmp.gt.f32.partialorder %v2235, 0.5
      %vm2277 = vcmp.gt.f32.partialorder %v2236, 0.5
      %vm2278 = vcmp.gt.f32.partialorder %v2237, 0.5
      %vm2279 = vcmp.gt.f32.partialorder %v2238, 0.5
      %vm2280 = vcmp.gt.f32.partialorder %v2239, 0.5
      %vm2281 = vcmp.gt.f32.partialorder %v2240, 0.5
      %vm2282 = vcmp.gt.f32.partialorder %v2241, 0.5
      %vm2283 = vcmp.gt.f32.partialorder %v2242, 0.5
      %vm2284 = vcmp.gt.f32.partialorder %v2243, 0.5
      %vm2285 = vcmp.gt.f32.partialorder %v2244, 0.5
      %vm2286 = vcmp.gt.f32.partialorder %v2245, 0.5
      %vm2287 = vcmp.gt.f32.partialorder %v2246, 0.5
      %vm2288 = vcmp.gt.f32.partialorder %v2247, 0.5
      %vm2289 = vcmp.gt.f32.partialorder %v2248, 0.5
      %vm2290 = vcmp.gt.f32.partialorder %v2249, 0.5
      %vm2291 = vcmp.gt.f32.partialorder %v2250, 0.5
      %vm2292 = vcmp.gt.f32.partialorder %v2251, 0.5
      %vm2293 = vcmp.gt.f32.partialorder %v2252, 0.5
      %vm2294 = vcmp.gt.f32.partialorder %v2253, 0.5
      %vm2295 = vcmp.gt.f32.partialorder %v2254, 0.5
      %vm2296 = vcmp.gt.f32.partialorder %v2255, 0.5
      %vm2297 = vcmp.gt.f32.partialorder %v2256, 0.5
      %vm2298 = vcmp.gt.f32.partialorder %v2257, 0.5
      %vm2299 = vcmp.gt.f32.partialorder %v2258, 0.5
      %vm2300 = vcmp.gt.f32.partialorder %v2259, 0.5
      %vm2301 = vcmp.gt.f32.partialorder %v2260, 0.5
      %vm2302 = vcmp.gt.f32.partialorder %v2261, 0.5
      %vm2303 = vcmp.gt.f32.partialorder %v2262, 0.5
      %vm2304 = vcmp.gt.f32.partialorder %v2263, 0.5
      %vm2305 = vcmp.gt.f32.partialorder %v2264, 0.5
      %vm2306 = vcmp.gt.f32.partialorder %v2265, 0.5
      %vm2307 = vcmp.gt.f32.partialorder %v2266, 0.5
      %vm2308 = vcmp.gt.f32.partialorder %v2267, 0.5
      %vm2309 = vcmp.gt.f32.partialorder %v2268, 0.5
      %vm2310 = vcmp.gt.f32.partialorder %v2269, 0.5
      %vm2311 = vcmp.gt.f32.partialorder %v2270, 0.5
      %vm2312 = vcmp.gt.f32.partialorder %v2271, 0.5
      %vm2313 = vcmp.gt.f32.partialorder %v2272, 0.5
      %vm2314 = vcmp.gt.f32.partialorder %v2273, 0.5
      %vm2315 = vcmp.gt.f32.partialorder %v2274, 0.5
      %v2316 = vsel %vm2275, 1, 0
      %v2317 = vsel %vm2276, 1, 0
      %v2318 = vsel %vm2277, 1, 0
      %v2319 = vsel %vm2278, 1, 0
      %v2320 = vsel %vm2279, 1, 0
      %v2321 = vsel %vm2280, 1, 0
      %v2322 = vsel %vm2281, 1, 0
      %v2323 = vsel %vm2282, 1, 0
      %v2324 = vsel %vm2283, 1, 0
      %v2325 = vsel %vm2284, 1, 0
      %v2326 = vsel %vm2285, 1, 0
      %v2327 = vsel %vm2286, 1, 0
      %v2328 = vsel %vm2287, 1, 0
      %v2329 = vsel %vm2288, 1, 0
      %v2330 = vsel %vm2289, 1, 0
      %v2331 = vsel %vm2290, 1, 0
      %v2332 = vsel %vm2291, 1, 0
      %v2333 = vsel %vm2292, 1, 0
      %v2334 = vsel %vm2293, 1, 0
      %v2335 = vsel %vm2294, 1, 0
      %v2336 = vsel %vm2295, 1, 0
      %v2337 = vsel %vm2296, 1, 0
      %v2338 = vsel %vm2297, 1, 0
      %v2339 = vsel %vm2298, 1, 0
      %v2340 = vsel %vm2299, 1, 0
      %v2341 = vsel %vm2300, 1, 0
      %v2342 = vsel %vm2301, 1, 0
      %v2343 = vsel %vm2302, 1, 0
      %v2344 = vsel %vm2303, 1, 0
      %v2345 = vsel %vm2304, 1, 0
      %v2346 = vsel %vm2305, 1, 0
      %v2347 = vsel %vm2306, 1, 0
      %v2348 = vsel %vm2307, 1, 0
      %v2349 = vsel %vm2308, 1, 0
      %v2350 = vsel %vm2309, 1, 0
      %v2351 = vsel %vm2310, 1, 0
      %v2352 = vsel %vm2311, 1, 0
      %v2353 = vsel %vm2312, 1, 0
      %v2354 = vsel %vm2313, 1, 0
      %v2355 = vsel %vm2314, 1, 0
      %v2356 = vsel %vm2315, 1, 0
      %2357 = vset.pattern.permute.xlu0 0
      %2358 = vperm.xlu0 %2357, %v2316
      %v2359 = vpop.permute.xlu0 %2358
      %2360 = vset.pattern.permute.xlu0 0
      %2361 = vperm.xlu0 %2360, %v2317
      %v2362 = vpop.permute.xlu0 %2361
      %2363 = vset.pattern.permute.xlu0 0
      %2364 = vperm.xlu0 %2363, %v2318
      %v2365 = vpop.permute.xlu0 %2364
      %2366 = vset.pattern.permute.xlu0 0
      %2367 = vperm.xlu0 %2366, %v2319
      %v2368 = vpop.permute.xlu0 %2367
      %2369 = vset.pattern.permute.xlu0 0
      %2370 = vperm.xlu0 %2369, %v2320
      %v2371 = vpop.permute.xlu0 %2370
      %2372 = vset.pattern.permute.xlu0 0
      %2373 = vperm.xlu0 %2372, %v2321
      %v2374 = vpop.permute.xlu0 %2373
      %2375 = vset.pattern.permute.xlu0 0
      %2376 = vperm.xlu0 %2375, %v2322
      %v2377 = vpop.permute.xlu0 %2376
      %2378 = vset.pattern.permute.xlu0 0
      %2379 = vperm.xlu0 %2378, %v2323
      %v2380 = vpop.permute.xlu0 %2379
      %2381 = vset.pattern.permute.xlu0 0
      %2382 = vperm.xlu0 %2381, %v2324
      %v2383 = vpop.permute.xlu0 %2382
      %2384 = vset.pattern.permute.xlu0 0
      %2385 = vperm.xlu0 %2384, %v2325
      %v2386 = vpop.permute.xlu0 %2385
      %2387 = vset.pattern.permute.xlu0 0
      %2388 = vperm.xlu0 %2387, %v2326
      %v2389 = vpop.permute.xlu0 %2388
      %2390 = vset.pattern.permute.xlu0 0
      %2391 = vperm.xlu0 %2390, %v2327
      %v2392 = vpop.permute.xlu0 %2391
      %2393 = vset.pattern.permute.xlu0 0
      %2394 = vperm.xlu0 %2393, %v2328
      %v2395 = vpop.permute.xlu0 %2394
      %2396 = vset.pattern.permute.xlu0 0
      %2397 = vperm.xlu0 %2396, %v2329
      %v2398 = vpop.permute.xlu0 %2397
      %2399 = vset.pattern.permute.xlu0 0
      %2400 = vperm.xlu0 %2399, %v2330
      %v2401 = vpop.permute.xlu0 %2400
      %2402 = vset.pattern.permute.xlu0 0
      %2403 = vperm.xlu0 %2402, %v2331
      %v2404 = vpop.permute.xlu0 %2403
      %2405 = vset.pattern.permute.xlu0 0
      %2406 = vperm.xlu0 %2405, %v2332
      %v2407 = vpop.permute.xlu0 %2406
      %2408 = vset.pattern.permute.xlu0 0
      %2409 = vperm.xlu0 %2408, %v2333
      %v2410 = vpop.permute.xlu0 %2409
      %2411 = vset.pattern.permute.xlu0 0
      %2412 = vperm.xlu0 %2411, %v2334
      %v2413 = vpop.permute.xlu0 %2412
      %2414 = vset.pattern.permute.xlu0 0
      %2415 = vperm.xlu0 %2414, %v2335
      %v2416 = vpop.permute.xlu0 %2415
      %2417 = vset.pattern.permute.xlu0 0
      %2418 = vperm.xlu0 %2417, %v2336
      %v2419 = vpop.permute.xlu0 %2418
      %2420 = vset.pattern.permute.xlu0 0
      %2421 = vperm.xlu0 %2420, %v2337
      %v2422 = vpop.permute.xlu0 %2421
      %2423 = vset.pattern.permute.xlu0 0
      %2424 = vperm.xlu0 %2423, %v2338
      %v2425 = vpop.permute.xlu0 %2424
      %2426 = vset.pattern.permute.xlu0 0
      %2427 = vperm.xlu0 %2426, %v2339
      %v2428 = vpop.permute.xlu0 %2427
      %2429 = vset.pattern.permute.xlu0 0
      %2430 = vperm.xlu0 %2429, %v2340
      %v2431 = vpop.permute.xlu0 %2430
      %2432 = vset.pattern.permute.xlu0 0
      %2433 = vperm.xlu0 %2432, %v2341
      %v2434 = vpop.permute.xlu0 %2433
      %2435 = vset.pattern.permute.xlu0 0
      %2436 = vperm.xlu0 %2435, %v2342
      %v2437 = vpop.permute.xlu0 %2436
      %2438 = vset.pattern.permute.xlu0 0
      %2439 = vperm.xlu0 %2438, %v2343
      %v2440 = vpop.permute.xlu0 %2439
      %2441 = vset.pattern.permute.xlu0 0
      %2442 = vperm.xlu0 %2441, %v2344
      %v2443 = vpop.permute.xlu0 %2442
      %2444 = vset.pattern.permute.xlu0 0
      %2445 = vperm.xlu0 %2444, %v2345
      %v2446 = vpop.permute.xlu0 %2445
      %2447 = vset.pattern.permute.xlu0 0
      %2448 = vperm.xlu0 %2447, %v2346
      %v2449 = vpop.permute.xlu0 %2448
      %2450 = vset.pattern.permute.xlu0 0
      %2451 = vperm.xlu0 %2450, %v2347
      %v2452 = vpop.permute.xlu0 %2451
      %2453 = vset.pattern.permute.xlu0 0
      %2454 = vperm.xlu0 %2453, %v2348
      %v2455 = vpop.permute.xlu0 %2454
      %2456 = vset.pattern.permute.xlu0 0
      %2457 = vperm.xlu0 %2456, %v2349
      %v2458 = vpop.permute.xlu0 %2457
      %2459 = vset.pattern.permute.xlu0 0
      %2460 = vperm.xlu0 %2459, %v2350
      %v2461 = vpop.permute.xlu0 %2460
      %2462 = vset.pattern.permute.xlu0 0
      %2463 = vperm.xlu0 %2462, %v2351
      %v2464 = vpop.permute.xlu0 %2463
      %2465 = vset.pattern.permute.xlu0 0
      %2466 = vperm.xlu0 %2465, %v2352
      %v2467 = vpop.permute.xlu0 %2466
      %2468 = vset.pattern.permute.xlu0 0
      %2469 = vperm.xlu0 %2468, %v2353
      %v2470 = vpop.permute.xlu0 %2469
      %2471 = vset.pattern.permute.xlu0 0
      %2472 = vperm.xlu0 %2471, %v2354
      %v2473 = vpop.permute.xlu0 %2472
      %2474 = vset.pattern.permute.xlu0 0
      %2475 = vperm.xlu0 %2474, %v2355
      %v2476 = vpop.permute.xlu0 %2475
      %2477 = vset.pattern.permute.xlu0 0
      %2478 = vperm.xlu0 %2477, %v2356
      %v2479 = vpop.permute.xlu0 %2478
      %vm2480 = vcmp.eq.s32.totalorder %v2359, 1
      %vm2481 = vcmp.eq.s32.totalorder %v2362, 1
      %vm2482 = vcmp.eq.s32.totalorder %v2365, 1
      %vm2483 = vcmp.eq.s32.totalorder %v2368, 1
      %vm2484 = vcmp.eq.s32.totalorder %v2371, 1
      %vm2485 = vcmp.eq.s32.totalorder %v2374, 1
      %vm2486 = vcmp.eq.s32.totalorder %v2377, 1
      %vm2487 = vcmp.eq.s32.totalorder %v2380, 1
      %vm2488 = vcmp.eq.s32.totalorder %v2383, 1
      %vm2489 = vcmp.eq.s32.totalorder %v2386, 1
      %vm2490 = vcmp.eq.s32.totalorder %v2389, 1
      %vm2491 = vcmp.eq.s32.totalorder %v2392, 1
      %vm2492 = vcmp.eq.s32.totalorder %v2395, 1
      %vm2493 = vcmp.eq.s32.totalorder %v2398, 1
      %vm2494 = vcmp.eq.s32.totalorder %v2401, 1
      %vm2495 = vcmp.eq.s32.totalorder %v2404, 1
      %vm2496 = vcmp.eq.s32.totalorder %v2407, 1
      %vm2497 = vcmp.eq.s32.totalorder %v2410, 1
      %vm2498 = vcmp.eq.s32.totalorder %v2413, 1
      %vm2499 = vcmp.eq.s32.totalorder %v2416, 1
      %vm2500 = vcmp.eq.s32.totalorder %v2419, 1
      %vm2501 = vcmp.eq.s32.totalorder %v2422, 1
      %vm2502 = vcmp.eq.s32.totalorder %v2425, 1
      %vm2503 = vcmp.eq.s32.totalorder %v2428, 1
      %vm2504 = vcmp.eq.s32.totalorder %v2431, 1
      %vm2505 = vcmp.eq.s32.totalorder %v2434, 1
      %vm2506 = vcmp.eq.s32.totalorder %v2437, 1
      %vm2507 = vcmp.eq.s32.totalorder %v2440, 1
      %vm2508 = vcmp.eq.s32.totalorder %v2443, 1
      %vm2509 = vcmp.eq.s32.totalorder %v2446, 1
      %vm2510 = vcmp.eq.s32.totalorder %v2449, 1
      %vm2511 = vcmp.eq.s32.totalorder %v2452, 1
      %vm2512 = vcmp.eq.s32.totalorder %v2455, 1
      %vm2513 = vcmp.eq.s32.totalorder %v2458, 1
      %vm2514 = vcmp.eq.s32.totalorder %v2461, 1
      %vm2515 = vcmp.eq.s32.totalorder %v2464, 1
      %vm2516 = vcmp.eq.s32.totalorder %v2467, 1
      %vm2517 = vcmp.eq.s32.totalorder %v2470, 1
      %vm2518 = vcmp.eq.s32.totalorder %v2473, 1
      %vm2519 = vcmp.eq.s32.totalorder %v2476, 1
      %vm2520 = vcmp.eq.s32.totalorder %v2479, 1
      %v2521 = vsel %vm2480, %v2193, 0.0
      %v2522 = vsel %vm2481, %v2194, 0.0
      %v2523 = vsel %vm2482, %v2195, 0.0
      %v2524 = vsel %vm2483, %v2196, 0.0
      %v2525 = vsel %vm2484, %v2197, 0.0
      %v2526 = vsel %vm2485, %v2198, 0.0
      %v2527 = vsel %vm2486, %v2199, 0.0
      %v2528 = vsel %vm2487, %v2200, 0.0
      %v2529 = vsel %vm2488, %v2201, 0.0
      %v2530 = vsel %vm2489, %v2202, 0.0
      %v2531 = vsel %vm2490, %v2203, 0.0
      %v2532 = vsel %vm2491, %v2204, 0.0
      %v2533 = vsel %vm2492, %v2205, 0.0
      %v2534 = vsel %vm2493, %v2206, 0.0
      %v2535 = vsel %vm2494, %v2207, 0.0
      %v2536 = vsel %vm2495, %v2208, 0.0
      %v2537 = vsel %vm2496, %v2209, 0.0
      %v2538 = vsel %vm2497, %v2210, 0.0
      %v2539 = vsel %vm2498, %v2211, 0.0
      %v2540 = vsel %vm2499, %v2212, 0.0
      %v2541 = vsel %vm2500, %v2213, 0.0
      %v2542 = vsel %vm2501, %v2214, 0.0
      %v2543 = vsel %vm2502, %v2215, 0.0
      %v2544 = vsel %vm2503, %v2216, 0.0
      %v2545 = vsel %vm2504, %v2217, 0.0
      %v2546 = vsel %vm2505, %v2218, 0.0
      %v2547 = vsel %vm2506, %v2219, 0.0
      %v2548 = vsel %vm2507, %v2220, 0.0
      %v2549 = vsel %vm2508, %v2221, 0.0
      %v2550 = vsel %vm2509, %v2222, 0.0
      %v2551 = vsel %vm2510, %v2223, 0.0
      %v2552 = vsel %vm2511, %v2224, 0.0
      %v2553 = vsel %vm2512, %v2225, 0.0
      %v2554 = vsel %vm2513, %v2226, 0.0
      %v2555 = vsel %vm2514, %v2227, 0.0
      %v2556 = vsel %vm2515, %v2228, 0.0
      %v2557 = vsel %vm2516, %v2229, 0.0
      %v2558 = vsel %vm2517, %v2230, 0.0
      %v2559 = vsel %vm2518, %v2231, 0.0
      %v2560 = vsel %vm2519, %v2232, 0.0
      %v2561 = vsel %vm2520, %v2233, 0.0
      %v2562 = vpack.c.bf16 %v2521, %v2521
      %v2563 = vpack.c.bf16 %v2522, %v2522
      %v2564 = vpack.c.bf16 %v2523, %v2523
      %v2565 = vpack.c.bf16 %v2524, %v2524
      %v2566 = vpack.c.bf16 %v2525, %v2525
      %v2567 = vpack.c.bf16 %v2526, %v2526
      %v2568 = vpack.c.bf16 %v2527, %v2527
      %v2569 = vpack.c.bf16 %v2528, %v2528
      %v2570 = vpack.c.bf16 %v2529, %v2529
      %v2571 = vpack.c.bf16 %v2530, %v2530
      %v2572 = vpack.c.bf16 %v2531, %v2531
      %v2573 = vpack.c.bf16 %v2532, %v2532
      %v2574 = vpack.c.bf16 %v2533, %v2533
      %v2575 = vpack.c.bf16 %v2534, %v2534
      %v2576 = vpack.c.bf16 %v2535, %v2535
      %v2577 = vpack.c.bf16 %v2536, %v2536
      %v2578 = vpack.c.bf16 %v2537, %v2537
      %v2579 = vpack.c.bf16 %v2538, %v2538
      %v2580 = vpack.c.bf16 %v2539, %v2539
      %v2581 = vpack.c.bf16 %v2540, %v2540
      %v2582 = vpack.c.bf16 %v2541, %v2541
      %v2583 = vpack.c.bf16 %v2542, %v2542
      %v2584 = vpack.c.bf16 %v2543, %v2543
      %v2585 = vpack.c.bf16 %v2544, %v2544
      %v2586 = vpack.c.bf16 %v2545, %v2545
      %v2587 = vpack.c.bf16 %v2546, %v2546
      %v2588 = vpack.c.bf16 %v2547, %v2547
      %v2589 = vpack.c.bf16 %v2548, %v2548
      %v2590 = vpack.c.bf16 %v2549, %v2549
      %v2591 = vpack.c.bf16 %v2550, %v2550
      %v2592 = vpack.c.bf16 %v2551, %v2551
      %v2593 = vpack.c.bf16 %v2552, %v2552
      %v2594 = vpack.c.bf16 %v2553, %v2553
      %v2595 = vpack.c.bf16 %v2554, %v2554
      %v2596 = vpack.c.bf16 %v2555, %v2555
      %v2597 = vpack.c.bf16 %v2556, %v2556
      %v2598 = vpack.c.bf16 %v2557, %v2557
      %v2599 = vpack.c.bf16 %v2558, %v2558
      %v2600 = vpack.c.bf16 %v2559, %v2559
      %v2601 = vpack.c.bf16 %v2560, %v2560
      %v2602 = vpack.c.bf16 %v2561, %v2561
      %vm2603 = vcmask 257024
      %2604 = vst.msk [vmem:[%s242] sm:$0xf] %vm2603, %v2562
      %2605 = vst.msk [vmem:[%s242 + $0x4] sm:$0xf] %vm2603, %v2563
      %2606 = vst.msk [vmem:[%s242 + $0x8] sm:$0xf] %vm2603, %v2564
      %2607 = vst.msk [vmem:[%s242 + $0xc] sm:$0xf] %vm2603, %v2565
      %2608 = vst.msk [vmem:[%s242 + $0x10] sm:$0xf] %vm2603, %v2566
      %2609 = vst.msk [vmem:[%s242 + $0x14] sm:$0xf] %vm2603, %v2567
      %2610 = vst.msk [vmem:[%s242 + $0x18] sm:$0xf] %vm2603, %v2568
      %2611 = vst.msk [vmem:[%s242 + $0x1c] sm:$0xf] %vm2603, %v2569
      %2612 = vst.msk [vmem:[%s242 + $0x20] sm:$0xf] %vm2603, %v2570
      %2613 = vst.msk [vmem:[%s242 + $0x24] sm:$0xf] %vm2603, %v2571
      %2614 = vst.msk [vmem:[%s242 + $0x28] sm:$0xf] %vm2603, %v2572
      %2615 = vst.msk [vmem:[%s242 + $0x2c] sm:$0xf] %vm2603, %v2573
      %2616 = vst.msk [vmem:[%s242 + $0x30] sm:$0xf] %vm2603, %v2574
      %2617 = vst.msk [vmem:[%s242 + $0x34] sm:$0xf] %vm2603, %v2575
      %2618 = vst.msk [vmem:[%s242 + $0x38] sm:$0xf] %vm2603, %v2576
      %2619 = vst.msk [vmem:[%s242 + $0x3c] sm:$0xf] %vm2603, %v2577
      %2620 = vst.msk [vmem:[%s242 + $0x40] sm:$0xf] %vm2603, %v2578
      %2621 = vst.msk [vmem:[%s242 + $0x44] sm:$0xf] %vm2603, %v2579
      %2622 = vst.msk [vmem:[%s242 + $0x48] sm:$0xf] %vm2603, %v2580
      %2623 = vst.msk [vmem:[%s242 + $0x4c] sm:$0xf] %vm2603, %v2581
      %2624 = vst.msk [vmem:[%s242 + $0x50] sm:$0xf] %vm2603, %v2582
      %2625 = vst.msk [vmem:[%s242 + $0x54] sm:$0xf] %vm2603, %v2583
      %2626 = vst.msk [vmem:[%s242 + $0x58] sm:$0xf] %vm2603, %v2584
      %2627 = vst.msk [vmem:[%s242 + $0x5c] sm:$0xf] %vm2603, %v2585
      %2628 = vst.msk [vmem:[%s242 + $0x60] sm:$0xf] %vm2603, %v2586
      %2629 = vst.msk [vmem:[%s242 + $0x64] sm:$0xf] %vm2603, %v2587
      %2630 = vst.msk [vmem:[%s242 + $0x68] sm:$0xf] %vm2603, %v2588
      %2631 = vst.msk [vmem:[%s242 + $0x6c] sm:$0xf] %vm2603, %v2589
      %2632 = vst.msk [vmem:[%s242 + $0x70] sm:$0xf] %vm2603, %v2590
      %2633 = vst.msk [vmem:[%s242 + $0x74] sm:$0xf] %vm2603, %v2591
      %2634 = vst.msk [vmem:[%s242 + $0x78] sm:$0xf] %vm2603, %v2592
      %2635 = vst.msk [vmem:[%s242 + $0x7c] sm:$0xf] %vm2603, %v2593
      %2636 = vst.msk [vmem:[%s242 + $0x80] sm:$0xf] %vm2603, %v2594
      %2637 = vst.msk [vmem:[%s242 + $0x84] sm:$0xf] %vm2603, %v2595
      %2638 = vst.msk [vmem:[%s242 + $0x88] sm:$0xf] %vm2603, %v2596
      %2639 = vst.msk [vmem:[%s242 + $0x8c] sm:$0xf] %vm2603, %v2597
      %2640 = vst.msk [vmem:[%s242 + $0x90] sm:$0xf] %vm2603, %v2598
      %2641 = vst.msk [vmem:[%s242 + $0x94] sm:$0xf] %vm2603, %v2599
      %2642 = vst.msk [vmem:[%s242 + $0x98] sm:$0xf] %vm2603, %v2600
      %2643 = vst.msk [vmem:[%s242 + $0x9c] sm:$0xf] %vm2603, %v2601
      %2644 = vst.msk [vmem:[%s242 + $0xa0] sm:$0xf] %vm2603, %v2602
      %v2645 = vmul.f32 %v2521, %v2521
      %v2646 = vmul.f32 %v2522, %v2522
      %v2647 = vmul.f32 %v2523, %v2523
      %v2648 = vmul.f32 %v2524, %v2524
      %v2649 = vmul.f32 %v2525, %v2525
      %v2650 = vmul.f32 %v2526, %v2526
      %v2651 = vmul.f32 %v2527, %v2527
      %v2652 = vmul.f32 %v2528, %v2528
      %v2653 = vmul.f32 %v2529, %v2529
      %v2654 = vmul.f32 %v2530, %v2530
      %v2655 = vmul.f32 %v2531, %v2531
      %v2656 = vmul.f32 %v2532, %v2532
      %v2657 = vmul.f32 %v2533, %v2533
      %v2658 = vmul.f32 %v2534, %v2534
      %v2659 = vmul.f32 %v2535, %v2535
      %v2660 = vmul.f32 %v2536, %v2536
      %v2661 = vmul.f32 %v2537, %v2537
      %v2662 = vmul.f32 %v2538, %v2538
      %v2663 = vmul.f32 %v2539, %v2539
      %v2664 = vmul.f32 %v2540, %v2540
      %v2665 = vmul.f32 %v2541, %v2541
      %v2666 = vmul.f32 %v2542, %v2542
      %v2667 = vmul.f32 %v2543, %v2543
      %v2668 = vmul.f32 %v2544, %v2544
      %v2669 = vmul.f32 %v2545, %v2545
      %v2670 = vmul.f32 %v2546, %v2546
      %v2671 = vmul.f32 %v2547, %v2547
      %v2672 = vmul.f32 %v2548, %v2548
      %v2673 = vmul.f32 %v2549, %v2549
      %v2674 = vmul.f32 %v2550, %v2550
      %v2675 = vmul.f32 %v2551, %v2551
      %v2676 = vmul.f32 %v2552, %v2552
      %v2677 = vmul.f32 %v2553, %v2553
      %v2678 = vmul.f32 %v2554, %v2554
      %v2679 = vmul.f32 %v2555, %v2555
      %v2680 = vmul.f32 %v2556, %v2556
      %v2681 = vmul.f32 %v2557, %v2557
      %v2682 = vmul.f32 %v2558, %v2558
      %v2683 = vmul.f32 %v2559, %v2559
      %v2684 = vmul.f32 %v2560, %v2560
      %v2685 = vmul.f32 %v2561, %v2561
      %v2686 = vsel %vm1777, %v2645, 0.0
      %2687 = vadd.xlane.f32.xlu0 %v2686
      %v2688 = vpop.xlane.xlu0 %2687
      %v2689 = vsel %vm1777, %v2646, 0.0
      %2690 = vadd.xlane.f32.xlu0 %v2689
      %v2691 = vpop.xlane.xlu0 %2690
      %v2692 = vsel %vm1777, %v2647, 0.0
      %2693 = vadd.xlane.f32.xlu0 %v2692
      %v2694 = vpop.xlane.xlu0 %2693
      %v2695 = vsel %vm1777, %v2648, 0.0
      %2696 = vadd.xlane.f32.xlu0 %v2695
      %v2697 = vpop.xlane.xlu0 %2696
      %v2698 = vsel %vm1777, %v2649, 0.0
      %2699 = vadd.xlane.f32.xlu0 %v2698
      %v2700 = vpop.xlane.xlu0 %2699
      %v2701 = vsel %vm1777, %v2650, 0.0
      %2702 = vadd.xlane.f32.xlu0 %v2701
      %v2703 = vpop.xlane.xlu0 %2702
      %v2704 = vsel %vm1777, %v2651, 0.0
      %2705 = vadd.xlane.f32.xlu0 %v2704
      %v2706 = vpop.xlane.xlu0 %2705
      %v2707 = vsel %vm1777, %v2652, 0.0
      %2708 = vadd.xlane.f32.xlu0 %v2707
      %v2709 = vpop.xlane.xlu0 %2708
      %v2710 = vsel %vm1777, %v2653, 0.0
      %2711 = vadd.xlane.f32.xlu0 %v2710
      %v2712 = vpop.xlane.xlu0 %2711
      %v2713 = vsel %vm1777, %v2654, 0.0
      %2714 = vadd.xlane.f32.xlu0 %v2713
      %v2715 = vpop.xlane.xlu0 %2714
      %v2716 = vsel %vm1777, %v2655, 0.0
      %2717 = vadd.xlane.f32.xlu0 %v2716
      %v2718 = vpop.xlane.xlu0 %2717
      %v2719 = vsel %vm1777, %v2656, 0.0
      %2720 = vadd.xlane.f32.xlu0 %v2719
      %v2721 = vpop.xlane.xlu0 %2720
      %v2722 = vsel %vm1777, %v2657, 0.0
      %2723 = vadd.xlane.f32.xlu0 %v2722
      %v2724 = vpop.xlane.xlu0 %2723
      %v2725 = vsel %vm1777, %v2658, 0.0
      %2726 = vadd.xlane.f32.xlu0 %v2725
      %v2727 = vpop.xlane.xlu0 %2726
      %v2728 = vsel %vm1777, %v2659, 0.0
      %2729 = vadd.xlane.f32.xlu0 %v2728
      %v2730 = vpop.xlane.xlu0 %2729
      %v2731 = vsel %vm1777, %v2660, 0.0
      %2732 = vadd.xlane.f32.xlu0 %v2731
      %v2733 = vpop.xlane.xlu0 %2732
      %v2734 = vsel %vm1777, %v2661, 0.0
      %2735 = vadd.xlane.f32.xlu0 %v2734
      %v2736 = vpop.xlane.xlu0 %2735
      %v2737 = vsel %vm1777, %v2662, 0.0
      %2738 = vadd.xlane.f32.xlu0 %v2737
      %v2739 = vpop.xlane.xlu0 %2738
      %v2740 = vsel %vm1777, %v2663, 0.0
      %2741 = vadd.xlane.f32.xlu0 %v2740
      %v2742 = vpop.xlane.xlu0 %2741
      %v2743 = vsel %vm1777, %v2664, 0.0
      %2744 = vadd.xlane.f32.xlu0 %v2743
      %v2745 = vpop.xlane.xlu0 %2744
      %v2746 = vsel %vm1777, %v2665, 0.0
      %2747 = vadd.xlane.f32.xlu0 %v2746
      %v2748 = vpop.xlane.xlu0 %2747
      %v2749 = vsel %vm1777, %v2666, 0.0
      %2750 = vadd.xlane.f32.xlu0 %v2749
      %v2751 = vpop.xlane.xlu0 %2750
      %v2752 = vsel %vm1777, %v2667, 0.0
      %2753 = vadd.xlane.f32.xlu0 %v2752
      %v2754 = vpop.xlane.xlu0 %2753
      %v2755 = vsel %vm1777, %v2668, 0.0
      %2756 = vadd.xlane.f32.xlu0 %v2755
      %v2757 = vpop.xlane.xlu0 %2756
      %v2758 = vsel %vm1777, %v2669, 0.0
      %2759 = vadd.xlane.f32.xlu0 %v2758
      %v2760 = vpop.xlane.xlu0 %2759
      %v2761 = vsel %vm1777, %v2670, 0.0
      %2762 = vadd.xlane.f32.xlu0 %v2761
      %v2763 = vpop.xlane.xlu0 %2762
      %v2764 = vsel %vm1777, %v2671, 0.0
      %2765 = vadd.xlane.f32.xlu0 %v2764
      %v2766 = vpop.xlane.xlu0 %2765
      %v2767 = vsel %vm1777, %v2672, 0.0
      %2768 = vadd.xlane.f32.xlu0 %v2767
      %v2769 = vpop.xlane.xlu0 %2768
      %v2770 = vsel %vm1777, %v2673, 0.0
      %2771 = vadd.xlane.f32.xlu0 %v2770
      %v2772 = vpop.xlane.xlu0 %2771
      %v2773 = vsel %vm1777, %v2674, 0.0
      %2774 = vadd.xlane.f32.xlu0 %v2773
      %v2775 = vpop.xlane.xlu0 %2774
      %v2776 = vsel %vm1777, %v2675, 0.0
      %2777 = vadd.xlane.f32.xlu0 %v2776
      %v2778 = vpop.xlane.xlu0 %2777
      %v2779 = vsel %vm1777, %v2676, 0.0
      %2780 = vadd.xlane.f32.xlu0 %v2779
      %v2781 = vpop.xlane.xlu0 %2780
      %v2782 = vsel %vm1777, %v2677, 0.0
      %2783 = vadd.xlane.f32.xlu0 %v2782
      %v2784 = vpop.xlane.xlu0 %2783
      %v2785 = vsel %vm1777, %v2678, 0.0
      %2786 = vadd.xlane.f32.xlu0 %v2785
      %v2787 = vpop.xlane.xlu0 %2786
      %v2788 = vsel %vm1777, %v2679, 0.0
      %2789 = vadd.xlane.f32.xlu0 %v2788
      %v2790 = vpop.xlane.xlu0 %2789
      %v2791 = vsel %vm1777, %v2680, 0.0
      %2792 = vadd.xlane.f32.xlu0 %v2791
      %v2793 = vpop.xlane.xlu0 %2792
      %v2794 = vsel %vm1777, %v2681, 0.0
      %2795 = vadd.xlane.f32.xlu0 %v2794
      %v2796 = vpop.xlane.xlu0 %2795
      %v2797 = vsel %vm1777, %v2682, 0.0
      %2798 = vadd.xlane.f32.xlu0 %v2797
      %v2799 = vpop.xlane.xlu0 %2798
      %v2800 = vsel %vm1777, %v2683, 0.0
      %2801 = vadd.xlane.f32.xlu0 %v2800
      %v2802 = vpop.xlane.xlu0 %2801
      %v2803 = vsel %vm1777, %v2684, 0.0
      %2804 = vadd.xlane.f32.xlu0 %v2803
      %v2805 = vpop.xlane.xlu0 %2804
      %v2806 = vsel %vm1777, %v2685, 0.0
      %2807 = vadd.xlane.f32.xlu0 %v2806
      %v2808 = vpop.xlane.xlu0 %2807
      %v2809 = vadd.f32 %v2688, 1e-20
      %v2810 = vadd.f32 %v2691, 1e-20
      %v2811 = vadd.f32 %v2694, 1e-20
      %v2812 = vadd.f32 %v2697, 1e-20
      %v2813 = vadd.f32 %v2700, 1e-20
      %v2814 = vadd.f32 %v2703, 1e-20
      %v2815 = vadd.f32 %v2706, 1e-20
      %v2816 = vadd.f32 %v2709, 1e-20
      %v2817 = vadd.f32 %v2712, 1e-20
      %v2818 = vadd.f32 %v2715, 1e-20
      %v2819 = vadd.f32 %v2718, 1e-20
      %v2820 = vadd.f32 %v2721, 1e-20
      %v2821 = vadd.f32 %v2724, 1e-20
      %v2822 = vadd.f32 %v2727, 1e-20
      %v2823 = vadd.f32 %v2730, 1e-20
      %v2824 = vadd.f32 %v2733, 1e-20
      %v2825 = vadd.f32 %v2736, 1e-20
      %v2826 = vadd.f32 %v2739, 1e-20
      %v2827 = vadd.f32 %v2742, 1e-20
      %v2828 = vadd.f32 %v2745, 1e-20
      %v2829 = vadd.f32 %v2748, 1e-20
      %v2830 = vadd.f32 %v2751, 1e-20
      %v2831 = vadd.f32 %v2754, 1e-20
      %v2832 = vadd.f32 %v2757, 1e-20
      %v2833 = vadd.f32 %v2760, 1e-20
      %v2834 = vadd.f32 %v2763, 1e-20
      %v2835 = vadd.f32 %v2766, 1e-20
      %v2836 = vadd.f32 %v2769, 1e-20
      %v2837 = vadd.f32 %v2772, 1e-20
      %v2838 = vadd.f32 %v2775, 1e-20
      %v2839 = vadd.f32 %v2778, 1e-20
      %v2840 = vadd.f32 %v2781, 1e-20
      %v2841 = vadd.f32 %v2784, 1e-20
      %v2842 = vadd.f32 %v2787, 1e-20
      %v2843 = vadd.f32 %v2790, 1e-20
      %v2844 = vadd.f32 %v2793, 1e-20
      %v2845 = vadd.f32 %v2796, 1e-20
      %v2846 = vadd.f32 %v2799, 1e-20
      %v2847 = vadd.f32 %v2802, 1e-20
      %v2848 = vadd.f32 %v2805, 1e-20
      %v2849 = vadd.f32 %v2808, 1e-20
      %v2850 = vrsqrt.pop %v2809
      %v2851 = vmul.f32 %v2850, %v2809
      %v2852 = vmul.f32 %v2851, %v2850
      %v2853 = vmul.f32 0.5, %v2852
      %v2854 = vsub.f32 1.5, %v2853
      %v2855 = vmul.f32 %v2850, %v2854
      %vm2856 = vweird.f32 %v2809
      %vm2857 = vweird.f32 %v2850
      %vm2858 = vmor %vm2856, %vm2857
      %v2859 = vsel %vm2858, %v2850, %v2855
      %v2860 = vrsqrt.pop %v2810
      %v2861 = vmul.f32 %v2860, %v2810
      %v2862 = vmul.f32 %v2861, %v2860
      %v2863 = vmul.f32 0.5, %v2862
      %v2864 = vsub.f32 1.5, %v2863
      %v2865 = vmul.f32 %v2860, %v2864
      %vm2866 = vweird.f32 %v2810
      %vm2867 = vweird.f32 %v2860
      %vm2868 = vmor %vm2866, %vm2867
      %v2869 = vsel %vm2868, %v2860, %v2865
      %v2870 = vrsqrt.pop %v2811
      %v2871 = vmul.f32 %v2870, %v2811
      %v2872 = vmul.f32 %v2871, %v2870
      %v2873 = vmul.f32 0.5, %v2872
      %v2874 = vsub.f32 1.5, %v2873
      %v2875 = vmul.f32 %v2870, %v2874
      %vm2876 = vweird.f32 %v2811
      %vm2877 = vweird.f32 %v2870
      %vm2878 = vmor %vm2876, %vm2877
      %v2879 = vsel %vm2878, %v2870, %v2875
      %v2880 = vrsqrt.pop %v2812
      %v2881 = vmul.f32 %v2880, %v2812
      %v2882 = vmul.f32 %v2881, %v2880
      %v2883 = vmul.f32 0.5, %v2882
      %v2884 = vsub.f32 1.5, %v2883
      %v2885 = vmul.f32 %v2880, %v2884
      %vm2886 = vweird.f32 %v2812
      %vm2887 = vweird.f32 %v2880
      %vm2888 = vmor %vm2886, %vm2887
      %v2889 = vsel %vm2888, %v2880, %v2885
      %v2890 = vrsqrt.pop %v2813
      %v2891 = vmul.f32 %v2890, %v2813
      %v2892 = vmul.f32 %v2891, %v2890
      %v2893 = vmul.f32 0.5, %v2892
      %v2894 = vsub.f32 1.5, %v2893
      %v2895 = vmul.f32 %v2890, %v2894
      %vm2896 = vweird.f32 %v2813
      %vm2897 = vweird.f32 %v2890
      %vm2898 = vmor %vm2896, %vm2897
      %v2899 = vsel %vm2898, %v2890, %v2895
      %v2900 = vrsqrt.pop %v2814
      %v2901 = vmul.f32 %v2900, %v2814
      %v2902 = vmul.f32 %v2901, %v2900
      %v2903 = vmul.f32 0.5, %v2902
      %v2904 = vsub.f32 1.5, %v2903
      %v2905 = vmul.f32 %v2900, %v2904
      %vm2906 = vweird.f32 %v2814
      %vm2907 = vweird.f32 %v2900
      %vm2908 = vmor %vm2906, %vm2907
      %v2909 = vsel %vm2908, %v2900, %v2905
      %v2910 = vrsqrt.pop %v2815
      %v2911 = vmul.f32 %v2910, %v2815
      %v2912 = vmul.f32 %v2911, %v2910
      %v2913 = vmul.f32 0.5, %v2912
      %v2914 = vsub.f32 1.5, %v2913
      %v2915 = vmul.f32 %v2910, %v2914
      %vm2916 = vweird.f32 %v2815
      %vm2917 = vweird.f32 %v2910
      %vm2918 = vmor %vm2916, %vm2917
      %v2919 = vsel %vm2918, %v2910, %v2915
      %v2920 = vrsqrt.pop %v2816
      %v2921 = vmul.f32 %v2920, %v2816
      %v2922 = vmul.f32 %v2921, %v2920
      %v2923 = vmul.f32 0.5, %v2922
      %v2924 = vsub.f32 1.5, %v2923
      %v2925 = vmul.f32 %v2920, %v2924
      %vm2926 = vweird.f32 %v2816
      %vm2927 = vweird.f32 %v2920
      %vm2928 = vmor %vm2926, %vm2927
      %v2929 = vsel %vm2928, %v2920, %v2925
      %v2930 = vrsqrt.pop %v2817
      %v2931 = vmul.f32 %v2930, %v2817
      %v2932 = vmul.f32 %v2931, %v2930
      %v2933 = vmul.f32 0.5, %v2932
      %v2934 = vsub.f32 1.5, %v2933
      %v2935 = vmul.f32 %v2930, %v2934
      %vm2936 = vweird.f32 %v2817
      %vm2937 = vweird.f32 %v2930
      %vm2938 = vmor %vm2936, %vm2937
      %v2939 = vsel %vm2938, %v2930, %v2935
      %v2940 = vrsqrt.pop %v2818
      %v2941 = vmul.f32 %v2940, %v2818
      %v2942 = vmul.f32 %v2941, %v2940
      %v2943 = vmul.f32 0.5, %v2942
      %v2944 = vsub.f32 1.5, %v2943
      %v2945 = vmul.f32 %v2940, %v2944
      %vm2946 = vweird.f32 %v2818
      %vm2947 = vweird.f32 %v2940
      %vm2948 = vmor %vm2946, %vm2947
      %v2949 = vsel %vm2948, %v2940, %v2945
      %v2950 = vrsqrt.pop %v2819
      %v2951 = vmul.f32 %v2950, %v2819
      %v2952 = vmul.f32 %v2951, %v2950
      %v2953 = vmul.f32 0.5, %v2952
      %v2954 = vsub.f32 1.5, %v2953
      %v2955 = vmul.f32 %v2950, %v2954
      %vm2956 = vweird.f32 %v2819
      %vm2957 = vweird.f32 %v2950
      %vm2958 = vmor %vm2956, %vm2957
      %v2959 = vsel %vm2958, %v2950, %v2955
      %v2960 = vrsqrt.pop %v2820
      %v2961 = vmul.f32 %v2960, %v2820
      %v2962 = vmul.f32 %v2961, %v2960
      %v2963 = vmul.f32 0.5, %v2962
      %v2964 = vsub.f32 1.5, %v2963
      %v2965 = vmul.f32 %v2960, %v2964
      %vm2966 = vweird.f32 %v2820
      %vm2967 = vweird.f32 %v2960
      %vm2968 = vmor %vm2966, %vm2967
      %v2969 = vsel %vm2968, %v2960, %v2965
      %v2970 = vrsqrt.pop %v2821
      %v2971 = vmul.f32 %v2970, %v2821
      %v2972 = vmul.f32 %v2971, %v2970
      %v2973 = vmul.f32 0.5, %v2972
      %v2974 = vsub.f32 1.5, %v2973
      %v2975 = vmul.f32 %v2970, %v2974
      %vm2976 = vweird.f32 %v2821
      %vm2977 = vweird.f32 %v2970
      %vm2978 = vmor %vm2976, %vm2977
      %v2979 = vsel %vm2978, %v2970, %v2975
      %v2980 = vrsqrt.pop %v2822
      %v2981 = vmul.f32 %v2980, %v2822
      %v2982 = vmul.f32 %v2981, %v2980
      %v2983 = vmul.f32 0.5, %v2982
      %v2984 = vsub.f32 1.5, %v2983
      %v2985 = vmul.f32 %v2980, %v2984
      %vm2986 = vweird.f32 %v2822
      %vm2987 = vweird.f32 %v2980
      %vm2988 = vmor %vm2986, %vm2987
      %v2989 = vsel %vm2988, %v2980, %v2985
      %v2990 = vrsqrt.pop %v2823
      %v2991 = vmul.f32 %v2990, %v2823
      %v2992 = vmul.f32 %v2991, %v2990
      %v2993 = vmul.f32 0.5, %v2992
      %v2994 = vsub.f32 1.5, %v2993
      %v2995 = vmul.f32 %v2990, %v2994
      %vm2996 = vweird.f32 %v2823
      %vm2997 = vweird.f32 %v2990
      %vm2998 = vmor %vm2996, %vm2997
      %v2999 = vsel %vm2998, %v2990, %v2995
      %v3000 = vrsqrt.pop %v2824
      %v3001 = vmul.f32 %v3000, %v2824
      %v3002 = vmul.f32 %v3001, %v3000
      %v3003 = vmul.f32 0.5, %v3002
      %v3004 = vsub.f32 1.5, %v3003
      %v3005 = vmul.f32 %v3000, %v3004
      %vm3006 = vweird.f32 %v2824
      %vm3007 = vweird.f32 %v3000
      %vm3008 = vmor %vm3006, %vm3007
      %v3009 = vsel %vm3008, %v3000, %v3005
      %v3010 = vrsqrt.pop %v2825
      %v3011 = vmul.f32 %v3010, %v2825
      %v3012 = vmul.f32 %v3011, %v3010
      %v3013 = vmul.f32 0.5, %v3012
      %v3014 = vsub.f32 1.5, %v3013
      %v3015 = vmul.f32 %v3010, %v3014
      %vm3016 = vweird.f32 %v2825
      %vm3017 = vweird.f32 %v3010
      %vm3018 = vmor %vm3016, %vm3017
      %v3019 = vsel %vm3018, %v3010, %v3015
      %v3020 = vrsqrt.pop %v2826
      %v3021 = vmul.f32 %v3020, %v2826
      %v3022 = vmul.f32 %v3021, %v3020
      %v3023 = vmul.f32 0.5, %v3022
      %v3024 = vsub.f32 1.5, %v3023
      %v3025 = vmul.f32 %v3020, %v3024
      %vm3026 = vweird.f32 %v2826
      %vm3027 = vweird.f32 %v3020
      %vm3028 = vmor %vm3026, %vm3027
      %v3029 = vsel %vm3028, %v3020, %v3025
      %v3030 = vrsqrt.pop %v2827
      %v3031 = vmul.f32 %v3030, %v2827
      %v3032 = vmul.f32 %v3031, %v3030
      %v3033 = vmul.f32 0.5, %v3032
      %v3034 = vsub.f32 1.5, %v3033
      %v3035 = vmul.f32 %v3030, %v3034
      %vm3036 = vweird.f32 %v2827
      %vm3037 = vweird.f32 %v3030
      %vm3038 = vmor %vm3036, %vm3037
      %v3039 = vsel %vm3038, %v3030, %v3035
      %v3040 = vrsqrt.pop %v2828
      %v3041 = vmul.f32 %v3040, %v2828
      %v3042 = vmul.f32 %v3041, %v3040
      %v3043 = vmul.f32 0.5, %v3042
      %v3044 = vsub.f32 1.5, %v3043
      %v3045 = vmul.f32 %v3040, %v3044
      %vm3046 = vweird.f32 %v2828
      %vm3047 = vweird.f32 %v3040
      %vm3048 = vmor %vm3046, %vm3047
      %v3049 = vsel %vm3048, %v3040, %v3045
      %v3050 = vrsqrt.pop %v2829
      %v3051 = vmul.f32 %v3050, %v2829
      %v3052 = vmul.f32 %v3051, %v3050
      %v3053 = vmul.f32 0.5, %v3052
      %v3054 = vsub.f32 1.5, %v3053
      %v3055 = vmul.f32 %v3050, %v3054
      %vm3056 = vweird.f32 %v2829
      %vm3057 = vweird.f32 %v3050
      %vm3058 = vmor %vm3056, %vm3057
      %v3059 = vsel %vm3058, %v3050, %v3055
      %v3060 = vrsqrt.pop %v2830
      %v3061 = vmul.f32 %v3060, %v2830
      %v3062 = vmul.f32 %v3061, %v3060
      %v3063 = vmul.f32 0.5, %v3062
      %v3064 = vsub.f32 1.5, %v3063
      %v3065 = vmul.f32 %v3060, %v3064
      %vm3066 = vweird.f32 %v2830
      %vm3067 = vweird.f32 %v3060
      %vm3068 = vmor %vm3066, %vm3067
      %v3069 = vsel %vm3068, %v3060, %v3065
      %v3070 = vrsqrt.pop %v2831
      %v3071 = vmul.f32 %v3070, %v2831
      %v3072 = vmul.f32 %v3071, %v3070
      %v3073 = vmul.f32 0.5, %v3072
      %v3074 = vsub.f32 1.5, %v3073
      %v3075 = vmul.f32 %v3070, %v3074
      %vm3076 = vweird.f32 %v2831
      %vm3077 = vweird.f32 %v3070
      %vm3078 = vmor %vm3076, %vm3077
      %v3079 = vsel %vm3078, %v3070, %v3075
      %v3080 = vrsqrt.pop %v2832
      %v3081 = vmul.f32 %v3080, %v2832
      %v3082 = vmul.f32 %v3081, %v3080
      %v3083 = vmul.f32 0.5, %v3082
      %v3084 = vsub.f32 1.5, %v3083
      %v3085 = vmul.f32 %v3080, %v3084
      %vm3086 = vweird.f32 %v2832
      %vm3087 = vweird.f32 %v3080
      %vm3088 = vmor %vm3086, %vm3087
      %v3089 = vsel %vm3088, %v3080, %v3085
      %v3090 = vrsqrt.pop %v2833
      %v3091 = vmul.f32 %v3090, %v2833
      %v3092 = vmul.f32 %v3091, %v3090
      %v3093 = vmul.f32 0.5, %v3092
      %v3094 = vsub.f32 1.5, %v3093
      %v3095 = vmul.f32 %v3090, %v3094
      %vm3096 = vweird.f32 %v2833
      %vm3097 = vweird.f32 %v3090
      %vm3098 = vmor %vm3096, %vm3097
      %v3099 = vsel %vm3098, %v3090, %v3095
      %v3100 = vrsqrt.pop %v2834
      %v3101 = vmul.f32 %v3100, %v2834
      %v3102 = vmul.f32 %v3101, %v3100
      %v3103 = vmul.f32 0.5, %v3102
      %v3104 = vsub.f32 1.5, %v3103
      %v3105 = vmul.f32 %v3100, %v3104
      %vm3106 = vweird.f32 %v2834
      %vm3107 = vweird.f32 %v3100
      %vm3108 = vmor %vm3106, %vm3107
      %v3109 = vsel %vm3108, %v3100, %v3105
      %v3110 = vrsqrt.pop %v2835
      %v3111 = vmul.f32 %v3110, %v2835
      %v3112 = vmul.f32 %v3111, %v3110
      %v3113 = vmul.f32 0.5, %v3112
      %v3114 = vsub.f32 1.5, %v3113
      %v3115 = vmul.f32 %v3110, %v3114
      %vm3116 = vweird.f32 %v2835
      %vm3117 = vweird.f32 %v3110
      %vm3118 = vmor %vm3116, %vm3117
      %v3119 = vsel %vm3118, %v3110, %v3115
      %v3120 = vrsqrt.pop %v2836
      %v3121 = vmul.f32 %v3120, %v2836
      %v3122 = vmul.f32 %v3121, %v3120
      %v3123 = vmul.f32 0.5, %v3122
      %v3124 = vsub.f32 1.5, %v3123
      %v3125 = vmul.f32 %v3120, %v3124
      %vm3126 = vweird.f32 %v2836
      %vm3127 = vweird.f32 %v3120
      %vm3128 = vmor %vm3126, %vm3127
      %v3129 = vsel %vm3128, %v3120, %v3125
      %v3130 = vrsqrt.pop %v2837
      %v3131 = vmul.f32 %v3130, %v2837
      %v3132 = vmul.f32 %v3131, %v3130
      %v3133 = vmul.f32 0.5, %v3132
      %v3134 = vsub.f32 1.5, %v3133
      %v3135 = vmul.f32 %v3130, %v3134
      %vm3136 = vweird.f32 %v2837
      %vm3137 = vweird.f32 %v3130
      %vm3138 = vmor %vm3136, %vm3137
      %v3139 = vsel %vm3138, %v3130, %v3135
      %v3140 = vrsqrt.pop %v2838
      %v3141 = vmul.f32 %v3140, %v2838
      %v3142 = vmul.f32 %v3141, %v3140
      %v3143 = vmul.f32 0.5, %v3142
      %v3144 = vsub.f32 1.5, %v3143
      %v3145 = vmul.f32 %v3140, %v3144
      %vm3146 = vweird.f32 %v2838
      %vm3147 = vweird.f32 %v3140
      %vm3148 = vmor %vm3146, %vm3147
      %v3149 = vsel %vm3148, %v3140, %v3145
      %v3150 = vrsqrt.pop %v2839
      %v3151 = vmul.f32 %v3150, %v2839
      %v3152 = vmul.f32 %v3151, %v3150
      %v3153 = vmul.f32 0.5, %v3152
      %v3154 = vsub.f32 1.5, %v3153
      %v3155 = vmul.f32 %v3150, %v3154
      %vm3156 = vweird.f32 %v2839
      %vm3157 = vweird.f32 %v3150
      %vm3158 = vmor %vm3156, %vm3157
      %v3159 = vsel %vm3158, %v3150, %v3155
      %v3160 = vrsqrt.pop %v2840
      %v3161 = vmul.f32 %v3160, %v2840
      %v3162 = vmul.f32 %v3161, %v3160
      %v3163 = vmul.f32 0.5, %v3162
      %v3164 = vsub.f32 1.5, %v3163
      %v3165 = vmul.f32 %v3160, %v3164
      %vm3166 = vweird.f32 %v2840
      %vm3167 = vweird.f32 %v3160
      %vm3168 = vmor %vm3166, %vm3167
      %v3169 = vsel %vm3168, %v3160, %v3165
      %v3170 = vrsqrt.pop %v2841
      %v3171 = vmul.f32 %v3170, %v2841
      %v3172 = vmul.f32 %v3171, %v3170
      %v3173 = vmul.f32 0.5, %v3172
      %v3174 = vsub.f32 1.5, %v3173
      %v3175 = vmul.f32 %v3170, %v3174
      %vm3176 = vweird.f32 %v2841
      %vm3177 = vweird.f32 %v3170
      %vm3178 = vmor %vm3176, %vm3177
      %v3179 = vsel %vm3178, %v3170, %v3175
      %v3180 = vrsqrt.pop %v2842
      %v3181 = vmul.f32 %v3180, %v2842
      %v3182 = vmul.f32 %v3181, %v3180
      %v3183 = vmul.f32 0.5, %v3182
      %v3184 = vsub.f32 1.5, %v3183
      %v3185 = vmul.f32 %v3180, %v3184
      %vm3186 = vweird.f32 %v2842
      %vm3187 = vweird.f32 %v3180
      %vm3188 = vmor %vm3186, %vm3187
      %v3189 = vsel %vm3188, %v3180, %v3185
      %v3190 = vrsqrt.pop %v2843
      %v3191 = vmul.f32 %v3190, %v2843
      %v3192 = vmul.f32 %v3191, %v3190
      %v3193 = vmul.f32 0.5, %v3192
      %v3194 = vsub.f32 1.5, %v3193
      %v3195 = vmul.f32 %v3190, %v3194
      %vm3196 = vweird.f32 %v2843
      %vm3197 = vweird.f32 %v3190
      %vm3198 = vmor %vm3196, %vm3197
      %v3199 = vsel %vm3198, %v3190, %v3195
      %v3200 = vrsqrt.pop %v2844
      %v3201 = vmul.f32 %v3200, %v2844
      %v3202 = vmul.f32 %v3201, %v3200
      %v3203 = vmul.f32 0.5, %v3202
      %v3204 = vsub.f32 1.5, %v3203
      %v3205 = vmul.f32 %v3200, %v3204
      %vm3206 = vweird.f32 %v2844
      %vm3207 = vweird.f32 %v3200
      %vm3208 = vmor %vm3206, %vm3207
      %v3209 = vsel %vm3208, %v3200, %v3205
      %v3210 = vrsqrt.pop %v2845
      %v3211 = vmul.f32 %v3210, %v2845
      %v3212 = vmul.f32 %v3211, %v3210
      %v3213 = vmul.f32 0.5, %v3212
      %v3214 = vsub.f32 1.5, %v3213
      %v3215 = vmul.f32 %v3210, %v3214
      %vm3216 = vweird.f32 %v2845
      %vm3217 = vweird.f32 %v3210
      %vm3218 = vmor %vm3216, %vm3217
      %v3219 = vsel %vm3218, %v3210, %v3215
      %v3220 = vrsqrt.pop %v2846
      %v3221 = vmul.f32 %v3220, %v2846
      %v3222 = vmul.f32 %v3221, %v3220
      %v3223 = vmul.f32 0.5, %v3222
      %v3224 = vsub.f32 1.5, %v3223
      %v3225 = vmul.f32 %v3220, %v3224
      %vm3226 = vweird.f32 %v2846
      %vm3227 = vweird.f32 %v3220
      %vm3228 = vmor %vm3226, %vm3227
      %v3229 = vsel %vm3228, %v3220, %v3225
      %v3230 = vrsqrt.pop %v2847
      %v3231 = vmul.f32 %v3230, %v2847
      %v3232 = vmul.f32 %v3231, %v3230
      %v3233 = vmul.f32 0.5, %v3232
      %v3234 = vsub.f32 1.5, %v3233
      %v3235 = vmul.f32 %v3230, %v3234
      %vm3236 = vweird.f32 %v2847
      %vm3237 = vweird.f32 %v3230
      %vm3238 = vmor %vm3236, %vm3237
      %v3239 = vsel %vm3238, %v3230, %v3235
      %v3240 = vrsqrt.pop %v2848
      %v3241 = vmul.f32 %v3240, %v2848
      %v3242 = vmul.f32 %v3241, %v3240
      %v3243 = vmul.f32 0.5, %v3242
      %v3244 = vsub.f32 1.5, %v3243
      %v3245 = vmul.f32 %v3240, %v3244
      %vm3246 = vweird.f32 %v2848
      %vm3247 = vweird.f32 %v3240
      %vm3248 = vmor %vm3246, %vm3247
      %v3249 = vsel %vm3248, %v3240, %v3245
      %v3250 = vrsqrt.pop %v2849
      %v3251 = vmul.f32 %v3250, %v2849
      %v3252 = vmul.f32 %v3251, %v3250
      %v3253 = vmul.f32 0.5, %v3252
      %v3254 = vsub.f32 1.5, %v3253
      %v3255 = vmul.f32 %v3250, %v3254
      %vm3256 = vweird.f32 %v2849
      %vm3257 = vweird.f32 %v3250
      %vm3258 = vmor %vm3256, %vm3257
      %v3259 = vsel %vm3258, %v3250, %v3255
      %v3260 = vmul.f32 %v2521, %v2859
      %v3261 = vmul.f32 %v2522, %v2869
      %v3262 = vmul.f32 %v2523, %v2879
      %v3263 = vmul.f32 %v2524, %v2889
      %v3264 = vmul.f32 %v2525, %v2899
      %v3265 = vmul.f32 %v2526, %v2909
      %v3266 = vmul.f32 %v2527, %v2919
      %v3267 = vmul.f32 %v2528, %v2929
      %v3268 = vmul.f32 %v2529, %v2939
      %v3269 = vmul.f32 %v2530, %v2949
      %v3270 = vmul.f32 %v2531, %v2959
      %v3271 = vmul.f32 %v2532, %v2969
      %v3272 = vmul.f32 %v2533, %v2979
      %v3273 = vmul.f32 %v2534, %v2989
      %v3274 = vmul.f32 %v2535, %v2999
      %v3275 = vmul.f32 %v2536, %v3009
      %v3276 = vmul.f32 %v2537, %v3019
      %v3277 = vmul.f32 %v2538, %v3029
      %v3278 = vmul.f32 %v2539, %v3039
      %v3279 = vmul.f32 %v2540, %v3049
      %v3280 = vmul.f32 %v2541, %v3059
      %v3281 = vmul.f32 %v2542, %v3069
      %v3282 = vmul.f32 %v2543, %v3079
      %v3283 = vmul.f32 %v2544, %v3089
      %v3284 = vmul.f32 %v2545, %v3099
      %v3285 = vmul.f32 %v2546, %v3109
      %v3286 = vmul.f32 %v2547, %v3119
      %v3287 = vmul.f32 %v2548, %v3129
      %v3288 = vmul.f32 %v2549, %v3139
      %v3289 = vmul.f32 %v2550, %v3149
      %v3290 = vmul.f32 %v2551, %v3159
      %v3291 = vmul.f32 %v2552, %v3169
      %v3292 = vmul.f32 %v2553, %v3179
      %v3293 = vmul.f32 %v2554, %v3189
      %v3294 = vmul.f32 %v2555, %v3199
      %v3295 = vmul.f32 %v2556, %v3209
      %v3296 = vmul.f32 %v2557, %v3219
      %v3297 = vmul.f32 %v2558, %v3229
      %v3298 = vmul.f32 %v2559, %v3239
      %v3299 = vmul.f32 %v2560, %v3249
      %v3300 = vmul.f32 %v2561, %v3259
      %v3301 = vld [vmem:[%s3] sm:$0x1]
      %v3303 = vperm.slane %v3301, 0
      %v3305 = vmul.f32 %v3260, %v3303
      %v3306 = vmul.f32 %v3261, %v3303
      %v3307 = vmul.f32 %v3262, %v3303
      %v3308 = vmul.f32 %v3263, %v3303
      %v3309 = vmul.f32 %v3264, %v3303
      %v3310 = vmul.f32 %v3265, %v3303
      %v3311 = vmul.f32 %v3266, %v3303
      %v3312 = vmul.f32 %v3267, %v3303
      %v3313 = vmul.f32 %v3268, %v3303
      %v3314 = vmul.f32 %v3269, %v3303
      %v3315 = vmul.f32 %v3270, %v3303
      %v3316 = vmul.f32 %v3271, %v3303
      %v3317 = vmul.f32 %v3272, %v3303
      %v3318 = vmul.f32 %v3273, %v3303
      %v3319 = vmul.f32 %v3274, %v3303
      %v3320 = vmul.f32 %v3275, %v3303
      %v3321 = vmul.f32 %v3276, %v3303
      %v3322 = vmul.f32 %v3277, %v3303
      %v3323 = vmul.f32 %v3278, %v3303
      %v3324 = vmul.f32 %v3279, %v3303
      %v3325 = vmul.f32 %v3280, %v3303
      %v3326 = vmul.f32 %v3281, %v3303
      %v3327 = vmul.f32 %v3282, %v3303
      %v3328 = vmul.f32 %v3283, %v3303
      %v3329 = vmul.f32 %v3284, %v3303
      %v3330 = vmul.f32 %v3285, %v3303
      %v3331 = vmul.f32 %v3286, %v3303
      %v3332 = vmul.f32 %v3287, %v3303
      %v3333 = vmul.f32 %v3288, %v3303
      %v3334 = vmul.f32 %v3289, %v3303
      %v3335 = vmul.f32 %v3290, %v3303
      %v3336 = vmul.f32 %v3291, %v3303
      %v3337 = vmul.f32 %v3292, %v3303
      %v3338 = vmul.f32 %v3293, %v3303
      %v3339 = vmul.f32 %v3294, %v3303
      %v3340 = vmul.f32 %v3295, %v3303
      %v3341 = vmul.f32 %v3296, %v3303
      %v3342 = vmul.f32 %v3297, %v3303
      %v3343 = vmul.f32 %v3298, %v3303
      %v3344 = vmul.f32 %v3299, %v3303
      %v3345 = vmul.f32 %v3300, %v3303
      %v3346 = vpack.c.bf16 %v3305, %v3305
      %v3347 = vpack.c.bf16 %v3306, %v3306
      %v3348 = vpack.c.bf16 %v3307, %v3307
      %v3349 = vpack.c.bf16 %v3308, %v3308
      %v3350 = vpack.c.bf16 %v3309, %v3309
      %v3351 = vpack.c.bf16 %v3310, %v3310
      %v3352 = vpack.c.bf16 %v3311, %v3311
      %v3353 = vpack.c.bf16 %v3312, %v3312
      %v3354 = vpack.c.bf16 %v3313, %v3313
      %v3355 = vpack.c.bf16 %v3314, %v3314
      %v3356 = vpack.c.bf16 %v3315, %v3315
      %v3357 = vpack.c.bf16 %v3316, %v3316
      %v3358 = vpack.c.bf16 %v3317, %v3317
      %v3359 = vpack.c.bf16 %v3318, %v3318
      %v3360 = vpack.c.bf16 %v3319, %v3319
      %v3361 = vpack.c.bf16 %v3320, %v3320
      %v3362 = vpack.c.bf16 %v3321, %v3321
      %v3363 = vpack.c.bf16 %v3322, %v3322
      %v3364 = vpack.c.bf16 %v3323, %v3323
      %v3365 = vpack.c.bf16 %v3324, %v3324
      %v3366 = vpack.c.bf16 %v3325, %v3325
      %v3367 = vpack.c.bf16 %v3326, %v3326
      %v3368 = vpack.c.bf16 %v3327, %v3327
      %v3369 = vpack.c.bf16 %v3328, %v3328
      %v3370 = vpack.c.bf16 %v3329, %v3329
      %v3371 = vpack.c.bf16 %v3330, %v3330
      %v3372 = vpack.c.bf16 %v3331, %v3331
      %v3373 = vpack.c.bf16 %v3332, %v3332
      %v3374 = vpack.c.bf16 %v3333, %v3333
      %v3375 = vpack.c.bf16 %v3334, %v3334
      %v3376 = vpack.c.bf16 %v3335, %v3335
      %v3377 = vpack.c.bf16 %v3336, %v3336
      %v3378 = vpack.c.bf16 %v3337, %v3337
      %v3379 = vpack.c.bf16 %v3338, %v3338
      %v3380 = vpack.c.bf16 %v3339, %v3339
      %v3381 = vpack.c.bf16 %v3340, %v3340
      %v3382 = vpack.c.bf16 %v3341, %v3341
      %v3383 = vpack.c.bf16 %v3342, %v3342
      %v3384 = vpack.c.bf16 %v3343, %v3343
      %v3385 = vpack.c.bf16 %v3344, %v3344
      %v3386 = vpack.c.bf16 %v3345, %v3345
      %3387 = vst.msk [vmem:[%s250] sm:$0xf] %vm2603, %v3346
      %3388 = vst.msk [vmem:[%s250 + $0x4] sm:$0xf] %vm2603, %v3347
      %3389 = vst.msk [vmem:[%s250 + $0x8] sm:$0xf] %vm2603, %v3348
      %3390 = vst.msk [vmem:[%s250 + $0xc] sm:$0xf] %vm2603, %v3349
      %3391 = vst.msk [vmem:[%s250 + $0x10] sm:$0xf] %vm2603, %v3350
      %3392 = vst.msk [vmem:[%s250 + $0x14] sm:$0xf] %vm2603, %v3351
      %3393 = vst.msk [vmem:[%s250 + $0x18] sm:$0xf] %vm2603, %v3352
      %3394 = vst.msk [vmem:[%s250 + $0x1c] sm:$0xf] %vm2603, %v3353
      %3395 = vst.msk [vmem:[%s250 + $0x20] sm:$0xf] %vm2603, %v3354
      %3396 = vst.msk [vmem:[%s250 + $0x24] sm:$0xf] %vm2603, %v3355
      %3397 = vst.msk [vmem:[%s250 + $0x28] sm:$0xf] %vm2603, %v3356
      %3398 = vst.msk [vmem:[%s250 + $0x2c] sm:$0xf] %vm2603, %v3357
      %3399 = vst.msk [vmem:[%s250 + $0x30] sm:$0xf] %vm2603, %v3358
      %3400 = vst.msk [vmem:[%s250 + $0x34] sm:$0xf] %vm2603, %v3359
      %3401 = vst.msk [vmem:[%s250 + $0x38] sm:$0xf] %vm2603, %v3360
      %3402 = vst.msk [vmem:[%s250 + $0x3c] sm:$0xf] %vm2603, %v3361
      %3403 = vst.msk [vmem:[%s250 + $0x40] sm:$0xf] %vm2603, %v3362
      %3404 = vst.msk [vmem:[%s250 + $0x44] sm:$0xf] %vm2603, %v3363
      %3405 = vst.msk [vmem:[%s250 + $0x48] sm:$0xf] %vm2603, %v3364
      %3406 = vst.msk [vmem:[%s250 + $0x4c] sm:$0xf] %vm2603, %v3365
      %3407 = vst.msk [vmem:[%s250 + $0x50] sm:$0xf] %vm2603, %v3366
      %3408 = vst.msk [vmem:[%s250 + $0x54] sm:$0xf] %vm2603, %v3367
      %3409 = vst.msk [vmem:[%s250 + $0x58] sm:$0xf] %vm2603, %v3368
      %3410 = vst.msk [vmem:[%s250 + $0x5c] sm:$0xf] %vm2603, %v3369
      %3411 = vst.msk [vmem:[%s250 + $0x60] sm:$0xf] %vm2603, %v3370
      %3412 = vst.msk [vmem:[%s250 + $0x64] sm:$0xf] %vm2603, %v3371
      %3413 = vst.msk [vmem:[%s250 + $0x68] sm:$0xf] %vm2603, %v3372
      %3414 = vst.msk [vmem:[%s250 + $0x6c] sm:$0xf] %vm2603, %v3373
      %3415 = vst.msk [vmem:[%s250 + $0x70] sm:$0xf] %vm2603, %v3374
      %3416 = vst.msk [vmem:[%s250 + $0x74] sm:$0xf] %vm2603, %v3375
      %3417 = vst.msk [vmem:[%s250 + $0x78] sm:$0xf] %vm2603, %v3376
      %3418 = vst.msk [vmem:[%s250 + $0x7c] sm:$0xf] %vm2603, %v3377
      %3419 = vst.msk [vmem:[%s250 + $0x80] sm:$0xf] %vm2603, %v3378
      %3420 = vst.msk [vmem:[%s250 + $0x84] sm:$0xf] %vm2603, %v3379
      %3421 = vst.msk [vmem:[%s250 + $0x88] sm:$0xf] %vm2603, %v3380
      %3422 = vst.msk [vmem:[%s250 + $0x8c] sm:$0xf] %vm2603, %v3381
      %3423 = vst.msk [vmem:[%s250 + $0x90] sm:$0xf] %vm2603, %v3382
      %3424 = vst.msk [vmem:[%s250 + $0x94] sm:$0xf] %vm2603, %v3383
      %3425 = vst.msk [vmem:[%s250 + $0x98] sm:$0xf] %vm2603, %v3384
      %3426 = vst.msk [vmem:[%s250 + $0x9c] sm:$0xf] %vm2603, %v3385
      %3427 = vst.msk [vmem:[%s250 + $0xa0] sm:$0xf] %vm2603, %v3386
      %s3428 = sadd.s32 %s18, 1
      %s3429 = smul.u32 41, %s3428
      %p3430 = scmp.lt.s32.totalorder %s3429, 163
      %s3431 = scalar_select %p3430, %s3429, 163
      %s3432 = smul.addr %s3431, 4
      %s3433 = scalar_lea.vmem %s5, %s3432
      %s3434 = sadd.s32 %s18, 1
      %s3435 = smul.u32 41, %s3434
      %p3436 = scmp.lt.s32.totalorder %s3435, 163
      %s3437 = scalar_select %p3436, %s3435, 163
      %s3438 = smul.addr %s3437, 4
      %s3439 = scalar_lea.vmem %s6, %s3438
      // Predicated region
      $region59: #{tpu_custom_call.1} parent=35 // pred_check
        %p3440 = pneg %p127
      $region60: #{tpu_custom_call.1} parent=35 // pred_check_branch
        %3442 = sbr.rel (%p3440) target = $region62
      $region61: #{tpu_custom_call.1} parent=35 // pred_region
        %s3443 = sadd.s32 %s18, 1
        %s3444 = smul.u32 41, %s3443
      $region62: #{tpu_custom_call.1} parent=35 // pred_fallthru
        _
      // Predicated region
      $region63: #{tpu_custom_call.1} parent=35 // pred_check
        %p3445 = pneg %p155
      $region64: #{tpu_custom_call.1} parent=35 // pred_check_branch
        %3447 = sbr.rel (%p3445) target = $region66
      $region65: #{tpu_custom_call.1} parent=35 // pred_region
        %s3448 = sadd.s32 %s18, 1
        %s3449 = smul.u32 41, %s3448
      $region66: #{tpu_custom_call.1} parent=35 // pred_fallthru
        _
    $region36: #{tpu_custom_call.1} parent=5 // pred_fallthru
      _
    %p3450 = scmp.le.s32.totalorder 2, %s13
    // Predicated region
    $region67: #{tpu_custom_call.1} parent=5 // pred_check
      %p3451 = pneg %p3450
    $region68: #{tpu_custom_call.1} parent=5 // pred_check_branch
      %3453 = sbr.rel (%p3451) target = $region70
    $region69: #{tpu_custom_call.1} parent=5 // pred_region
      %s3454 = ssub.s32 %s13, 2
      // Predicated region
      $region71: #{tpu_custom_call.1} parent=69 // pred_check
        %p3455 = pneg %p133
      $region72: #{tpu_custom_call.1} parent=69 // pred_check_branch
        %3457 = sbr.rel (%p3455) target = $region74
      $region73: #{tpu_custom_call.1} parent=69 // pred_region
        %s3458 = sadd.s32 %s19, 1
        %s3459 = smul.u32 41, %s3458
        %p3460 = scmp.lt.s32.totalorder %s3459, 163
        %s3461 = scalar_select %p3460, %s3459, 163
        %s3462 = smul.addr %s3461, 4
        %s3463 = scalar_lea.vmem %s5, %s3462
      $region74: #{tpu_custom_call.1} parent=69 // pred_fallthru
        _
      // Predicated region
      $region75: #{tpu_custom_call.1} parent=69 // pred_check
        %p3464 = pneg %p161
      $region76: #{tpu_custom_call.1} parent=69 // pred_check_branch
        %3466 = sbr.rel (%p3464) target = $region78
      $region77: #{tpu_custom_call.1} parent=69 // pred_region
        %s3467 = sadd.s32 %s19, 1
        %s3468 = smul.u32 41, %s3467
        %p3469 = scmp.lt.s32.totalorder %s3468, 163
        %s3470 = scalar_select %p3469, %s3468, 163
        %s3471 = smul.addr %s3470, 4
        %s3472 = scalar_lea.vmem %s6, %s3471
      $region78: #{tpu_custom_call.1} parent=69 // pred_fallthru
        _
    $region70: #{tpu_custom_call.1} parent=5 // pred_fallthru
      _
  $region6: #{tpu_custom_call.1} parent=0 // loop_footer
    %s17 = sadd.s32 1, %s13
  $region7: #{tpu_custom_call.1} parent=0 // loop_footer_branch
    %12 = sbr.rel target = $region3
  $region8: #{tpu_custom_call.1} parent=0 // loop_exit
    _
  %3473 = vsyncmov [#allocation3]
  %s3474 = vpop.sfrf %3473
  %p3475 = scmp.eq.s32.totalorder %s3474, 0
  %p3476 = pneg %p3475
  %3478 = shalt.err (%p3476)

</llo_original>
